<compile_context>
chip_gen: v7x
topology: tpu7x:2x2x1
jax: 0.10.0
libtpu: 0.0.40
codegen_flags: <defaults>
</compile_context>

<pallas_src>
import functools

import jax
import jax.numpy as jnp
from jax.experimental import pallas as pl
from jax.experimental.pallas import tpu as pltpu

BN_EPS = 1e-5
LANE = 128      # lane width: all internal channel counts padded to a multiple
_TM = 512       # M-tile for the fused matmul kernel


def _round_up(x, m):
    return (x + m - 1) // m * m


def _pick_band(h, target=16):
    """Largest divisor of h that is <= target (output-row band size)."""
    for t in range(min(h, target), 0, -1):
        if h % t == 0:
            return t
    return 1


def _pick_tile(c, target=512):
    """Largest 128-multiple divisor of c that is <= target."""
    t = min(c, target)
    while c % t:
        t -= LANE
    return t


def _cparams(sem, est_bytes):
    """CompilerParams with a per-call VMEM limit derived from block footprints."""
    lim = int(max(32 * 1024 * 1024, min(64 * 1024 * 1024, est_bytes)))
    return pltpu.CompilerParams(dimension_semantics=tuple(sem),
                                vmem_limit_bytes=lim)


# --------------------------- fused 1x1 / linear kernel -----------------------

def _make_matmul_kernel(n_in, n_out):
    """(sum_i A_i @ W_i) + bias -> SiLU; optionally split into n_out outputs."""

    def kernel(*refs):
        a_refs = refs[:n_in]
        w_refs = refs[n_in:2 * n_in]
        b_ref = refs[2 * n_in]
        o_refs = refs[2 * n_in + 1:]
        acc = None
        for a_ref, w_ref in zip(a_refs, w_refs):
            d = jnp.dot(a_ref[...].astype(jnp.bfloat16), w_ref[...],
                        preferred_element_type=jnp.float32)
            acc = d if acc is None else acc + d
        y = acc + b_ref[...]
        y = 0.5 * y * (jnp.tanh(0.5 * y) + 1.0)           # SiLU (1 EUP op/elem)
        if n_out == 1:
            o_refs[0][...] = y.astype(o_refs[0].dtype)
        else:
            c = y.shape[-1] // n_out
            for j in range(n_out):                        # 128-aligned lane slices
                o_refs[j][...] = y[:, j * c:(j + 1) * c].astype(o_refs[j].dtype)

    return kernel


def fused_matmul(inputs, weights, bias, n_out=1, out_dtype=jnp.bfloat16):
    """sum_i (M,K_i)@(K_i,Ctot) + bias -> SiLU, optionally split into n_out parts.

    2-D (M, N) parallel grid when n_out == 1 so both TensorCores get work on
    small-M late stages; CSP conv1+conv2 batching (n_out=2) uses one N tile.
    """
    M = inputs[0].shape[0]
    Ctot = bias.shape[-1]
    c = Ctot // n_out
    tm = min(_TM, _round_up(M, 8))
    tn = _pick_tile(Ctot, 512) if n_out == 1 else Ctot
    grid = (pl.cdiv(M, tm), Ctot // tn)

    in_specs = ([pl.BlockSpec((tm, a.shape[1]), lambda i, j: (i, 0)) for a in inputs]
                + [pl.BlockSpec((w.shape[0], tn), lambda i, j: (0, j)) for w in weights]
                + [pl.BlockSpec((1, tn), lambda i, j: (0, j))])
    if n_out == 1:
        out_specs = pl.BlockSpec((tm, tn), lambda i, j: (i, j))
        out_shape = jax.ShapeDtypeStruct((M, Ctot), out_dtype)
    else:
        out_specs = tuple(pl.BlockSpec((tm, c), lambda i, j: (i, 0))
                          for _ in range(n_out))
        out_shape = tuple(jax.ShapeDtypeStruct((M, c), out_dtype)
                          for _ in range(n_out))

    ksum = sum(int(a.shape[1]) for a in inputs)
    est = (sum(2 * tm * a.shape[1] * a.dtype.itemsize for a in inputs)
           + sum(2 * w.shape[0] * tn * 2 for w in weights)
           + 2 * tn * 4 + 2 * n_out * tm * max(c, tn) * 2
           + 3 * tm * Ctot * 4)
    bytes_accessed = int(sum(a.size * a.dtype.itemsize for a in inputs)
                         + sum(w.size * 2 for w in weights) + M * Ctot * 2)
    outs = pl.pallas_call(
        _make_matmul_kernel(len(inputs), n_out),
        out_shape=out_shape,
        grid=grid,
        in_specs=in_specs,
        out_specs=out_specs,
        compiler_params=_cparams(("parallel", "parallel"), est),
        cost_estimate=pl.CostEstimate(flops=2 * M * ksum * Ctot,
                                      transcendentals=M * Ctot,
                                      bytes_accessed=bytes_accessed),
    )(*inputs, *weights, bias)
    return [outs] if n_out == 1 else list(outs)


# --------------------------- direct 3x3 conv kernel ---------------------------

_SD_ORDER = (4, 5, 8, 7, 3, 6, 2, 1, 0)   # tap order matching _sd_groups / s2d pack


def _sd_groups(C):
    """Stride-2 3x3 conv over the (tl,tr,br,bl)-packed s2d input collapses into
    4 dots: entries are (row_off, col_off, ch_lo, ch_hi, w_lo, w_hi)."""
    return [(1, 1, 0 * C, 4 * C, 0 * C, 4 * C),
            (1, 0, 1 * C, 3 * C, 4 * C, 6 * C),
            (0, 1, 2 * C, 4 * C, 6 * C, 8 * C),
            (0, 0, 2 * C, 3 * C, 8 * C, 9 * C)]


def _make_conv_kernel(groups, th, Wo, Wpad, R, nb, has_top, has_bot, has_res):
    """Band-tiled direct conv: zero-halo scratch assembly + contiguous flat
    tap slices (Wpad is a multiple of 8 so the flatten is layout-free)."""

    def kernel(*refs):
        it = iter(refs)
        c_ref = next(it)
        t_ref = next(it) if has_top else None
        bh_ref = next(it) if has_bot else None
        w_ref = next(it)
        bias_ref = next(it)
        r_ref = next(it) if has_res else None
        o_ref = next(it)
        xs_ref = next(it)
        band = pl.program_id(1)

        # Assemble the zero-padded input band in VMEM (1-px halo).
        xs_ref[...] = jnp.zeros(xs_ref.shape, xs_ref.dtype)
        xs_ref[1:1 + th, 1:1 + Wo, :] = c_ref[0]
        if has_top:
            @pl.when(band > 0)
            def _():
                xs_ref[0:1, 1:1 + Wo, :] = t_ref[0]
        if has_bot:
            @pl.when(band < nb - 1)
            def _():
                xs_ref[1 + th:2 + th, 1:1 + Wo, :] = bh_ref[0]

        xf = xs_ref[...].reshape(R * Wpad, xs_ref.shape[-1])
        acc = None
        for (ro, co, clo, chi, wlo, whi) in groups:
            off = ro * Wpad + co
            a = xf[off:off + th * Wpad, clo:chi]          # contiguous flat slice
            d = jnp.dot(a, w_ref[wlo:whi, :], preferred_element_type=jnp.float32)
            acc = d if acc is None else acc + d
        y = acc + bias_ref[...]
        y = 0.5 * y * (jnp.tanh(0.5 * y) + 1.0)           # SiLU (f32)
        y = y.reshape(th, Wpad, y.shape[-1])[:, :Wo, :]
        if has_res:                                        # fused bottleneck add
            y = y + r_ref[0].astype(jnp.float32)
        o_ref[0] = y.astype(o_ref.dtype)

    return kernel


def conv3x3(x, p, stride, residual=None, band=None):
    """3x3 conv + BN(folded) + SiLU (+fused residual), stride 1 or 2, pad 1."""
    assert x.shape[-1] == p['cinp']
    cp = p['cinp']
    coutp = p['coutp']
    if stride == 2:
        # Packed space-to-depth (tl,tr,br,bl): stride-2 3x3 == 2x2-footprint
        # conv over 4*C channels; taps collapse into 4 lane-sliced dots.
        # TODO(synk): fold this s2d into the kernel (strided in-kernel reads)
        # to save one HBM round-trip of the pre-downsample activation.
        x = jnp.concatenate([x[:, 0::2, 0::2, :], x[:, 0::2, 1::2, :],
                             x[:, 1::2, 1::2, :], x[:, 1::2, 0::2, :]], axis=-1)
        groups, max_ro = _sd_groups(cp), 1
    else:
        groups = [(dh, dw, 0, cp, (3 * dh + dw) * cp, (3 * dh + dw + 1) * cp)
                  for dh in range(3) for dw in range(3)]
        max_ro = 2
    N, Ho, Wo, cin_eff = x.shape
    th = band if band is not None else _pick_band(Ho)
    nb = Ho // th
    Wpad = _round_up(Wo + 2, 8)
    R = th + max_ro + 1
    has_top = nb > 1
    has_bot = (stride == 1) and (nb > 1)
    has_res = residual is not None

    args = [x]
    in_specs = [pl.BlockSpec((1, th, Wo, cin_eff), lambda n, i: (n, i, 0, 0))]
    if has_top:
        args.append(x)
        in_specs.append(pl.BlockSpec(
            (1, 1, Wo, cin_eff),
            lambda n, i: (n, jnp.maximum(i * th - 1, 0), 0, 0)))
    if has_bot:
        args.append(x)
        in_specs.append(pl.BlockSpec(
            (1, 1, Wo, cin_eff),
            lambda n, i: (n, jnp.minimum((i + 1) * th, Ho - 1), 0, 0)))
    args += [p['w'], p['b']]
    in_specs += [pl.BlockSpec(p['w'].shape, lambda n, i: (0, 0)),
                 pl.BlockSpec(p['b'].shape, lambda n, i: (0, 0))]
    if has_res:
        args.append(residual)
        in_specs.append(pl.BlockSpec((1, th, Wo, coutp),
                                     lambda n, i: (n, i, 0, 0)))

    est = int(1.5 * (2 * th * Wo * cin_eff * 2 + 4 * Wo * cin_eff * 2
                     + 2 * p['w'].size * 2 + 2 * th * Wo * coutp * 2
                     + R * Wpad * cin_eff * 2
                     + 2 * th * Wpad * coutp * 4 + 2 * th * Wpad * cin_eff * 2))
    out = pl.pallas_call(
        _make_conv_kernel(groups, th, Wo, Wpad, R, nb, has_top, has_bot, has_res),
        out_shape=jax.ShapeDtypeStruct((N, Ho, Wo, coutp), jnp.bfloat16),
        grid=(N, nb),
        in_specs=in_specs,
        out_specs=pl.BlockSpec((1, th, Wo, coutp), lambda n, i: (n, i, 0, 0)),
        scratch_shapes=[pltpu.VMEM((R, Wpad, cin_eff), jnp.bfloat16)],
        compiler_params=_cparams(("parallel", "parallel"), est),
        cost_estimate=pl.CostEstimate(
            flops=int(2 * N * Ho * Wpad * 9 * cp * coutp),
            transcendentals=int(N * Ho * Wo * coutp),
            bytes_accessed=int(x.size * 2 + p['w'].size * 2
                               + N * Ho * Wo * coutp * 2)),
    )(*args)
    return out


# --------------------------- SPP pooling kernel -------------------------------

def _spp_kernel(x_ref, o_ref, xs_ref):
    """SPP by composition: pool9 = pool5(pool5), pool13 = pool5(pool9); -inf
    border assembled in VMEM scratch (no wrapper-side pad)."""
    Hh, Ww = o_ref.shape[1], o_ref.shape[2]
    C = x_ref.shape[3]
    xs_ref[...] = jnp.full(xs_ref.shape, -jnp.inf, dtype=xs_ref.dtype)
    xs_ref[6:6 + Hh, 6:6 + Ww, :] = x_ref[0]
    x = xs_ref[...]

    def pool5(v):                                          # "valid" 5x5 max pool
        a, b = v.shape[0], v.shape[1]
        t = v[0:a - 4]
        for d in range(1, 5):
            t = jnp.maximum(t, v[d:d + a - 4])
        r = t[:, 0:b - 4]
        for d in range(1, 5):
            r = jnp.maximum(r, t[:, d:d + b - 4])
        return r

    p5 = pool5(x)
    p9 = pool5(p5)
    p13 = pool5(p9)
    o_ref[0, :, :, 0:C] = x[6:6 + Hh, 6:6 + Ww, :].astype(o_ref.dtype)
    o_ref[0, :, :, C:2 * C] = p5[4:4 + Hh, 4:4 + Ww, :].astype(o_ref.dtype)
    o_ref[0, :, :, 2 * C:3 * C] = p9[2:2 + Hh, 2:2 + Ww, :].astype(o_ref.dtype)
    o_ref[0, :, :, 3 * C:4 * C] = p13.astype(o_ref.dtype)


def spp_pool(x):
    """One kernel: [x, maxpool5, maxpool9, maxpool13] into channel slices."""
    N, H, W, C = x.shape
    est = int(3 * ((H + 12) * (W + 12) * C * 2 + H * W * 4 * C * 2))
    return pl.pallas_call(
        _spp_kernel,
        out_shape=jax.ShapeDtypeStruct((N, H, W, 4 * C), x.dtype),
        grid=(N,),
        in_specs=[pl.BlockSpec((1, H, W, C), lambda n: (n, 0, 0, 0))],
        out_specs=pl.BlockSpec((1, H, W, 4 * C), lambda n: (n, 0, 0, 0)),
        scratch_shapes=[pltpu.VMEM((H + 12, W + 12, C), x.dtype)],
        compiler_params=_cparams(("parallel",), est),
    )(x)


# --------------------------- parameter construction --------------------------

class _ParamGen:
    def __init__(self, key):
        self._key = key
        self._i = 0

    def normal(self, shape, scale=1.0):
        self._i += 1
        k = jax.random.fold_in(self._key, self._i)
        return scale * jax.random.normal(k, shape, jnp.float32)


def _fold_bn(pg, w, cout):
    gamma = 1.0 + 0.1 * pg.normal((cout,))
    beta = 0.1 * pg.normal((cout,))
    mean = 0.1 * pg.normal((cout,))
    var = 1.0 + 0.1 * jnp.abs(pg.normal((cout,)))
    s = gamma / jnp.sqrt(var + BN_EPS)              # eval-mode BN folded into conv
    return w * s, beta - mean * s


def make_base_conv(pg, cin_true, cout_true, k, cin_act=None, mode='s1'):
    """BaseConv = Conv(k, pad=(k-1)//2, bias=False) + BN(folded) + SiLU.

    Weights are embedded into lane-padded slots with zeros so padded channels
    stay exactly zero.  mode: 'mm'/k==1 (1x1), 's1' (3x3 s=1), 's2' (3x3 s=2,
    weight rows grouped to match the space-to-depth tap layout)."""
    if cin_act is None:
        cin_act = _round_up(cin_true, LANE)
    cout_p = _round_up(cout_true, LANE)
    w = pg.normal((k * k, cin_true, cout_true), (k * k * cin_true) ** -0.5)
    w, b = _fold_bn(pg, w, cout_true)
    W = jnp.zeros((k * k, cin_act, cout_p), jnp.float32)
    W = W.at[:, :cin_true, :cout_true].set(w)
    B = jnp.zeros((1, cout_p), jnp.float32).at[:, :cout_true].set(b)
    p = {'b': B, 'cout': cout_true, 'coutp': cout_p, 'cinp': cin_act}
    if k == 1:
        p['w'] = W[0].astype(jnp.bfloat16)
    elif mode == 's2':
        p['w'] = jnp.concatenate([W[i] for i in _SD_ORDER], 0).astype(jnp.bfloat16)
    else:
        p['w'] = W.reshape(k * k * cin_act, cout_p).astype(jnp.bfloat16)
    return p


def make_stem_conv(pg, cout_true):
    """Focus stem: 3x3 conv over 12 s2d channels folded into one K=128 matmul."""
    cout_p = _round_up(cout_true, LANE)
    w = pg.normal((9, 12, cout_true), (9 * 12) ** -0.5)
    w, b = _fold_bn(pg, w, cout_true)
    W = jnp.zeros((LANE, cout_p), jnp.float32)
    W = W.at[:108, :cout_true].set(w.reshape(108, cout_true))
    B = jnp.zeros((1, cout_p), jnp.float32).at[:, :cout_true].set(b)
    return {'w': W.astype(jnp.bfloat16), 'b': B, 'cout': cout_true, 'coutp': cout_p}


def make_split_conv1x1(pg, parts_true, parts_act, cout_true):
    """1x1 conv whose input is a (virtual) concat of several activations."""
    cin_total = sum(parts_true)
    cout_p = _round_up(cout_true, LANE)
    w = pg.normal((cin_total, cout_true), cin_total ** -0.5)
    w, b = _fold_bn(pg, w, cout_true)
    pieces, off = [], 0
    for ct, ca in zip(parts_true, parts_act):
        Wp = jnp.zeros((ca, cout_p), jnp.float32).at[:ct, :cout_true].set(
            w[off:off + ct])
        pieces.append(Wp.astype(jnp.bfloat16))
        off += ct
    B = jnp.zeros((1, cout_p), jnp.float32).at[:, :cout_true].set(b)
    return pieces, B, cout_p


def make_bottleneck(pg, c_true, shortcut):
    c_act = _round_up(c_true, LANE)
    return {'c1': make_base_conv(pg, c_true, c_true, 1, cin_act=c_act),
            'c2': make_base_conv(pg, c_true, c_true, 3, cin_act=c_act, mode='s1'),
            'use_add': bool(shortcut)}


def make_csplayer(pg, cin_true, cout_true, n, shortcut=True, expansion=0.5):
    hidden = int(cout_true * expansion)
    cin_act = _round_up(cin_true, LANE)
    hp = _round_up(hidden, LANE)
    c1 = make_base_conv(pg, cin_true, hidden, 1, cin_act=cin_act)
    c2 = make_base_conv(pg, cin_true, hidden, 1, cin_act=cin_act)
    # conv1 and conv2 share the same input -> batched into one matmul call.
    w12 = jnp.concatenate([c1['w'], c2['w']], axis=1)
    b12 = jnp.concatenate([c1['b'], c2['b']], axis=1)
    # conv3 consumes concat([x1, x2]) as two partial dots (no concatenate).
    w3_pieces, b3, cout_p = make_split_conv1x1(pg, [hidden, hidden], [hp, hp],
                                               cout_true)
    return {'w12': w12, 'b12': b12, 'w3': w3_pieces, 'b3': b3,
            'm': [make_bottleneck(pg, hidden, shortcut) for _ in range(n)],
            'cout': cout_true, 'coutp': cout_p}


def make_spp(pg, cin_true, cout_true):
    hidden = cin_true // 2
    hp = _round_up(hidden, LANE)
    cin_act = _round_up(cin_true, LANE)
    conv1 = make_base_conv(pg, cin_true, hidden, 1, cin_act=cin_act)
    pieces, b2, cout_p = make_split_conv1x1(pg, [hidden] * 4, [hp] * 4, cout_true)
    w2 = jnp.concatenate(pieces, axis=0)
    return {'conv1': conv1, 'w2': w2, 'b2': b2,
            'cout': cout_true, 'coutp': cout_p}


def make_cspdarknet(key, depths, channels):
    pg = _ParamGen(key)
    params = {'stem': make_stem_conv(pg, channels[0])}
    for i, name in enumerate(('stage1', 'stage2', 'stage3', 'stage4')):
        cin, cout = channels[i], channels[i + 1]
        stage = {'conv': make_base_conv(pg, cin, cout, 3, mode='s2')}
        if name == 'stage4':
            stage['spp'] = make_spp(pg, cout, cout)
        stage['csp'] = make_csplayer(pg, cout, cout, depths[i],
                                     shortcut=(name != 'stage4'))
        params[name] = stage
    return params


# --------------------------- module forward ----------------------------------

def conv1x1(x, p):
    N, H, W, C = x.shape
    (y,) = fused_matmul([x.reshape(N * H * W, C)], [p['w']], p['b'])
    return y.reshape(N, H, W, p['coutp'])


def bottleneck_fwd(x, p):
    y = conv1x1(x, p['c1'])
    return conv3x3(y, p['c2'], stride=1,
                   residual=x if p['use_add'] else None)     # fused shortcut add


def csplayer_fwd(x, p):
    N, H, W, C = x.shape
    a = x.reshape(N * H * W, C)
    x1, x2 = fused_matmul([a], [p['w12']], p['b12'], n_out=2)    # conv1 + conv2
    hp = x1.shape[-1]
    x1 = x1.reshape(N, H, W, hp)
    for bp in p['m']:
        x1 = bottleneck_fwd(x1, bp)
    a1 = x1.reshape(N * H * W, hp)
    (y,) = fused_matmul([a1, x2], p['w3'], p['b3'])              # conv3 (concat fused)
    return y.reshape(N, H, W, p['coutp'])


def spp_fwd(x, p):
    x = conv1x1(x, p['conv1'])
    pooled = spp_pool(x)                                         # [x, p5, p9, p13]
    N, H, W, C4 = pooled.shape
    (y,) = fused_matmul([pooled.reshape(N * H * W, C4)], [p['w2']], p['b2'])
    return y.reshape(N, H, W, p['coutp'])


def stem_im2col(x):
    """Focus space-to-depth + 3x3 im2col: K = 9*12 = 108 -> padded to 128."""
    tl = x[:, 0::2, 0::2, :]
    bl = x[:, 1::2, 0::2, :]
    tr = x[:, 0::2, 1::2, :]
    br = x[:, 1::2, 1::2, :]
    sd = jnp.concatenate([tl, bl, tr, br], axis=-1)              # (N,H/2,W/2,12)
    N, H2, W2, C = sd.shape
    sdp = jnp.pad(sd, ((0, 0), (1, 1), (1, 1), (0, 0)))
    cols = [sdp[:, dh:dh + H2, dw:dw + W2, :] for dh in range(3) for dw in range(3)]
    a = jnp.concatenate(cols, axis=-1)                           # (N,H/2,W/2,108)
    return jnp.pad(a, ((0, 0), (0, 0), (0, 0), (0, LANE - 9 * C)))


def cspdarknet_fwd(x_nchw, params, out_features=('stage2', 'stage3', 'stage4')):
    # NOTE: H, W must be multiples of 32 (5 x /2 downsampling, even dims).
    x = jnp.transpose(x_nchw, (0, 2, 3, 1)).astype(jnp.bfloat16)  # NCHW -> NHWC bf16
    feats = {}
    a = stem_im2col(x)
    N, H2, W2, K = a.shape
    (y,) = fused_matmul([a.reshape(N * H2 * W2, K)],
                        [params['stem']['w']], params['stem']['b'])
    x = y.reshape(N, H2, W2, params['stem']['coutp'])
    feats['stem'] = (x, params['stem']['cout'])
    for name in ('stage1', 'stage2', 'stage3', 'stage4'):
        sp = params[name]
        x = conv3x3(x, sp['conv'], stride=2)
        if 'spp' in sp:
            x = spp_fwd(x, sp['spp'])
        x = csplayer_fwd(x, sp['csp'])
        feats[name] = (x, sp['csp']['cout'])

    def to_nchw(t, c_true):                                      # drop lane padding
        return jnp.transpose(t[..., :c_true].astype(jnp.float32), (0, 3, 1, 2))

    if len(out_features) <= 1:
        return to_nchw(*feats['stage4'])
    return [to_nchw(*feats[k])
            for k in ('stem', 'stage1', 'stage2', 'stage3', 'stage4')
            if k in out_features]


# --------------------------- kernel self-tests --------------------------------

def _selftest_matmul(key):
    k1, k2, k3, k4 = jax.random.split(key, 4)
    a1 = jax.random.normal(k1, (640, 128), jnp.float32).astype(jnp.bfloat16)
    a2 = jax.random.normal(k2, (640, 128), jnp.float32).astype(jnp.bfloat16)
    w1 = (0.1 * jax.random.normal(k3, (128, 1024), jnp.float32)).astype(jnp.bfloat16)
    w2 = (0.1 * jax.random.normal(k4, (128, 1024), jnp.float32)).astype(jnp.bfloat16)
    b = jnp.zeros((1, 1024), jnp.float32)
    (out,) = fused_matmul([a1, a2], [w1, w2], b)
    y = (a1.astype(jnp.float32) @ w1.astype(jnp.float32)
         + a2.astype(jnp.float32) @ w2.astype(jnp.float32) + b)
    ref = y * jax.nn.sigmoid(y)
    assert bool(jnp.allclose(out.astype(jnp.float32), ref, rtol=4e-2, atol=4e-2)), \
        "fused_matmul mismatch"


def _selftest_conv(key):
    kx, kw, kb = jax.random.split(key, 3)
    C = 128
    x = jax.random.normal(kx, (1, 16, 16, C), jnp.float32).astype(jnp.bfloat16)
    wt = ((9 * C) ** -0.5 * jax.random.normal(kw, (9, C, C), jnp.float32))
    bias = 0.1 * jax.random.normal(kb, (C,), jnp.float32)
    wt_bf = wt.astype(jnp.bfloat16)
    b2 = bias.reshape(1, C)

    def ref(stride, residual):
        y = jax.lax.conv_general_dilated(
            x.astype(jnp.float32),
            wt_bf.astype(jnp.float32).reshape(3, 3, C, C),
            window_strides=(stride, stride), padding=((1, 1), (1, 1)),
            dimension_numbers=('NHWC', 'HWIO', 'NHWC'))
        y = y + bias
        y = y * jax.nn.sigmoid(y)
        if residual is not None:
            y = y + residual.astype(jnp.float32)
        return y

    # stride-1, multi-band (exercises halo BlockSpecs) + fused residual add
    p1 = {'w': wt_bf.reshape(9 * C, C), 'b': b2, 'cinp': C, 'coutp': C}
    o1 = conv3x3(x, p1, stride=1, residual=x, band=8)
    assert bool(jnp.allclose(o1.astype(jnp.float32), ref(1, x),
                             rtol=4e-2, atol=4e-2)), "conv3x3 stride-1 mismatch"

    # stride-2 (space-to-depth path), multi-band
    p2 = {'w': jnp.concatenate([wt_bf[i] for i in _SD_ORDER], 0),
          'b': b2, 'cinp': C, 'coutp': C}
    o2 = conv3x3(x, p2, stride=2, band=4)
    assert bool(jnp.allclose(o2.astype(jnp.float32), ref(2, None),
                             rtol=4e-2, atol=4e-2)), "conv3x3 stride-2 mismatch"


# --------------------------- main ---------------------------------------------

if __name__ == "__main__":
    key = jax.random.PRNGKey(0)
    k_in, k_par, k_t1, k_t2 = jax.random.split(key, 4)

    # Correctness self-tests of the two main kernels vs. pure-JAX references.
    _selftest_matmul(k_t1)
    _selftest_conv(k_t2)

    # SMALL config consistent with the module structure (5 x /2 downsampling).
    depths = (1, 2, 2, 1)
    channels = (8, 16, 32, 64, 128)
    x = jax.random.normal(k_in, (2, 3, 64, 64), jnp.float32)      # NCHW input

    params = make_cspdarknet(k_par, depths, channels)
    fwd = jax.jit(functools.partial(cspdarknet_fwd, params=params))
    outs = jax.block_until_ready(fwd(x))

    expected = [(2, channels[2], 8, 8),      # stage2
                (2, channels[3], 4, 4),      # stage3
                (2, channels[4], 2, 2)]      # stage4
    assert len(outs) == 3
    for o, es in zip(outs, expected):
        assert o.shape == es, (o.shape, es)
        assert o.dtype == jnp.float32
        assert bool(jnp.all(jnp.isfinite(o)))

    # TODO(synk): the `weights=...` torch.load checkpoint-restore branch has no
    # Pallas equivalent; parameters are deterministically synthesized instead.
    print("KERNEL_OK")
</pallas_src>

<mosaic_0001>
module attributes {stable_mosaic.version = 11 : i64} {
  func.func @kernel(%arg0: i32, %arg1: i32, %arg2: memref<512x128xbf16, #tpu.memory_space<vmem>>, %arg3: memref<512x128xbf16, #tpu.memory_space<vmem>>, %arg4: memref<128x512xbf16, #tpu.memory_space<vmem>>, %arg5: memref<128x512xbf16, #tpu.memory_space<vmem>>, %arg6: memref<1x512xf32, #tpu.memory_space<vmem>>, %arg7: memref<512x512xbf16, #tpu.memory_space<vmem>>) attributes {dimension_semantics = [#tpu.dimension_semantics<parallel>, #tpu.dimension_semantics<parallel>], iteration_bounds = array<i64: 2, 2>, scalar_prefetch = 0 : i64, scratch_operands = 0 : i64, tpu.core_type = #tpu.core_type<tc>, window_params = [{transform_indices = @transform_0, window_bounds = array<i64: 512, 128>}, {transform_indices = @transform_1, window_bounds = array<i64: 512, 128>}, {transform_indices = @transform_2, window_bounds = array<i64: 128, 512>}, {transform_indices = @transform_3, window_bounds = array<i64: 128, 512>}, {transform_indices = @transform_4, window_bounds = array<i64: 1, 512>}, {transform_indices = @transform_5, window_bounds = array<i64: 512, 512>}]} {
    %c0 = arith.constant 0 : index
    %c0_0 = arith.constant 0 : index
    %0 = vector.load %arg2[%c0, %c0_0] : memref<512x128xbf16, #tpu.memory_space<vmem>>, vector<512x128xbf16>
    %c0_1 = arith.constant 0 : index
    %c0_2 = arith.constant 0 : index
    %1 = vector.load %arg4[%c0_1, %c0_2] : memref<128x512xbf16, #tpu.memory_space<vmem>>, vector<128x512xbf16>
    %cst = arith.constant dense<0.000000e+00> : vector<512x512xf32>
    %2 = tpu.matmul %0, %1, %cst {dimension_numbers = #tpu.dot_dimension_numbers<[1], [0], [0], [1], [0, 0, 1, 1], [], []>} : vector<512x128xbf16>, vector<128x512xbf16>, vector<512x512xf32> -> vector<512x512xf32>
    %c0_3 = arith.constant 0 : index
    %c0_4 = arith.constant 0 : index
    %3 = vector.load %arg3[%c0_3, %c0_4] : memref<512x128xbf16, #tpu.memory_space<vmem>>, vector<512x128xbf16>
    %c0_5 = arith.constant 0 : index
    %c0_6 = arith.constant 0 : index
    %4 = vector.load %arg5[%c0_5, %c0_6] : memref<128x512xbf16, #tpu.memory_space<vmem>>, vector<128x512xbf16>
    %cst_7 = arith.constant dense<0.000000e+00> : vector<512x512xf32>
    %5 = tpu.matmul %3, %4, %cst_7 {dimension_numbers = #tpu.dot_dimension_numbers<[1], [0], [0], [1], [0, 0, 1, 1], [], []>} : vector<512x128xbf16>, vector<128x512xbf16>, vector<512x512xf32> -> vector<512x512xf32>
    %6 = arith.addf %2, %5 : vector<512x512xf32>
    %c0_8 = arith.constant 0 : index
    %c0_9 = arith.constant 0 : index
    %7 = vector.load %arg6[%c0_8, %c0_9] : memref<1x512xf32, #tpu.memory_space<vmem>>, vector<1x512xf32>
    %8 = vector.broadcast %7 : vector<1x512xf32> to vector<512x512xf32>
    %9 = arith.addf %6, %8 : vector<512x512xf32>
    %cst_10 = arith.constant 5.000000e-01 : f32
    %10 = vector.broadcast %cst_10 : f32 to vector<512x512xf32>
    %11 = arith.mulf %10, %9 : vector<512x512xf32>
    %cst_11 = arith.constant 5.000000e-01 : f32
    %12 = vector.broadcast %cst_11 : f32 to vector<512x512xf32>
    %13 = arith.mulf %12, %9 : vector<512x512xf32>
    %14 = math.tanh %13 : vector<512x512xf32>
    %cst_12 = arith.constant 1.000000e+00 : f32
    %15 = vector.broadcast %cst_12 : f32 to vector<512x512xf32>
    %16 = arith.addf %14, %15 : vector<512x512xf32>
    %17 = arith.mulf %11, %16 : vector<512x512xf32>
    %18 = arith.truncf %17 : vector<512x512xf32> to vector<512x512xbf16>
    %c0_13 = arith.constant 0 : index
    %c0_14 = arith.constant 0 : index
    %19 = vector.load %arg7[%c0_13, %c0_14] : memref<512x512xbf16, #tpu.memory_space<vmem>>, vector<512x512xbf16>
    tpu.vector_store %arg7[%c0_13, %c0_14], %18 {strides = array<i32>} : memref<512x512xbf16, #tpu.memory_space<vmem>>, vector<512x512xbf16>,
    return
  }
  func.func @transform_0(%arg0: i32, %arg1: i32) -> (i32, i32) {
    %c0_i32 = arith.constant 0 : i32
    %c0_i32_0 = arith.constant 0 : i32
    return %arg0, %c0_i32 : i32, i32
  }
  func.func @transform_1(%arg0: i32, %arg1: i32) -> (i32, i32) {
    %c0_i32 = arith.constant 0 : i32
    %c0_i32_0 = arith.constant 0 : i32
    return %arg0, %c0_i32 : i32, i32
  }
  func.func @transform_2(%arg0: i32, %arg1: i32) -> (i32, i32) {
    %c0_i32 = arith.constant 0 : i32
    %c0_i32_0 = arith.constant 0 : i32
    return %c0_i32, %arg1 : i32, i32
  }
  func.func @transform_3(%arg0: i32, %arg1: i32) -> (i32, i32) {
    %c0_i32 = arith.constant 0 : i32
    %c0_i32_0 = arith.constant 0 : i32
    return %c0_i32, %arg1 : i32, i32
  }
  func.func @transform_4(%arg0: i32, %arg1: i32) -> (i32, i32) {
    %c0_i32 = arith.constant 0 : i32
    %c0_i32_0 = arith.constant 0 : i32
    return %c0_i32, %arg1 : i32, i32
  }
  func.func @transform_5(%arg0: i32, %arg1: i32) -> (i32, i32) {
    %c0_i32 = arith.constant 0 : i32
    return %arg0, %arg1 : i32, i32
  }
}

</mosaic_0001>

<llo_original>
// kernel: tpu_custom_call.1
$region0: #{tpu_custom_call.1}
  #allocation0 [shape = 'u32[]', space=smem, size = 0x4, offset = 0x4, fixed_abs, tag = 'smem constant byte address 0x4 - core index']
  #allocation1 [shape = 'u32[144,128]{1,0:T(1,128)}', space=vmem, size = 0x12000, scoped, tag = 'internal scratch']
  %s0 = inlined_call_operand.hbm [shape: bf16[640,128], index: 0, kind: input, shape index: {}]
  %s1 = inlined_call_operand.hbm [shape: bf16[640,128], index: 1, kind: input, shape index: {}]
  %s2 = inlined_call_operand.hbm [shape: bf16[128,1024], index: 2, kind: input, shape index: {}]
  %s3 = inlined_call_operand.hbm [shape: bf16[128,1024], index: 3, kind: input, shape index: {}]
  %s4 = inlined_call_operand.hbm [shape: f32[1,1024], index: 4, kind: input, shape index: {}]
  %s5 = inlined_call_operand.hbm [shape: bf16[640,1024], index: 5, kind: output, shape index: {}]
  %s6 = sld [smem:[#allocation0]]
  $region73: #{tpu_custom_call.1} parent=0
    _
  %s8 = ssub.s32 1, %s6
  %s9 = scalar_select 0, %s8, %s6
  $region1: #{tpu_custom_call.1} parent=0
    #allocation2 [shape = 'u8[262144]{0}', space=vmem, size = 0x40000, scoped, tag = 'input window, operand 0']
    #allocation3 [shape = 's32[2]{0}', space=sflag, size = 0x8, scoped, tag = 'scoped memory for tpu_custom_call.1']
    #allocation4 [shape = 's32[2]{0}', space=sflag, size = 0x8, scoped, tag = 'scoped memory for tpu_custom_call.1']
    #allocation5 [shape = 'u8[262144]{0}', space=vmem, size = 0x40000, scoped, tag = 'input window, operand 1']
    #allocation6 [shape = 's32[2]{0}', space=sflag, size = 0x8, scoped, tag = 'scoped memory for tpu_custom_call.1']
    #allocation7 [shape = 'u8[262144]{0}', space=vmem, size = 0x40000, scoped, tag = 'input window, operand 2']
    #allocation8 [shape = 'u8[262144]{0}', space=vmem, size = 0x40000, scoped, tag = 'input window, operand 3']
    #allocation9 [shape = 's32[2]{0}', space=sflag, size = 0x8, scoped, tag = 'scoped memory for tpu_custom_call.1']
    #allocation10 [shape = 'u8[4096]{0}', space=vmem, size = 0x1000, scoped, tag = 'input window, operand 4']
    #allocation11 [shape = 'u8[1048576]{0}', space=vmem, size = 0x100000, scoped, tag = 'output window, operand 0']
    %10 = vsyncpa [#allocation3], 0
    %s11 = scalar_lea.sflag [#allocation3], 1
    %12 = vsyncpa %s11, 0
    %13 = vsyncpa [#allocation6], 0
    %s14 = scalar_lea.sflag [#allocation6], 1
    %15 = vsyncpa %s14, 0
    %16 = vsyncpa [#allocation9], 0
    %s17 = scalar_lea.sflag [#allocation9], 1
    %18 = vsyncpa %s17, 0
    %19 = vsyncpa [#allocation4], 0
    %s20 = scalar_lea.sflag [#allocation4], 1
    %21 = vsyncpa %s20, 0
    loop: start=0, step=1, limit=6
    $region2: #{tpu_custom_call.1} parent=1 // loop_pre_header
      _
    $region3: #{tpu_custom_call.1} parent=1 // loop_header
      %s23 = sphi 0, %s27
      %p24 = scmp.ge.s32.totalorder %s23, 6
      %s30 = sphi 0, %s42
      %s31 = sphi 0, %s38
      %s32 = sphi 0, %s30
      %s33 = sphi 0, %s31
      %s34 = sphi 0, %s32
      %s35 = sphi 0, %s33
      %s45 = sphi 0, %s47
      %s48 = sphi 0, %s45
      %s49 = sphi 0, %s48
      %s65 = sphi 0, %s49
      %s71 = sphi 0, %s73
      %s74 = sphi 0, %s71
      %s75 = sphi 0, %s74
      %s91 = sphi 0, %s75
      %s97 = sphi 0, %s99
      %s100 = sphi 0, %s97
      %s101 = sphi 0, %s100
      %s117 = sphi 0, %s101
      %s123 = sphi 0, %s125
      %s126 = sphi 0, %s123
      %s127 = sphi 0, %s126
      %s143 = sphi 0, %s127
      %s149 = sphi 0, %s151
      %s152 = sphi 0, %s149
      %s153 = sphi 0, %s152
      %s169 = sphi 0, %s153
      %s177 = sphi 0, %s179
      %s180 = sphi 0, %s177
      %s181 = sphi 0, %s180
      %s197 = sphi 0, %s181
    $region4: #{tpu_custom_call.1} parent=1 // loop_header_branch
      %26 = sbr.rel (%p24) target = $region8
    $region5: #{tpu_custom_call.1} parent=1 // loop_body
      %s28 = ssub.s32 %s23, 1
      %s29 = ssub.s32 %s23, 2
      %s36 = sadd.s32 1, %s31
      %p37 = scmp.ge.s32.totalorder %s36, 2
      %s38 = scalar_select %p37, 0, %s36
      %s39 = sadd.s32 1, %s30
      %s40 = scalar_select %p37, %s39, %s30
      %p41 = scmp.ge.s32.totalorder %s40, 2
      %s42 = scalar_select %p41, 0, %s40
      %s43 = ssub.s32 %s30, %s42
      %p44 = scmp.eq.s32.totalorder %s43, 0
      %s46 = sadd.s32 %s45, 1
      %s47 = scalar_select %p44, %s45, %s46
      %p50 = pneg %p44
      %p51 = scmp.eq.s32.totalorder %s23, 3
      %p52 = por %p50, %p51
      %p53 = scmp.ne.s32.totalorder %s45, %s48
      %p54 = scmp.eq.s32.totalorder %s23, 0
      %p55 = por %p53, %p54
      %p56 = scmp.ne.s32.totalorder %s45, %s48
      %p57 = scmp.eq.s32.totalorder %s28, 3
      %p58 = por %p56, %p57
      %p59 = scmp.ne.s32.totalorder %s48, %s49
      %p60 = scmp.eq.s32.totalorder %s28, 0
      %p61 = por %p59, %p60
      %p62 = scmp.ne.s32.totalorder %s48, %s49
      %p63 = scmp.eq.s32.totalorder %s29, 3
      %p64 = por %p62, %p63
      %p66 = scmp.ne.s32.totalorder %s49, %s65
      %p67 = scmp.eq.s32.totalorder %s29, 0
      %p68 = por %p66, %p67
      %s69 = ssub.s32 %s30, %s42
      %p70 = scmp.eq.s32.totalorder %s69, 0
      %s72 = sadd.s32 %s71, 1
      %s73 = scalar_select %p70, %s71, %s72
      %p76 = pneg %p70
      %p77 = scmp.eq.s32.totalorder %s23, 3
      %p78 = por %p76, %p77
      %p79 = scmp.ne.s32.totalorder %s71, %s74
      %p80 = scmp.eq.s32.totalorder %s23, 0
      %p81 = por %p79, %p80
      %p82 = scmp.ne.s32.totalorder %s71, %s74
      %p83 = scmp.eq.s32.totalorder %s28, 3
      %p84 = por %p82, %p83
      %p85 = scmp.ne.s32.totalorder %s74, %s75
      %p86 = scmp.eq.s32.totalorder %s28, 0
      %p87 = por %p85, %p86
      %p88 = scmp.ne.s32.totalorder %s74, %s75
      %p89 = scmp.eq.s32.totalorder %s29, 3
      %p90 = por %p88, %p89
      %p92 = scmp.ne.s32.totalorder %s75, %s91
      %p93 = scmp.eq.s32.totalorder %s29, 0
      %p94 = por %p92, %p93
      %s95 = ssub.s32 %s31, %s38
      %p96 = scmp.eq.s32.totalorder %s95, 0
      %s98 = sadd.s32 %s97, 1
      %s99 = scalar_select %p96, %s97, %s98
      %p102 = pneg %p96
      %p103 = scmp.eq.s32.totalorder %s23, 3
      %p104 = por %p102, %p103
      %p105 = scmp.ne.s32.totalorder %s97, %s100
      %p106 = scmp.eq.s32.totalorder %s23, 0
      %p107 = por %p105, %p106
      %p108 = scmp.ne.s32.totalorder %s97, %s100
      %p109 = scmp.eq.s32.totalorder %s28, 3
      %p110 = por %p108, %p109
      %p111 = scmp.ne.s32.totalorder %s100, %s101
      %p112 = scmp.eq.s32.totalorder %s28, 0
      %p113 = por %p111, %p112
      %p114 = scmp.ne.s32.totalorder %s100, %s101
      %p115 = scmp.eq.s32.totalorder %s29, 3
      %p116 = por %p114, %p115
      %p118 = scmp.ne.s32.totalorder %s101, %s117
      %p119 = scmp.eq.s32.totalorder %s29, 0
      %p120 = por %p118, %p119
      %s121 = ssub.s32 %s31, %s38
      %p122 = scmp.eq.s32.totalorder %s121, 0
      %s124 = sadd.s32 %s123, 1
      %s125 = scalar_select %p122, %s123, %s124
      %p128 = pneg %p122
      %p129 = scmp.eq.s32.totalorder %s23, 3
      %p130 = por %p128, %p129
      %p131 = scmp.ne.s32.totalorder %s123, %s126
      %p132 = scmp.eq.s32.totalorder %s23, 0
      %p133 = por %p131, %p132
      %p134 = scmp.ne.s32.totalorder %s123, %s126
      %p135 = scmp.eq.s32.totalorder %s28, 3
      %p136 = por %p134, %p135
      %p137 = scmp.ne.s32.totalorder %s126, %s127
      %p138 = scmp.eq.s32.totalorder %s28, 0
      %p139 = por %p137, %p138
      %p140 = scmp.ne.s32.totalorder %s126, %s127
      %p141 = scmp.eq.s32.totalorder %s29, 3
      %p142 = por %p140, %p141
      %p144 = scmp.ne.s32.totalorder %s127, %s143
      %p145 = scmp.eq.s32.totalorder %s29, 0
      %p146 = por %p144, %p145
      %s147 = ssub.s32 %s31, %s38
      %p148 = scmp.eq.s32.totalorder %s147, 0
      %s150 = sadd.s32 %s149, 1
      %s151 = scalar_select %p148, %s149, %s150
      %p154 = pneg %p148
      %p155 = scmp.eq.s32.totalorder %s23, 3
      %p156 = por %p154, %p155
      %p157 = scmp.ne.s32.totalorder %s149, %s152
      %p158 = scmp.eq.s32.totalorder %s23, 0
      %p159 = por %p157, %p158
      %p160 = scmp.ne.s32.totalorder %s149, %s152
      %p161 = scmp.eq.s32.totalorder %s28, 3
      %p162 = por %p160, %p161
      %p163 = scmp.ne.s32.totalorder %s152, %s153
      %p164 = scmp.eq.s32.totalorder %s28, 0
      %p165 = por %p163, %p164
      %p166 = scmp.ne.s32.totalorder %s152, %s153
      %p167 = scmp.eq.s32.totalorder %s29, 3
      %p168 = por %p166, %p167
      %p170 = scmp.ne.s32.totalorder %s153, %s169
      %p171 = scmp.eq.s32.totalorder %s29, 0
      %p172 = por %p170, %p171
      %s173 = ssub.s32 %s30, %s42
      %s174 = ssub.s32 %s31, %s38
      %s175 = sor.u32 %s173, %s174
      %p176 = scmp.eq.s32.totalorder %s175, 0
      %s178 = sadd.s32 %s177, 1
      %s179 = scalar_select %p176, %s177, %s178
      %p182 = pneg %p176
      %p183 = scmp.eq.s32.totalorder %s23, 3
      %p184 = por %p182, %p183
      %p185 = scmp.ne.s32.totalorder %s177, %s180
      %p186 = scmp.eq.s32.totalorder %s23, 0
      %p187 = por %p185, %p186
      %p188 = scmp.ne.s32.totalorder %s177, %s180
      %p189 = scmp.eq.s32.totalorder %s28, 3
      %p190 = por %p188, %p189
      %p191 = scmp.ne.s32.totalorder %s180, %s181
      %p192 = scmp.eq.s32.totalorder %s28, 0
      %p193 = por %p191, %p192
      %p194 = scmp.ne.s32.totalorder %s180, %s181
      %p195 = scmp.eq.s32.totalorder %s29, 3
      %p196 = por %p194, %p195
      %p198 = scmp.ne.s32.totalorder %s181, %s197
      %p199 = scmp.eq.s32.totalorder %s29, 0
      %p200 = por %p198, %p199
      %p201 = scmp.le.s32.totalorder 1, %s23
      %p202 = scmp.lt.s32.totalorder %s23, 5
      %p203 = pnand %p201, %p202
      %p204 = pneg %p203
      // Predicated region
      $region9: #{tpu_custom_call.1} parent=5 // pred_check
        _
      $region10: #{tpu_custom_call.1} parent=5 // pred_check_branch
        %206 = sbr.rel (%p203) target = $region12
      $region11: #{tpu_custom_call.1} parent=5 // pred_region
        %s207 = ssub.s32 %s23, 1
      $region12: #{tpu_custom_call.1} parent=5 // pred_fallthru
        _
      %p208 = scmp.lt.s32.totalorder %s23, 4
      // Predicated region
      $region13: #{tpu_custom_call.1} parent=5 // pred_check
        %p209 = pneg %p208
      $region14: #{tpu_custom_call.1} parent=5 // pred_check_branch
        %211 = sbr.rel (%p209) target = $region16
      $region15: #{tpu_custom_call.1} parent=5 // pred_region
        // Predicated region
        $region17: #{tpu_custom_call.1} parent=15 // pred_check
          %p212 = pneg %p55
        $region18: #{tpu_custom_call.1} parent=15 // pred_check_branch
          %214 = sbr.rel (%p212) target = $region20
        $region19: #{tpu_custom_call.1} parent=15 // pred_region
          %s215 = sand.u32 %s45, 1
          %s216 = scalar_lea.sflag [#allocation3], %s215
          %s217 = sand.u32 %s45, 1
          %s218 = smul.addr %s217, 256
          %s219 = scalar_lea.vmem [#allocation2], %s218
          %s220 = smul.u32 64, %s30
          %s221 = ssub.s32 80, %s220
          %p222 = scmp.lt.s32.totalorder %s221, 64
          %s223 = scalar_select %p222, %s221, 64
          %s224 = smul.u32 64, %s223
          %s226 = ssub.s32 4096, %s224
          %227 = vsyncadd %s216, %s226
          %p228 = scmp.ne.s32.totalorder 0, %s224
          %s229 = smul.addr %s220, 64
          %s230 = scalar_lea.hbm %s0, %s229
          %s231 = smul.u32 4, %s223
          %s232 = sshll.u32 %s219, 4
          %s233 = int_to_ptr.vmem [resolvable:$true] %s232
          %s234 = sshll.u32 %s231, 4
          %238 = dma.hbm_to_vmem [thread:$0]  (%p228), %s230, %s234, %s233, %s216, 64, 64, 4
        $region20: #{tpu_custom_call.1} parent=15 // pred_fallthru
          _
        // Predicated region
        $region21: #{tpu_custom_call.1} parent=15 // pred_check
          %p239 = pneg %p81
        $region22: #{tpu_custom_call.1} parent=15 // pred_check_branch
          %241 = sbr.rel (%p239) target = $region24
        $region23: #{tpu_custom_call.1} parent=15 // pred_region
          %s242 = sand.u32 %s23, 1
          %s243 = scalar_lea.sflag [#allocation6], %s242
          %s244 = sand.u32 %s71, 1
          %s245 = smul.addr %s244, 256
          %s246 = scalar_lea.vmem [#allocation5], %s245
          %s247 = smul.u32 64, %s30
          %s248 = ssub.s32 80, %s247
          %p249 = scmp.lt.s32.totalorder %s248, 64
          %s250 = scalar_select %p249, %s248, 64
          %s251 = smul.u32 64, %s250
          %s253 = ssub.s32 4096, %s251
          %254 = vsyncadd %s243, %s253
          %p255 = scmp.ne.s32.totalorder 0, %s251
          %s256 = smul.addr %s247, 64
          %s257 = scalar_lea.hbm %s1, %s256
          %s258 = smul.u32 4, %s250
          %s259 = sshll.u32 %s246, 4
          %s260 = int_to_ptr.vmem [resolvable:$true] %s259
          %s261 = sshll.u32 %s258, 4
          %265 = dma.hbm_to_vmem [thread:$0]  (%p255), %s257, %s261, %s260, %s243, 64, 64, 4
        $region24: #{tpu_custom_call.1} parent=15 // pred_fallthru
          _
        // Predicated region
        $region25: #{tpu_custom_call.1} parent=15 // pred_check
          %p266 = pneg %p107
        $region26: #{tpu_custom_call.1} parent=15 // pred_check_branch
          %268 = sbr.rel (%p266) target = $region28
        $region27: #{tpu_custom_call.1} parent=15 // pred_region
          %s269 = sand.u32 %s23, 1
          %s270 = scalar_lea.sflag [#allocation6], %s269
          %s271 = sand.u32 %s97, 1
          %s272 = smul.addr %s271, 256
          %s273 = scalar_lea.vmem [#allocation7], %s272
          %s274 = smul.u32 4, %s31
          %s276 = ssub.s32 4096, 4096
          %277 = vsyncadd %s270, %s276
          %s278 = smul.addr %s274, 64
          %s279 = scalar_lea.hbm %s2, %s278
          %s280 = sshll.u32 %s273, 4
          %s281 = int_to_ptr.vmem [resolvable:$true] %s280
          %286 = dma.hbm_to_vmem [thread:$0]  %s279, 4096, %s281, %s270, 512, 256, 16
        $region28: #{tpu_custom_call.1} parent=15 // pred_fallthru
          _
        // Predicated region
        $region29: #{tpu_custom_call.1} parent=15 // pred_check
          %p287 = pneg %p133
        $region30: #{tpu_custom_call.1} parent=15 // pred_check_branch
          %289 = sbr.rel (%p287) target = $region32
        $region31: #{tpu_custom_call.1} parent=15 // pred_region
          %s290 = sand.u32 %s23, 1
          %s291 = scalar_lea.sflag [#allocation9], %s290
          %s292 = sand.u32 %s123, 1
          %s293 = smul.addr %s292, 256
          %s294 = scalar_lea.vmem [#allocation8], %s293
          %s295 = smul.u32 4, %s31
          %s297 = ssub.s32 4096, 4096
          %298 = vsyncadd %s291, %s297
          %s299 = smul.addr %s295, 64
          %s300 = scalar_lea.hbm %s3, %s299
          %s301 = sshll.u32 %s294, 4
          %s302 = int_to_ptr.vmem [resolvable:$true] %s301
          %307 = dma.hbm_to_vmem [thread:$0]  %s300, 4096, %s302, %s291, 512, 256, 16
        $region32: #{tpu_custom_call.1} parent=15 // pred_fallthru
          _
        // Predicated region
        $region33: #{tpu_custom_call.1} parent=15 // pred_check
          %p308 = pneg %p159
        $region34: #{tpu_custom_call.1} parent=15 // pred_check_branch
          %310 = sbr.rel (%p308) target = $region36
        $region35: #{tpu_custom_call.1} parent=15 // pred_region
          %s311 = sand.u32 %s23, 1
          %s312 = scalar_lea.sflag [#allocation9], %s311
          %s313 = sand.u32 %s149, 1
          %s314 = smul.addr %s313, 4
          %s315 = scalar_lea.vmem [#allocation10], %s314
          %s316 = smul.u32 4, %s31
          %s318 = ssub.s32 64, 64
          %319 = vsyncadd %s312, %s318
          %s320 = smul.addr %s316, 16
          %s321 = scalar_lea.hbm %s4, %s320
          %s323 = sshll.u32 %s315, 4
          %s324 = int_to_ptr.vmem [resolvable:$true] %s323
          %326 = dma.hbm_to_vmem [thread:$0]  %s321, 64, %s324, %s312
        $region36: #{tpu_custom_call.1} parent=15 // pred_fallthru
          _
      $region16: #{tpu_custom_call.1} parent=5 // pred_fallthru
        _
      %p327 = scmp.le.s32.totalorder 1, %s23
      %p328 = scmp.lt.s32.totalorder %s23, 5
      %p329 = pnand %p327, %p328
      %p330 = pneg %p329
      // Predicated region
      $region37: #{tpu_custom_call.1} parent=5 // pred_check
        _
      $region38: #{tpu_custom_call.1} parent=5 // pred_check_branch
        %332 = sbr.rel (%p329) target = $region40
      $region39: #{tpu_custom_call.1} parent=5 // pred_region
        %s333 = ssub.s32 %s23, 1
        %s334 = sand.u32 %s48, 1
        %s335 = scalar_lea.sflag [#allocation3], %s334
        %s336 = sand.u32 %s48, 1
        %s337 = smul.addr %s336, 256
        %s338 = scalar_lea.vmem [#allocation2], %s337
        // Predicated region
        $region41: #{tpu_custom_call.1} parent=39 // pred_check
          %p339 = pneg %p61
        $region42: #{tpu_custom_call.1} parent=39 // pred_check_branch
          %341 = sbr.rel (%p339) target = $region44
        $region43: #{tpu_custom_call.1} parent=39 // pred_region
          %342 = dma.done %s335, 4096
        $region44: #{tpu_custom_call.1} parent=39 // pred_fallthru
          _
        %s343 = sand.u32 %s28, 1
        %s344 = scalar_lea.sflag [#allocation6], %s343
        %s345 = sand.u32 %s74, 1
        %s346 = smul.addr %s345, 256
        %s347 = scalar_lea.vmem [#allocation5], %s346
        // Predicated region
        $region45: #{tpu_custom_call.1} parent=39 // pred_check
          %p348 = pneg %p87
        $region46: #{tpu_custom_call.1} parent=39 // pred_check_branch
          %350 = sbr.rel (%p348) target = $region48
        $region47: #{tpu_custom_call.1} parent=39 // pred_region
          %351 = dma.done %s344, 4096
        $region48: #{tpu_custom_call.1} parent=39 // pred_fallthru
          _
        %s352 = sand.u32 %s28, 1
        %s353 = scalar_lea.sflag [#allocation6], %s352
        %s354 = sand.u32 %s100, 1
        %s355 = smul.addr %s354, 256
        %s356 = scalar_lea.vmem [#allocation7], %s355
        // Predicated region
        $region49: #{tpu_custom_call.1} parent=39 // pred_check
          %p357 = pneg %p113
        $region50: #{tpu_custom_call.1} parent=39 // pred_check_branch
          %359 = sbr.rel (%p357) target = $region52
        $region51: #{tpu_custom_call.1} parent=39 // pred_region
          %360 = dma.done %s353, 4096
        $region52: #{tpu_custom_call.1} parent=39 // pred_fallthru
          _
        %s361 = sand.u32 %s28, 1
        %s362 = scalar_lea.sflag [#allocation9], %s361
        %s363 = sand.u32 %s126, 1
        %s364 = smul.addr %s363, 256
        %s365 = scalar_lea.vmem [#allocation8], %s364
        // Predicated region
        $region53: #{tpu_custom_call.1} parent=39 // pred_check
          %p366 = pneg %p139
        $region54: #{tpu_custom_call.1} parent=39 // pred_check_branch
          %368 = sbr.rel (%p366) target = $region56
        $region55: #{tpu_custom_call.1} parent=39 // pred_region
          %369 = dma.done %s362, 4096
        $region56: #{tpu_custom_call.1} parent=39 // pred_fallthru
          _
        %s370 = sand.u32 %s28, 1
        %s371 = scalar_lea.sflag [#allocation9], %s370
        %s372 = sand.u32 %s152, 1
        %s373 = smul.addr %s372, 4
        %s374 = scalar_lea.vmem [#allocation10], %s373
        // Predicated region
        $region57: #{tpu_custom_call.1} parent=39 // pred_check
          %p375 = pneg %p165
        $region58: #{tpu_custom_call.1} parent=39 // pred_check_branch
          %377 = sbr.rel (%p375) target = $region60
        $region59: #{tpu_custom_call.1} parent=39 // pred_region
          %378 = dma.done %s371, 64
        $region60: #{tpu_custom_call.1} parent=39 // pred_fallthru
          _
        %s379 = sand.u32 %s48, 1
        %s380 = scalar_lea.sflag [#allocation3], %s379
        %s381 = sand.u32 %s48, 1
        %s382 = smul.addr %s381, 256
        %s383 = scalar_lea.vmem [#allocation2], %s382
        %p384 = pneg %p61
        %p385 = pneg %p58
        %s386 = sand.u32 %s28, 1
        %s387 = scalar_lea.sflag [#allocation6], %s386
        %s388 = sand.u32 %s74, 1
        %s389 = smul.addr %s388, 256
        %s390 = scalar_lea.vmem [#allocation5], %s389
        %p391 = pneg %p87
        %p392 = pneg %p84
        %s393 = sand.u32 %s28, 1
        %s394 = scalar_lea.sflag [#allocation6], %s393
        %s395 = sand.u32 %s100, 1
        %s396 = smul.addr %s395, 256
        %s397 = scalar_lea.vmem [#allocation7], %s396
        %p398 = pneg %p113
        %p399 = pneg %p110
        %s400 = sand.u32 %s28, 1
        %s401 = scalar_lea.sflag [#allocation9], %s400
        %s402 = sand.u32 %s126, 1
        %s403 = smul.addr %s402, 256
        %s404 = scalar_lea.vmem [#allocation8], %s403
        %p405 = pneg %p139
        %p406 = pneg %p136
        %s407 = sand.u32 %s28, 1
        %s408 = scalar_lea.sflag [#allocation9], %s407
        %s409 = sand.u32 %s152, 1
        %s410 = smul.addr %s409, 4
        %s411 = scalar_lea.vmem [#allocation10], %s410
        %p412 = pneg %p165
        %p413 = pneg %p162
        %p414 = pneg %p193
        %p415 = pneg %p190
        %s416 = sand.u32 %s180, 1
        %s417 = scalar_lea.sflag [#allocation4], %s416
        %s418 = sand.u32 %s180, 1
        %s419 = smul.addr %s418, 1024
        %s420 = scalar_lea.vmem [#allocation11], %s419
        %s421 = smul.u32 64, %s32
        %s422 = ssub.s32 80, %s421
        %p423 = scmp.lt.s32.totalorder %s422, 64
        %s424 = scalar_select %p423, %s422, 64
        %s425 = smul.u32 64, %s424
        %s426 = smul.u32 64, %s32
        %s427 = ssub.s32 80, %s426
        %p428 = scmp.lt.s32.totalorder %s427, 64
        %s429 = scalar_select %p428, %s427, 64
        %s430 = smul.u32 64, %s429
        %s431 = smul.u32 4, %s33
        %s432 = smul.u32 4, %s33
        %s433 = smul.u32 4, %s33
        %s434 = smul.u32 64, %s32
        %s435 = smul.u32 4, %s33
        %s436 = ssub.s32 80, %s434
        %p437 = scmp.lt.s32.totalorder %s436, 64
        %s438 = scalar_select %p437, %s436, 64
        %s439 = smul.u32 64, %s438
        %s440 = smul.u32 %s439, 4
        %v442 = vld [vmem:[%s338] sm:$0xf]
        %v443 = vld [vmem:[%s338 + $0x4] sm:$0xf]
        %v444 = vld [vmem:[%s338 + $0x8] sm:$0xf]
        %v445 = vld [vmem:[%s338 + $0xc] sm:$0xf]
        %v446 = vld [vmem:[%s338 + $0x10] sm:$0xf]
        %v447 = vld [vmem:[%s338 + $0x14] sm:$0xf]
        %v448 = vld [vmem:[%s338 + $0x18] sm:$0xf]
        %v449 = vld [vmem:[%s338 + $0x1c] sm:$0xf]
        %v450 = vld [vmem:[%s338 + $0x20] sm:$0xf]
        %v451 = vld [vmem:[%s338 + $0x24] sm:$0xf]
        %v452 = vld [vmem:[%s338 + $0x28] sm:$0xf]
        %v453 = vld [vmem:[%s338 + $0x2c] sm:$0xf]
        %v454 = vld [vmem:[%s338 + $0x30] sm:$0xf]
        %v455 = vld [vmem:[%s338 + $0x34] sm:$0xf]
        %v456 = vld [vmem:[%s338 + $0x38] sm:$0xf]
        %v457 = vld [vmem:[%s338 + $0x3c] sm:$0xf]
        %v458 = vld [vmem:[%s338 + $0x40] sm:$0xf]
        %v459 = vld [vmem:[%s338 + $0x44] sm:$0xf]
        %v460 = vld [vmem:[%s338 + $0x48] sm:$0xf]
        %v461 = vld [vmem:[%s338 + $0x4c] sm:$0xf]
        %v462 = vld [vmem:[%s338 + $0x50] sm:$0xf]
        %v463 = vld [vmem:[%s338 + $0x54] sm:$0xf]
        %v464 = vld [vmem:[%s338 + $0x58] sm:$0xf]
        %v465 = vld [vmem:[%s338 + $0x5c] sm:$0xf]
        %v466 = vld [vmem:[%s338 + $0x60] sm:$0xf]
        %v467 = vld [vmem:[%s338 + $0x64] sm:$0xf]
        %v468 = vld [vmem:[%s338 + $0x68] sm:$0xf]
        %v469 = vld [vmem:[%s338 + $0x6c] sm:$0xf]
        %v470 = vld [vmem:[%s338 + $0x70] sm:$0xf]
        %v471 = vld [vmem:[%s338 + $0x74] sm:$0xf]
        %v472 = vld [vmem:[%s338 + $0x78] sm:$0xf]
        %v473 = vld [vmem:[%s338 + $0x7c] sm:$0xf]
        %v474 = vld [vmem:[%s338 + $0x80] sm:$0xf]
        %v475 = vld [vmem:[%s338 + $0x84] sm:$0xf]
        %v476 = vld [vmem:[%s338 + $0x88] sm:$0xf]
        %v477 = vld [vmem:[%s338 + $0x8c] sm:$0xf]
        %v478 = vld [vmem:[%s338 + $0x90] sm:$0xf]
        %v479 = vld [vmem:[%s338 + $0x94] sm:$0xf]
        %v480 = vld [vmem:[%s338 + $0x98] sm:$0xf]
        %v481 = vld [vmem:[%s338 + $0x9c] sm:$0xf]
        %v482 = vld [vmem:[%s338 + $0xa0] sm:$0xf]
        %v483 = vld [vmem:[%s338 + $0xa4] sm:$0xf]
        %v484 = vld [vmem:[%s338 + $0xa8] sm:$0xf]
        %v485 = vld [vmem:[%s338 + $0xac] sm:$0xf]
        %v486 = vld [vmem:[%s338 + $0xb0] sm:$0xf]
        %v487 = vld [vmem:[%s338 + $0xb4] sm:$0xf]
        %v488 = vld [vmem:[%s338 + $0xb8] sm:$0xf]
        %v489 = vld [vmem:[%s338 + $0xbc] sm:$0xf]
        %v490 = vld [vmem:[%s338 + $0xc0] sm:$0xf]
        %v491 = vld [vmem:[%s338 + $0xc4] sm:$0xf]
        %v492 = vld [vmem:[%s338 + $0xc8] sm:$0xf]
        %v493 = vld [vmem:[%s338 + $0xcc] sm:$0xf]
        %v494 = vld [vmem:[%s338 + $0xd0] sm:$0xf]
        %v495 = vld [vmem:[%s338 + $0xd4] sm:$0xf]
        %v496 = vld [vmem:[%s338 + $0xd8] sm:$0xf]
        %v497 = vld [vmem:[%s338 + $0xdc] sm:$0xf]
        %v498 = vld [vmem:[%s338 + $0xe0] sm:$0xf]
        %v499 = vld [vmem:[%s338 + $0xe4] sm:$0xf]
        %v500 = vld [vmem:[%s338 + $0xe8] sm:$0xf]
        %v501 = vld [vmem:[%s338 + $0xec] sm:$0xf]
        %v502 = vld [vmem:[%s338 + $0xf0] sm:$0xf]
        %v503 = vld [vmem:[%s338 + $0xf4] sm:$0xf]
        %v504 = vld [vmem:[%s338 + $0xf8] sm:$0xf]
        %v505 = vld [vmem:[%s338 + $0xfc] sm:$0xf]
        %v506 = vld [vmem:[%s356] sm:$0xff]
        %v507 = vld [vmem:[%s356 + $0x8] sm:$0xff]
        %v508 = vld [vmem:[%s356 + $0x10] sm:$0xff]
        %v509 = vld [vmem:[%s356 + $0x18] sm:$0xff]
        %v510 = vld [vmem:[%s356 + $0x20] sm:$0xff]
        %v511 = vld [vmem:[%s356 + $0x28] sm:$0xff]
        %v512 = vld [vmem:[%s356 + $0x30] sm:$0xff]
        %v513 = vld [vmem:[%s356 + $0x38] sm:$0xff]
        %v514 = vld [vmem:[%s356 + $0x40] sm:$0xff]
        %v515 = vld [vmem:[%s356 + $0x48] sm:$0xff]
        %v516 = vld [vmem:[%s356 + $0x50] sm:$0xff]
        %v517 = vld [vmem:[%s356 + $0x58] sm:$0xff]
        %v518 = vld [vmem:[%s356 + $0x60] sm:$0xff]
        %v519 = vld [vmem:[%s356 + $0x68] sm:$0xff]
        %v520 = vld [vmem:[%s356 + $0x70] sm:$0xff]
        %v521 = vld [vmem:[%s356 + $0x78] sm:$0xff]
        %v522 = vld [vmem:[%s356 + $0x80] sm:$0xff]
        %v523 = vld [vmem:[%s356 + $0x88] sm:$0xff]
        %v524 = vld [vmem:[%s356 + $0x90] sm:$0xff]
        %v525 = vld [vmem:[%s356 + $0x98] sm:$0xff]
        %v526 = vld [vmem:[%s356 + $0xa0] sm:$0xff]
        %v527 = vld [vmem:[%s356 + $0xa8] sm:$0xff]
        %v528 = vld [vmem:[%s356 + $0xb0] sm:$0xff]
        %v529 = vld [vmem:[%s356 + $0xb8] sm:$0xff]
        %v530 = vld [vmem:[%s356 + $0xc0] sm:$0xff]
        %v531 = vld [vmem:[%s356 + $0xc8] sm:$0xff]
        %v532 = vld [vmem:[%s356 + $0xd0] sm:$0xff]
        %v533 = vld [vmem:[%s356 + $0xd8] sm:$0xff]
        %v534 = vld [vmem:[%s356 + $0xe0] sm:$0xff]
        %v535 = vld [vmem:[%s356 + $0xe8] sm:$0xff]
        %v536 = vld [vmem:[%s356 + $0xf0] sm:$0xff]
        %v537 = vld [vmem:[%s356 + $0xf8] sm:$0xff]
        %v538 = vld [vmem:[%s347] sm:$0xf]
        %v539 = vld [vmem:[%s347 + $0x4] sm:$0xf]
        %v540 = vld [vmem:[%s347 + $0x8] sm:$0xf]
        %v541 = vld [vmem:[%s347 + $0xc] sm:$0xf]
        %v542 = vld [vmem:[%s347 + $0x10] sm:$0xf]
        %v543 = vld [vmem:[%s347 + $0x14] sm:$0xf]
        %v544 = vld [vmem:[%s347 + $0x18] sm:$0xf]
        %v545 = vld [vmem:[%s347 + $0x1c] sm:$0xf]
        %v546 = vld [vmem:[%s347 + $0x20] sm:$0xf]
        %v547 = vld [vmem:[%s347 + $0x24] sm:$0xf]
        %v548 = vld [vmem:[%s347 + $0x28] sm:$0xf]
        %v549 = vld [vmem:[%s347 + $0x2c] sm:$0xf]
        %v550 = vld [vmem:[%s347 + $0x30] sm:$0xf]
        %v551 = vld [vmem:[%s347 + $0x34] sm:$0xf]
        %v552 = vld [vmem:[%s347 + $0x38] sm:$0xf]
        %v553 = vld [vmem:[%s347 + $0x3c] sm:$0xf]
        %v554 = vld [vmem:[%s347 + $0x40] sm:$0xf]
        %v555 = vld [vmem:[%s347 + $0x44] sm:$0xf]
        %v556 = vld [vmem:[%s347 + $0x48] sm:$0xf]
        %v557 = vld [vmem:[%s347 + $0x4c] sm:$0xf]
        %v558 = vld [vmem:[%s347 + $0x50] sm:$0xf]
        %v559 = vld [vmem:[%s347 + $0x54] sm:$0xf]
        %v560 = vld [vmem:[%s347 + $0x58] sm:$0xf]
        %v561 = vld [vmem:[%s347 + $0x5c] sm:$0xf]
        %v562 = vld [vmem:[%s347 + $0x60] sm:$0xf]
        %v563 = vld [vmem:[%s347 + $0x64] sm:$0xf]
        %v564 = vld [vmem:[%s347 + $0x68] sm:$0xf]
        %v565 = vld [vmem:[%s347 + $0x6c] sm:$0xf]
        %v566 = vld [vmem:[%s347 + $0x70] sm:$0xf]
        %v567 = vld [vmem:[%s347 + $0x74] sm:$0xf]
        %v568 = vld [vmem:[%s347 + $0x78] sm:$0xf]
        %v569 = vld [vmem:[%s347 + $0x7c] sm:$0xf]
        %v570 = vld [vmem:[%s347 + $0x80] sm:$0xf]
        %v571 = vld [vmem:[%s347 + $0x84] sm:$0xf]
        %v572 = vld [vmem:[%s347 + $0x88] sm:$0xf]
        %v573 = vld [vmem:[%s347 + $0x8c] sm:$0xf]
        %v574 = vld [vmem:[%s347 + $0x90] sm:$0xf]
        %v575 = vld [vmem:[%s347 + $0x94] sm:$0xf]
        %v576 = vld [vmem:[%s347 + $0x98] sm:$0xf]
        %v577 = vld [vmem:[%s347 + $0x9c] sm:$0xf]
        %v578 = vld [vmem:[%s347 + $0xa0] sm:$0xf]
        %v579 = vld [vmem:[%s347 + $0xa4] sm:$0xf]
        %v580 = vld [vmem:[%s347 + $0xa8] sm:$0xf]
        %v581 = vld [vmem:[%s347 + $0xac] sm:$0xf]
        %v582 = vld [vmem:[%s347 + $0xb0] sm:$0xf]
        %v583 = vld [vmem:[%s347 + $0xb4] sm:$0xf]
        %v584 = vld [vmem:[%s347 + $0xb8] sm:$0xf]
        %v585 = vld [vmem:[%s347 + $0xbc] sm:$0xf]
        %v586 = vld [vmem:[%s347 + $0xc0] sm:$0xf]
        %v587 = vld [vmem:[%s347 + $0xc4] sm:$0xf]
        %v588 = vld [vmem:[%s347 + $0xc8] sm:$0xf]
        %v589 = vld [vmem:[%s347 + $0xcc] sm:$0xf]
        %v590 = vld [vmem:[%s347 + $0xd0] sm:$0xf]
        %v591 = vld [vmem:[%s347 + $0xd4] sm:$0xf]
        %v592 = vld [vmem:[%s347 + $0xd8] sm:$0xf]
        %v593 = vld [vmem:[%s347 + $0xdc] sm:$0xf]
        %v594 = vld [vmem:[%s347 + $0xe0] sm:$0xf]
        %v595 = vld [vmem:[%s347 + $0xe4] sm:$0xf]
        %v596 = vld [vmem:[%s347 + $0xe8] sm:$0xf]
        %v597 = vld [vmem:[%s347 + $0xec] sm:$0xf]
        %v598 = vld [vmem:[%s347 + $0xf0] sm:$0xf]
        %v599 = vld [vmem:[%s347 + $0xf4] sm:$0xf]
        %v600 = vld [vmem:[%s347 + $0xf8] sm:$0xf]
        %v601 = vld [vmem:[%s347 + $0xfc] sm:$0xf]
        %v602 = vld [vmem:[%s365] sm:$0xff]
        %v603 = vld [vmem:[%s365 + $0x8] sm:$0xff]
        %v604 = vld [vmem:[%s365 + $0x10] sm:$0xff]
        %v605 = vld [vmem:[%s365 + $0x18] sm:$0xff]
        %v606 = vld [vmem:[%s365 + $0x20] sm:$0xff]
        %v607 = vld [vmem:[%s365 + $0x28] sm:$0xff]
        %v608 = vld [vmem:[%s365 + $0x30] sm:$0xff]
        %v609 = vld [vmem:[%s365 + $0x38] sm:$0xff]
        %v610 = vld [vmem:[%s365 + $0x40] sm:$0xff]
        %v611 = vld [vmem:[%s365 + $0x48] sm:$0xff]
        %v612 = vld [vmem:[%s365 + $0x50] sm:$0xff]
        %v613 = vld [vmem:[%s365 + $0x58] sm:$0xff]
        %v614 = vld [vmem:[%s365 + $0x60] sm:$0xff]
        %v615 = vld [vmem:[%s365 + $0x68] sm:$0xff]
        %v616 = vld [vmem:[%s365 + $0x70] sm:$0xff]
        %v617 = vld [vmem:[%s365 + $0x78] sm:$0xff]
        %v618 = vld [vmem:[%s365 + $0x80] sm:$0xff]
        %v619 = vld [vmem:[%s365 + $0x88] sm:$0xff]
        %v620 = vld [vmem:[%s365 + $0x90] sm:$0xff]
        %v621 = vld [vmem:[%s365 + $0x98] sm:$0xff]
        %v622 = vld [vmem:[%s365 + $0xa0] sm:$0xff]
        %v623 = vld [vmem:[%s365 + $0xa8] sm:$0xff]
        %v624 = vld [vmem:[%s365 + $0xb0] sm:$0xff]
        %v625 = vld [vmem:[%s365 + $0xb8] sm:$0xff]
        %v626 = vld [vmem:[%s365 + $0xc0] sm:$0xff]
        %v627 = vld [vmem:[%s365 + $0xc8] sm:$0xff]
        %v628 = vld [vmem:[%s365 + $0xd0] sm:$0xff]
        %v629 = vld [vmem:[%s365 + $0xd8] sm:$0xff]
        %v630 = vld [vmem:[%s365 + $0xe0] sm:$0xff]
        %v631 = vld [vmem:[%s365 + $0xe8] sm:$0xff]
        %v632 = vld [vmem:[%s365 + $0xf0] sm:$0xff]
        %v633 = vld [vmem:[%s365 + $0xf8] sm:$0xff]
        %v698 = vunpack.c.l.b16 %v538
        %v699 = vunpack.c.l.b16 %v539
        %v700 = vunpack.c.l.b16 %v540
        %v701 = vunpack.c.l.b16 %v541
        %v702 = vunpack.c.l.b16 %v542
        %v703 = vunpack.c.l.b16 %v543
        %v704 = vunpack.c.l.b16 %v544
        %v705 = vunpack.c.l.b16 %v545
        %v706 = vunpack.c.l.b16 %v546
        %v707 = vunpack.c.l.b16 %v547
        %v708 = vunpack.c.l.b16 %v548
        %v709 = vunpack.c.l.b16 %v549
        %v710 = vunpack.c.l.b16 %v550
        %v711 = vunpack.c.l.b16 %v551
        %v712 = vunpack.c.l.b16 %v552
        %v713 = vunpack.c.l.b16 %v553
        %v714 = vunpack.c.l.b16 %v554
        %v715 = vunpack.c.l.b16 %v555
        %v716 = vunpack.c.l.b16 %v556
        %v717 = vunpack.c.l.b16 %v557
        %v718 = vunpack.c.l.b16 %v558
        %v719 = vunpack.c.l.b16 %v559
        %v720 = vunpack.c.l.b16 %v560
        %v721 = vunpack.c.l.b16 %v561
        %v722 = vunpack.c.l.b16 %v562
        %v723 = vunpack.c.l.b16 %v563
        %v724 = vunpack.c.l.b16 %v564
        %v725 = vunpack.c.l.b16 %v565
        %v726 = vunpack.c.l.b16 %v566
        %v727 = vunpack.c.l.b16 %v567
        %v728 = vunpack.c.l.b16 %v568
        %v729 = vunpack.c.l.b16 %v569
        %v730 = vunpack.c.l.b16 %v570
        %v731 = vunpack.c.l.b16 %v571
        %v732 = vunpack.c.l.b16 %v572
        %v733 = vunpack.c.l.b16 %v573
        %v734 = vunpack.c.l.b16 %v574
        %v735 = vunpack.c.l.b16 %v575
        %v736 = vunpack.c.l.b16 %v576
        %v737 = vunpack.c.l.b16 %v577
        %v738 = vunpack.c.l.b16 %v578
        %v739 = vunpack.c.l.b16 %v579
        %v740 = vunpack.c.l.b16 %v580
        %v741 = vunpack.c.l.b16 %v581
        %v742 = vunpack.c.l.b16 %v582
        %v743 = vunpack.c.l.b16 %v583
        %v744 = vunpack.c.l.b16 %v584
        %v745 = vunpack.c.l.b16 %v585
        %v746 = vunpack.c.l.b16 %v586
        %v747 = vunpack.c.l.b16 %v587
        %v748 = vunpack.c.l.b16 %v588
        %v749 = vunpack.c.l.b16 %v589
        %v750 = vunpack.c.l.b16 %v590
        %v751 = vunpack.c.l.b16 %v591
        %v752 = vunpack.c.l.b16 %v592
        %v753 = vunpack.c.l.b16 %v593
        %v754 = vunpack.c.l.b16 %v594
        %v755 = vunpack.c.l.b16 %v595
        %v756 = vunpack.c.l.b16 %v596
        %v757 = vunpack.c.l.b16 %v597
        %v758 = vunpack.c.l.b16 %v598
        %v759 = vunpack.c.l.b16 %v599
        %v760 = vunpack.c.l.b16 %v600
        %v761 = vunpack.c.l.b16 %v601
        %v762 = vpack.c.b16 %v699, %v698
        %v763 = vpack.c.b16 %v701, %v700
        %v764 = vpack.c.b16 %v703, %v702
        %v765 = vpack.c.b16 %v705, %v704
        %v766 = vpack.c.b16 %v707, %v706
        %v767 = vpack.c.b16 %v709, %v708
        %v768 = vpack.c.b16 %v711, %v710
        %v769 = vpack.c.b16 %v713, %v712
        %v770 = vpack.c.b16 %v715, %v714
        %v771 = vpack.c.b16 %v717, %v716
        %v772 = vpack.c.b16 %v719, %v718
        %v773 = vpack.c.b16 %v721, %v720
        %v774 = vpack.c.b16 %v723, %v722
        %v775 = vpack.c.b16 %v725, %v724
        %v776 = vpack.c.b16 %v727, %v726
        %v777 = vpack.c.b16 %v729, %v728
        %v778 = vpack.c.b16 %v731, %v730
        %v779 = vpack.c.b16 %v733, %v732
        %v780 = vpack.c.b16 %v735, %v734
        %v781 = vpack.c.b16 %v737, %v736
        %v782 = vpack.c.b16 %v739, %v738
        %v783 = vpack.c.b16 %v741, %v740
        %v784 = vpack.c.b16 %v743, %v742
        %v785 = vpack.c.b16 %v745, %v744
        %v786 = vpack.c.b16 %v747, %v746
        %v787 = vpack.c.b16 %v749, %v748
        %v788 = vpack.c.b16 %v751, %v750
        %v789 = vpack.c.b16 %v753, %v752
        %v790 = vpack.c.b16 %v755, %v754
        %v791 = vpack.c.b16 %v757, %v756
        %v792 = vpack.c.b16 %v759, %v758
        %v793 = vpack.c.b16 %v761, %v760
        %v858 = vunpack.c.l.b16 %v602
        %v859 = vunpack.c.h.b16 %v602
        %v860 = vunpack.c.l.b16 %v603
        %v861 = vunpack.c.h.b16 %v603
        %v862 = vunpack.c.l.b16 %v604
        %v863 = vunpack.c.h.b16 %v604
        %v864 = vunpack.c.l.b16 %v605
        %v865 = vunpack.c.h.b16 %v605
        %v866 = vunpack.c.l.b16 %v606
        %v867 = vunpack.c.h.b16 %v606
        %v868 = vunpack.c.l.b16 %v607
        %v869 = vunpack.c.h.b16 %v607
        %v870 = vunpack.c.l.b16 %v608
        %v871 = vunpack.c.h.b16 %v608
        %v872 = vunpack.c.l.b16 %v609
        %v873 = vunpack.c.h.b16 %v609
        %v874 = vunpack.c.l.b16 %v610
        %v875 = vunpack.c.h.b16 %v610
        %v876 = vunpack.c.l.b16 %v611
        %v877 = vunpack.c.h.b16 %v611
        %v878 = vunpack.c.l.b16 %v612
        %v879 = vunpack.c.h.b16 %v612
        %v880 = vunpack.c.l.b16 %v613
        %v881 = vunpack.c.h.b16 %v613
        %v882 = vunpack.c.l.b16 %v614
        %v883 = vunpack.c.h.b16 %v614
        %v884 = vunpack.c.l.b16 %v615
        %v885 = vunpack.c.h.b16 %v615
        %v886 = vunpack.c.l.b16 %v616
        %v887 = vunpack.c.h.b16 %v616
        %v888 = vunpack.c.l.b16 %v617
        %v889 = vunpack.c.h.b16 %v617
        %v890 = vunpack.c.l.b16 %v618
        %v891 = vunpack.c.h.b16 %v618
        %v892 = vunpack.c.l.b16 %v619
        %v893 = vunpack.c.h.b16 %v619
        %v894 = vunpack.c.l.b16 %v620
        %v895 = vunpack.c.h.b16 %v620
        %v896 = vunpack.c.l.b16 %v621
        %v897 = vunpack.c.h.b16 %v621
        %v898 = vunpack.c.l.b16 %v622
        %v899 = vunpack.c.h.b16 %v622
        %v900 = vunpack.c.l.b16 %v623
        %v901 = vunpack.c.h.b16 %v623
        %v902 = vunpack.c.l.b16 %v624
        %v903 = vunpack.c.h.b16 %v624
        %v904 = vunpack.c.l.b16 %v625
        %v905 = vunpack.c.h.b16 %v625
        %v906 = vunpack.c.l.b16 %v626
        %v907 = vunpack.c.h.b16 %v626
        %v908 = vunpack.c.l.b16 %v627
        %v909 = vunpack.c.h.b16 %v627
        %v910 = vunpack.c.l.b16 %v628
        %v911 = vunpack.c.h.b16 %v628
        %v912 = vunpack.c.l.b16 %v629
        %v913 = vunpack.c.h.b16 %v629
        %v914 = vunpack.c.l.b16 %v630
        %v915 = vunpack.c.h.b16 %v630
        %v916 = vunpack.c.l.b16 %v631
        %v917 = vunpack.c.h.b16 %v631
        %v918 = vunpack.c.l.b16 %v632
        %v919 = vunpack.c.h.b16 %v632
        %v920 = vunpack.c.l.b16 %v633
        %v921 = vunpack.c.h.b16 %v633
        %v922 = vpack.c.b16 %v862, %v858
        %v923 = vpack.c.b16 %v863, %v859
        %v924 = vpack.c.b16 %v864, %v860
        %v925 = vpack.c.b16 %v865, %v861
        %v926 = vpack.c.b16 %v870, %v866
        %v927 = vpack.c.b16 %v871, %v867
        %v928 = vpack.c.b16 %v872, %v868
        %v929 = vpack.c.b16 %v873, %v869
        %v930 = vpack.c.b16 %v878, %v874
        %v931 = vpack.c.b16 %v879, %v875
        %v932 = vpack.c.b16 %v880, %v876
        %v933 = vpack.c.b16 %v881, %v877
        %v934 = vpack.c.b16 %v886, %v882
        %v935 = vpack.c.b16 %v887, %v883
        %v936 = vpack.c.b16 %v888, %v884
        %v937 = vpack.c.b16 %v889, %v885
        %v938 = vpack.c.b16 %v894, %v890
        %v939 = vpack.c.b16 %v895, %v891
        %v940 = vpack.c.b16 %v896, %v892
        %v941 = vpack.c.b16 %v897, %v893
        %v942 = vpack.c.b16 %v902, %v898
        %v943 = vpack.c.b16 %v903, %v899
        %v944 = vpack.c.b16 %v904, %v900
        %v945 = vpack.c.b16 %v905, %v901
        %v946 = vpack.c.b16 %v910, %v906
        %v947 = vpack.c.b16 %v911, %v907
        %v948 = vpack.c.b16 %v912, %v908
        %v949 = vpack.c.b16 %v913, %v909
        %v950 = vpack.c.b16 %v918, %v914
        %v951 = vpack.c.b16 %v919, %v915
        %v952 = vpack.c.b16 %v920, %v916
        %v953 = vpack.c.b16 %v921, %v917
        %986 = vmatprep.subr.bf16.mxu0 %v923
        %987 = vmatpush1.bf16.msra.mxu0 %v922
        %988 = vmatprep.subr.bf16.mxu0 %v927
        %989 = vmatpush1.bf16.msra.mxu0 %v926
        %990 = vmatprep.subr.bf16.mxu0 %v931
        %991 = vmatpush1.bf16.msra.mxu0 %v930
        %992 = vmatprep.subr.bf16.mxu0 %v935
        %993 = vmatpush1.bf16.msra.mxu0 %v934
        %994 = vmatprep.subr.bf16.mxu0 %v939
        %995 = vmatpush1.bf16.msra.mxu0 %v938
        %996 = vmatprep.subr.bf16.mxu0 %v943
        %997 = vmatpush1.bf16.msra.mxu0 %v942
        %998 = vmatprep.subr.bf16.mxu0 %v947
        %999 = vmatpush1.bf16.msra.mxu0 %v946
        %1000 = vmatprep.subr.bf16.mxu0 %v951
        %1001 = vmatpush1.bf16.msra.mxu0 %v950
        %1002 = vmatprep.subr.bf16.mxu0 0
        %1003 = vmatpush1.bf16.msra.mxu0 0
        %1004 = vmatprep.subr.bf16.mxu0 0
        %1005 = vmatpush1.bf16.msra.mxu0 0
        %1006 = vmatprep.subr.bf16.mxu0 0
        %1007 = vmatpush1.bf16.msra.mxu0 0
        %1008 = vmatprep.subr.bf16.mxu0 0
        %1009 = vmatpush1.bf16.msra.mxu0 0
        %1010 = vmatprep.subr.bf16.mxu0 0
        %1011 = vmatpush1.bf16.msra.mxu0 0
        %1012 = vmatprep.subr.bf16.mxu0 0
        %1013 = vmatpush1.bf16.msra.mxu0 0
        %1014 = vmatprep.subr.bf16.mxu0 0
        %1015 = vmatpush1.bf16.msra.mxu0 0
        %1016 = vmatprep.subr.bf16.mxu0 0
        %1017 = vmatpush1.bf16.msra.mxu0 0
        %1018 = vmatprep.mubr.bf16.mxu0 0
        %1019 = vmatmul.mubr.bf16.gmra.mrb[0].mxu0 %v762
        %v1020 = vpop.f32.mrb[0].mxu0
        %v1021 = vadd.f32 0.0, %v1020
        %v1022 = vpop.f32.mrb[0].mxu0
        %v1023 = vadd.f32 0.0, %v1022
        %v1024 = vpop.f32.mrb[0].mxu0
        %v1025 = vadd.f32 0.0, %v1024
        %v1026 = vpop.f32.mrb[0].mxu0
        %v1027 = vadd.f32 0.0, %v1026
        %1028 = vmatprep.mubr.bf16.mxu0 0
        %1029 = vmatmul.mubr.bf16.gmra.mrb[0].mxu0 %v763
        %v1030 = vpop.f32.mrb[0].mxu0
        %v1031 = vadd.f32 0.0, %v1030
        %v1032 = vpop.f32.mrb[0].mxu0
        %v1033 = vadd.f32 0.0, %v1032
        %v1034 = vpop.f32.mrb[0].mxu0
        %v1035 = vadd.f32 0.0, %v1034
        %v1036 = vpop.f32.mrb[0].mxu0
        %v1037 = vadd.f32 0.0, %v1036
        %1038 = vmatprep.mubr.bf16.mxu0 0
        %1039 = vmatmul.mubr.bf16.gmra.mrb[0].mxu0 %v764
        %v1040 = vpop.f32.mrb[0].mxu0
        %v1041 = vadd.f32 0.0, %v1040
        %v1042 = vpop.f32.mrb[0].mxu0
        %v1043 = vadd.f32 0.0, %v1042
        %v1044 = vpop.f32.mrb[0].mxu0
        %v1045 = vadd.f32 0.0, %v1044
        %v1046 = vpop.f32.mrb[0].mxu0
        %v1047 = vadd.f32 0.0, %v1046
        %1048 = vmatprep.mubr.bf16.mxu0 0
        %1049 = vmatmul.mubr.bf16.gmra.mrb[0].mxu0 %v765
        %v1050 = vpop.f32.mrb[0].mxu0
        %v1051 = vadd.f32 0.0, %v1050
        %v1052 = vpop.f32.mrb[0].mxu0
        %v1053 = vadd.f32 0.0, %v1052
        %v1054 = vpop.f32.mrb[0].mxu0
        %v1055 = vadd.f32 0.0, %v1054
        %v1056 = vpop.f32.mrb[0].mxu0
        %v1057 = vadd.f32 0.0, %v1056
        %1058 = vmatprep.mubr.bf16.mxu0 0
        %1059 = vmatmul.mubr.bf16.gmra.mrb[0].mxu0 %v766
        %v1060 = vpop.f32.mrb[0].mxu0
        %v1061 = vadd.f32 0.0, %v1060
        %v1062 = vpop.f32.mrb[0].mxu0
        %v1063 = vadd.f32 0.0, %v1062
        %v1064 = vpop.f32.mrb[0].mxu0
        %v1065 = vadd.f32 0.0, %v1064
        %v1066 = vpop.f32.mrb[0].mxu0
        %v1067 = vadd.f32 0.0, %v1066
        %1068 = vmatprep.mubr.bf16.mxu0 0
        %1069 = vmatmul.mubr.bf16.gmra.mrb[0].mxu0 %v767
        %v1070 = vpop.f32.mrb[0].mxu0
        %v1071 = vadd.f32 0.0, %v1070
        %v1072 = vpop.f32.mrb[0].mxu0
        %v1073 = vadd.f32 0.0, %v1072
        %v1074 = vpop.f32.mrb[0].mxu0
        %v1075 = vadd.f32 0.0, %v1074
        %v1076 = vpop.f32.mrb[0].mxu0
        %v1077 = vadd.f32 0.0, %v1076
        %1078 = vmatprep.mubr.bf16.mxu0 0
        %1079 = vmatmul.mubr.bf16.gmra.mrb[0].mxu0 %v768
        %v1080 = vpop.f32.mrb[0].mxu0
        %v1081 = vadd.f32 0.0, %v1080
        %v1082 = vpop.f32.mrb[0].mxu0
        %v1083 = vadd.f32 0.0, %v1082
        %v1084 = vpop.f32.mrb[0].mxu0
        %v1085 = vadd.f32 0.0, %v1084
        %v1086 = vpop.f32.mrb[0].mxu0
        %v1087 = vadd.f32 0.0, %v1086
        %1088 = vmatprep.mubr.bf16.mxu0 0
        %1089 = vmatmul.mubr.bf16.gmra.mrb[0].mxu0 %v769
        %v1090 = vpop.f32.mrb[0].mxu0
        %v1091 = vadd.f32 0.0, %v1090
        %v1092 = vpop.f32.mrb[0].mxu0
        %v1093 = vadd.f32 0.0, %v1092
        %v1094 = vpop.f32.mrb[0].mxu0
        %v1095 = vadd.f32 0.0, %v1094
        %v1096 = vpop.f32.mrb[0].mxu0
        %v1097 = vadd.f32 0.0, %v1096
        %1098 = vmatprep.mubr.bf16.mxu0 0
        %1099 = vmatmul.mubr.bf16.gmra.mrb[0].mxu0 %v770
        %v1100 = vpop.f32.mrb[0].mxu0
        %v1101 = vadd.f32 0.0, %v1100
        %v1102 = vpop.f32.mrb[0].mxu0
        %v1103 = vadd.f32 0.0, %v1102
        %v1104 = vpop.f32.mrb[0].mxu0
        %v1105 = vadd.f32 0.0, %v1104
        %v1106 = vpop.f32.mrb[0].mxu0
        %v1107 = vadd.f32 0.0, %v1106
        %1108 = vmatprep.mubr.bf16.mxu0 0
        %1109 = vmatmul.mubr.bf16.gmra.mrb[0].mxu0 %v771
        %v1110 = vpop.f32.mrb[0].mxu0
        %v1111 = vadd.f32 0.0, %v1110
        %v1112 = vpop.f32.mrb[0].mxu0
        %v1113 = vadd.f32 0.0, %v1112
        %v1114 = vpop.f32.mrb[0].mxu0
        %v1115 = vadd.f32 0.0, %v1114
        %v1116 = vpop.f32.mrb[0].mxu0
        %v1117 = vadd.f32 0.0, %v1116
        %1118 = vmatprep.mubr.bf16.mxu0 0
        %1119 = vmatmul.mubr.bf16.gmra.mrb[0].mxu0 %v772
        %v1120 = vpop.f32.mrb[0].mxu0
        %v1121 = vadd.f32 0.0, %v1120
        %v1122 = vpop.f32.mrb[0].mxu0
        %v1123 = vadd.f32 0.0, %v1122
        %v1124 = vpop.f32.mrb[0].mxu0
        %v1125 = vadd.f32 0.0, %v1124
        %v1126 = vpop.f32.mrb[0].mxu0
        %v1127 = vadd.f32 0.0, %v1126
        %1128 = vmatprep.mubr.bf16.mxu0 0
        %1129 = vmatmul.mubr.bf16.gmra.mrb[0].mxu0 %v773
        %v1130 = vpop.f32.mrb[0].mxu0
        %v1131 = vadd.f32 0.0, %v1130
        %v1132 = vpop.f32.mrb[0].mxu0
        %v1133 = vadd.f32 0.0, %v1132
        %v1134 = vpop.f32.mrb[0].mxu0
        %v1135 = vadd.f32 0.0, %v1134
        %v1136 = vpop.f32.mrb[0].mxu0
        %v1137 = vadd.f32 0.0, %v1136
        %1138 = vmatprep.mubr.bf16.mxu0 0
        %1139 = vmatmul.mubr.bf16.gmra.mrb[0].mxu0 %v774
        %v1140 = vpop.f32.mrb[0].mxu0
        %v1141 = vadd.f32 0.0, %v1140
        %v1142 = vpop.f32.mrb[0].mxu0
        %v1143 = vadd.f32 0.0, %v1142
        %v1144 = vpop.f32.mrb[0].mxu0
        %v1145 = vadd.f32 0.0, %v1144
        %v1146 = vpop.f32.mrb[0].mxu0
        %v1147 = vadd.f32 0.0, %v1146
        %1148 = vmatprep.mubr.bf16.mxu0 0
        %1149 = vmatmul.mubr.bf16.gmra.mrb[0].mxu0 %v775
        %v1150 = vpop.f32.mrb[0].mxu0
        %v1151 = vadd.f32 0.0, %v1150
        %v1152 = vpop.f32.mrb[0].mxu0
        %v1153 = vadd.f32 0.0, %v1152
        %v1154 = vpop.f32.mrb[0].mxu0
        %v1155 = vadd.f32 0.0, %v1154
        %v1156 = vpop.f32.mrb[0].mxu0
        %v1157 = vadd.f32 0.0, %v1156
        %1158 = vmatprep.mubr.bf16.mxu0 0
        %1159 = vmatmul.mubr.bf16.gmra.mrb[0].mxu0 %v776
        %v1160 = vpop.f32.mrb[0].mxu0
        %v1161 = vadd.f32 0.0, %v1160
        %v1162 = vpop.f32.mrb[0].mxu0
        %v1163 = vadd.f32 0.0, %v1162
        %v1164 = vpop.f32.mrb[0].mxu0
        %v1165 = vadd.f32 0.0, %v1164
        %v1166 = vpop.f32.mrb[0].mxu0
        %v1167 = vadd.f32 0.0, %v1166
        %1168 = vmatprep.mubr.bf16.mxu0 0
        %1169 = vmatmul.mubr.bf16.gmra.mrb[0].mxu0 %v777
        %v1170 = vpop.f32.mrb[0].mxu0
        %v1171 = vadd.f32 0.0, %v1170
        %v1172 = vpop.f32.mrb[0].mxu0
        %v1173 = vadd.f32 0.0, %v1172
        %v1174 = vpop.f32.mrb[0].mxu0
        %v1175 = vadd.f32 0.0, %v1174
        %v1176 = vpop.f32.mrb[0].mxu0
        %v1177 = vadd.f32 0.0, %v1176
        %1178 = vmatprep.mubr.bf16.mxu0 0
        %1179 = vmatmul.mubr.bf16.gmra.mrb[0].mxu0 %v778
        %v1180 = vpop.f32.mrb[0].mxu0
        %v1181 = vadd.f32 0.0, %v1180
        %v1182 = vpop.f32.mrb[0].mxu0
        %v1183 = vadd.f32 0.0, %v1182
        %v1184 = vpop.f32.mrb[0].mxu0
        %v1185 = vadd.f32 0.0, %v1184
        %v1186 = vpop.f32.mrb[0].mxu0
        %v1187 = vadd.f32 0.0, %v1186
        %1188 = vmatprep.mubr.bf16.mxu0 0
        %1189 = vmatmul.mubr.bf16.gmra.mrb[0].mxu0 %v779
        %v1190 = vpop.f32.mrb[0].mxu0
        %v1191 = vadd.f32 0.0, %v1190
        %v1192 = vpop.f32.mrb[0].mxu0
        %v1193 = vadd.f32 0.0, %v1192
        %v1194 = vpop.f32.mrb[0].mxu0
        %v1195 = vadd.f32 0.0, %v1194
        %v1196 = vpop.f32.mrb[0].mxu0
        %v1197 = vadd.f32 0.0, %v1196
        %1198 = vmatprep.mubr.bf16.mxu0 0
        %1199 = vmatmul.mubr.bf16.gmra.mrb[0].mxu0 %v780
        %v1200 = vpop.f32.mrb[0].mxu0
        %v1201 = vadd.f32 0.0, %v1200
        %v1202 = vpop.f32.mrb[0].mxu0
        %v1203 = vadd.f32 0.0, %v1202
        %v1204 = vpop.f32.mrb[0].mxu0
        %v1205 = vadd.f32 0.0, %v1204
        %v1206 = vpop.f32.mrb[0].mxu0
        %v1207 = vadd.f32 0.0, %v1206
        %1208 = vmatprep.mubr.bf16.mxu0 0
        %1209 = vmatmul.mubr.bf16.gmra.mrb[0].mxu0 %v781
        %v1210 = vpop.f32.mrb[0].mxu0
        %v1211 = vadd.f32 0.0, %v1210
        %v1212 = vpop.f32.mrb[0].mxu0
        %v1213 = vadd.f32 0.0, %v1212
        %v1214 = vpop.f32.mrb[0].mxu0
        %v1215 = vadd.f32 0.0, %v1214
        %v1216 = vpop.f32.mrb[0].mxu0
        %v1217 = vadd.f32 0.0, %v1216
        %1218 = vmatprep.mubr.bf16.mxu0 0
        %1219 = vmatmul.mubr.bf16.gmra.mrb[0].mxu0 %v782
        %v1220 = vpop.f32.mrb[0].mxu0
        %v1221 = vadd.f32 0.0, %v1220
        %v1222 = vpop.f32.mrb[0].mxu0
        %v1223 = vadd.f32 0.0, %v1222
        %v1224 = vpop.f32.mrb[0].mxu0
        %v1225 = vadd.f32 0.0, %v1224
        %v1226 = vpop.f32.mrb[0].mxu0
        %v1227 = vadd.f32 0.0, %v1226
        %1228 = vmatprep.mubr.bf16.mxu0 0
        %1229 = vmatmul.mubr.bf16.gmra.mrb[0].mxu0 %v783
        %v1230 = vpop.f32.mrb[0].mxu0
        %v1231 = vadd.f32 0.0, %v1230
        %v1232 = vpop.f32.mrb[0].mxu0
        %v1233 = vadd.f32 0.0, %v1232
        %v1234 = vpop.f32.mrb[0].mxu0
        %v1235 = vadd.f32 0.0, %v1234
        %v1236 = vpop.f32.mrb[0].mxu0
        %v1237 = vadd.f32 0.0, %v1236
        %1238 = vmatprep.mubr.bf16.mxu0 0
        %1239 = vmatmul.mubr.bf16.gmra.mrb[0].mxu0 %v784
        %v1240 = vpop.f32.mrb[0].mxu0
        %v1241 = vadd.f32 0.0, %v1240
        %v1242 = vpop.f32.mrb[0].mxu0
        %v1243 = vadd.f32 0.0, %v1242
        %v1244 = vpop.f32.mrb[0].mxu0
        %v1245 = vadd.f32 0.0, %v1244
        %v1246 = vpop.f32.mrb[0].mxu0
        %v1247 = vadd.f32 0.0, %v1246
        %1248 = vmatprep.mubr.bf16.mxu0 0
        %1249 = vmatmul.mubr.bf16.gmra.mrb[0].mxu0 %v785
        %v1250 = vpop.f32.mrb[0].mxu0
        %v1251 = vadd.f32 0.0, %v1250
        %v1252 = vpop.f32.mrb[0].mxu0
        %v1253 = vadd.f32 0.0, %v1252
        %v1254 = vpop.f32.mrb[0].mxu0
        %v1255 = vadd.f32 0.0, %v1254
        %v1256 = vpop.f32.mrb[0].mxu0
        %v1257 = vadd.f32 0.0, %v1256
        %1258 = vmatprep.mubr.bf16.mxu0 0
        %1259 = vmatmul.mubr.bf16.gmra.mrb[0].mxu0 %v786
        %v1260 = vpop.f32.mrb[0].mxu0
        %v1261 = vadd.f32 0.0, %v1260
        %v1262 = vpop.f32.mrb[0].mxu0
        %v1263 = vadd.f32 0.0, %v1262
        %v1264 = vpop.f32.mrb[0].mxu0
        %v1265 = vadd.f32 0.0, %v1264
        %v1266 = vpop.f32.mrb[0].mxu0
        %v1267 = vadd.f32 0.0, %v1266
        %1268 = vmatprep.mubr.bf16.mxu0 0
        %1269 = vmatmul.mubr.bf16.gmra.mrb[0].mxu0 %v787
        %v1270 = vpop.f32.mrb[0].mxu0
        %v1271 = vadd.f32 0.0, %v1270
        %v1272 = vpop.f32.mrb[0].mxu0
        %v1273 = vadd.f32 0.0, %v1272
        %v1274 = vpop.f32.mrb[0].mxu0
        %v1275 = vadd.f32 0.0, %v1274
        %v1276 = vpop.f32.mrb[0].mxu0
        %v1277 = vadd.f32 0.0, %v1276
        %1278 = vmatprep.mubr.bf16.mxu0 0
        %1279 = vmatmul.mubr.bf16.gmra.mrb[0].mxu0 %v788
        %v1280 = vpop.f32.mrb[0].mxu0
        %v1281 = vadd.f32 0.0, %v1280
        %v1282 = vpop.f32.mrb[0].mxu0
        %v1283 = vadd.f32 0.0, %v1282
        %v1284 = vpop.f32.mrb[0].mxu0
        %v1285 = vadd.f32 0.0, %v1284
        %v1286 = vpop.f32.mrb[0].mxu0
        %v1287 = vadd.f32 0.0, %v1286
        %1288 = vmatprep.mubr.bf16.mxu0 0
        %1289 = vmatmul.mubr.bf16.gmra.mrb[0].mxu0 %v789
        %v1290 = vpop.f32.mrb[0].mxu0
        %v1291 = vadd.f32 0.0, %v1290
        %v1292 = vpop.f32.mrb[0].mxu0
        %v1293 = vadd.f32 0.0, %v1292
        %v1294 = vpop.f32.mrb[0].mxu0
        %v1295 = vadd.f32 0.0, %v1294
        %v1296 = vpop.f32.mrb[0].mxu0
        %v1297 = vadd.f32 0.0, %v1296
        %1298 = vmatprep.mubr.bf16.mxu0 0
        %1299 = vmatmul.mubr.bf16.gmra.mrb[0].mxu0 %v790
        %v1300 = vpop.f32.mrb[0].mxu0
        %v1301 = vadd.f32 0.0, %v1300
        %v1302 = vpop.f32.mrb[0].mxu0
        %v1303 = vadd.f32 0.0, %v1302
        %v1304 = vpop.f32.mrb[0].mxu0
        %v1305 = vadd.f32 0.0, %v1304
        %v1306 = vpop.f32.mrb[0].mxu0
        %v1307 = vadd.f32 0.0, %v1306
        %1308 = vmatprep.mubr.bf16.mxu0 0
        %1309 = vmatmul.mubr.bf16.gmra.mrb[0].mxu0 %v791
        %v1310 = vpop.f32.mrb[0].mxu0
        %v1311 = vadd.f32 0.0, %v1310
        %v1312 = vpop.f32.mrb[0].mxu0
        %v1313 = vadd.f32 0.0, %v1312
        %v1314 = vpop.f32.mrb[0].mxu0
        %v1315 = vadd.f32 0.0, %v1314
        %v1316 = vpop.f32.mrb[0].mxu0
        %v1317 = vadd.f32 0.0, %v1316
        %1318 = vmatprep.mubr.bf16.mxu0 0
        %1319 = vmatmul.mubr.bf16.gmra.mrb[0].mxu0 %v792
        %v1320 = vpop.f32.mrb[0].mxu0
        %v1321 = vadd.f32 0.0, %v1320
        %v1322 = vpop.f32.mrb[0].mxu0
        %v1323 = vadd.f32 0.0, %v1322
        %v1324 = vpop.f32.mrb[0].mxu0
        %v1325 = vadd.f32 0.0, %v1324
        %v1326 = vpop.f32.mrb[0].mxu0
        %v1327 = vadd.f32 0.0, %v1326
        %1328 = vmatprep.mubr.bf16.mxu0 0
        %1329 = vmatmul.mubr.bf16.gmra.mrb[0].mxu0 %v793
        %v1330 = vpop.f32.mrb[0].mxu0
        %v1331 = vadd.f32 0.0, %v1330
        %v1332 = vpop.f32.mrb[0].mxu0
        %v1333 = vadd.f32 0.0, %v1332
        %v1334 = vpop.f32.mrb[0].mxu0
        %v1335 = vadd.f32 0.0, %v1334
        %v1336 = vpop.f32.mrb[0].mxu0
        %v1337 = vadd.f32 0.0, %v1336
        %1338 = vdwg.mxu0
        %1339 = vmatprep.subr.bf16.mxu0 %v925
        %1340 = vmatpush1.bf16.msra.mxu0 %v924
        %1341 = vmatprep.subr.bf16.mxu0 %v929
        %1342 = vmatpush1.bf16.msra.mxu0 %v928
        %1343 = vmatprep.subr.bf16.mxu0 %v933
        %1344 = vmatpush1.bf16.msra.mxu0 %v932
        %1345 = vmatprep.subr.bf16.mxu0 %v937
        %1346 = vmatpush1.bf16.msra.mxu0 %v936
        %1347 = vmatprep.subr.bf16.mxu0 %v941
        %1348 = vmatpush1.bf16.msra.mxu0 %v940
        %1349 = vmatprep.subr.bf16.mxu0 %v945
        %1350 = vmatpush1.bf16.msra.mxu0 %v944
        %1351 = vmatprep.subr.bf16.mxu0 %v949
        %1352 = vmatpush1.bf16.msra.mxu0 %v948
        %1353 = vmatprep.subr.bf16.mxu0 %v953
        %1354 = vmatpush1.bf16.msra.mxu0 %v952
        %1355 = vmatprep.subr.bf16.mxu0 0
        %1356 = vmatpush1.bf16.msra.mxu0 0
        %1357 = vmatprep.subr.bf16.mxu0 0
        %1358 = vmatpush1.bf16.msra.mxu0 0
        %1359 = vmatprep.subr.bf16.mxu0 0
        %1360 = vmatpush1.bf16.msra.mxu0 0
        %1361 = vmatprep.subr.bf16.mxu0 0
        %1362 = vmatpush1.bf16.msra.mxu0 0
        %1363 = vmatprep.subr.bf16.mxu0 0
        %1364 = vmatpush1.bf16.msra.mxu0 0
        %1365 = vmatprep.subr.bf16.mxu0 0
        %1366 = vmatpush1.bf16.msra.mxu0 0
        %1367 = vmatprep.subr.bf16.mxu0 0
        %1368 = vmatpush1.bf16.msra.mxu0 0
        %1369 = vmatprep.subr.bf16.mxu0 0
        %1370 = vmatpush1.bf16.msra.mxu0 0
        %1371 = vmatprep.mubr.bf16.mxu0 0
        %1372 = vmatmul.mubr.bf16.gmra.mrb[0].mxu0 %v762
        %v1373 = vpop.f32.mrb[0].mxu0
        %v1374 = vadd.f32 0.0, %v1373
        %v1375 = vpop.f32.mrb[0].mxu0
        %v1376 = vadd.f32 0.0, %v1375
        %v1377 = vpop.f32.mrb[0].mxu0
        %v1378 = vadd.f32 0.0, %v1377
        %v1379 = vpop.f32.mrb[0].mxu0
        %v1380 = vadd.f32 0.0, %v1379
        %1381 = vmatprep.mubr.bf16.mxu0 0
        %1382 = vmatmul.mubr.bf16.gmra.mrb[0].mxu0 %v763
        %v1383 = vpop.f32.mrb[0].mxu0
        %v1384 = vadd.f32 0.0, %v1383
        %v1385 = vpop.f32.mrb[0].mxu0
        %v1386 = vadd.f32 0.0, %v1385
        %v1387 = vpop.f32.mrb[0].mxu0
        %v1388 = vadd.f32 0.0, %v1387
        %v1389 = vpop.f32.mrb[0].mxu0
        %v1390 = vadd.f32 0.0, %v1389
        %1391 = vmatprep.mubr.bf16.mxu0 0
        %1392 = vmatmul.mubr.bf16.gmra.mrb[0].mxu0 %v764
        %v1393 = vpop.f32.mrb[0].mxu0
        %v1394 = vadd.f32 0.0, %v1393
        %v1395 = vpop.f32.mrb[0].mxu0
        %v1396 = vadd.f32 0.0, %v1395
        %v1397 = vpop.f32.mrb[0].mxu0
        %v1398 = vadd.f32 0.0, %v1397
        %v1399 = vpop.f32.mrb[0].mxu0
        %v1400 = vadd.f32 0.0, %v1399
        %1401 = vmatprep.mubr.bf16.mxu0 0
        %1402 = vmatmul.mubr.bf16.gmra.mrb[0].mxu0 %v765
        %v1403 = vpop.f32.mrb[0].mxu0
        %v1404 = vadd.f32 0.0, %v1403
        %v1405 = vpop.f32.mrb[0].mxu0
        %v1406 = vadd.f32 0.0, %v1405
        %v1407 = vpop.f32.mrb[0].mxu0
        %v1408 = vadd.f32 0.0, %v1407
        %v1409 = vpop.f32.mrb[0].mxu0
        %v1410 = vadd.f32 0.0, %v1409
        %1411 = vmatprep.mubr.bf16.mxu0 0
        %1412 = vmatmul.mubr.bf16.gmra.mrb[0].mxu0 %v766
        %v1413 = vpop.f32.mrb[0].mxu0
        %v1414 = vadd.f32 0.0, %v1413
        %v1415 = vpop.f32.mrb[0].mxu0
        %v1416 = vadd.f32 0.0, %v1415
        %v1417 = vpop.f32.mrb[0].mxu0
        %v1418 = vadd.f32 0.0, %v1417
        %v1419 = vpop.f32.mrb[0].mxu0
        %v1420 = vadd.f32 0.0, %v1419
        %1421 = vmatprep.mubr.bf16.mxu0 0
        %1422 = vmatmul.mubr.bf16.gmra.mrb[0].mxu0 %v767
        %v1423 = vpop.f32.mrb[0].mxu0
        %v1424 = vadd.f32 0.0, %v1423
        %v1425 = vpop.f32.mrb[0].mxu0
        %v1426 = vadd.f32 0.0, %v1425
        %v1427 = vpop.f32.mrb[0].mxu0
        %v1428 = vadd.f32 0.0, %v1427
        %v1429 = vpop.f32.mrb[0].mxu0
        %v1430 = vadd.f32 0.0, %v1429
        %1431 = vmatprep.mubr.bf16.mxu0 0
        %1432 = vmatmul.mubr.bf16.gmra.mrb[0].mxu0 %v768
        %v1433 = vpop.f32.mrb[0].mxu0
        %v1434 = vadd.f32 0.0, %v1433
        %v1435 = vpop.f32.mrb[0].mxu0
        %v1436 = vadd.f32 0.0, %v1435
        %v1437 = vpop.f32.mrb[0].mxu0
        %v1438 = vadd.f32 0.0, %v1437
        %v1439 = vpop.f32.mrb[0].mxu0
        %v1440 = vadd.f32 0.0, %v1439
        %1441 = vmatprep.mubr.bf16.mxu0 0
        %1442 = vmatmul.mubr.bf16.gmra.mrb[0].mxu0 %v769
        %v1443 = vpop.f32.mrb[0].mxu0
        %v1444 = vadd.f32 0.0, %v1443
        %v1445 = vpop.f32.mrb[0].mxu0
        %v1446 = vadd.f32 0.0, %v1445
        %v1447 = vpop.f32.mrb[0].mxu0
        %v1448 = vadd.f32 0.0, %v1447
        %v1449 = vpop.f32.mrb[0].mxu0
        %v1450 = vadd.f32 0.0, %v1449
        %1451 = vmatprep.mubr.bf16.mxu0 0
        %1452 = vmatmul.mubr.bf16.gmra.mrb[0].mxu0 %v770
        %v1453 = vpop.f32.mrb[0].mxu0
        %v1454 = vadd.f32 0.0, %v1453
        %v1455 = vpop.f32.mrb[0].mxu0
        %v1456 = vadd.f32 0.0, %v1455
        %v1457 = vpop.f32.mrb[0].mxu0
        %v1458 = vadd.f32 0.0, %v1457
        %v1459 = vpop.f32.mrb[0].mxu0
        %v1460 = vadd.f32 0.0, %v1459
        %1461 = vmatprep.mubr.bf16.mxu0 0
        %1462 = vmatmul.mubr.bf16.gmra.mrb[0].mxu0 %v771
        %v1463 = vpop.f32.mrb[0].mxu0
        %v1464 = vadd.f32 0.0, %v1463
        %v1465 = vpop.f32.mrb[0].mxu0
        %v1466 = vadd.f32 0.0, %v1465
        %v1467 = vpop.f32.mrb[0].mxu0
        %v1468 = vadd.f32 0.0, %v1467
        %v1469 = vpop.f32.mrb[0].mxu0
        %v1470 = vadd.f32 0.0, %v1469
        %1471 = vmatprep.mubr.bf16.mxu0 0
        %1472 = vmatmul.mubr.bf16.gmra.mrb[0].mxu0 %v772
        %v1473 = vpop.f32.mrb[0].mxu0
        %v1474 = vadd.f32 0.0, %v1473
        %v1475 = vpop.f32.mrb[0].mxu0
        %v1476 = vadd.f32 0.0, %v1475
        %v1477 = vpop.f32.mrb[0].mxu0
        %v1478 = vadd.f32 0.0, %v1477
        %v1479 = vpop.f32.mrb[0].mxu0
        %v1480 = vadd.f32 0.0, %v1479
        %1481 = vmatprep.mubr.bf16.mxu0 0
        %1482 = vmatmul.mubr.bf16.gmra.mrb[0].mxu0 %v773
        %v1483 = vpop.f32.mrb[0].mxu0
        %v1484 = vadd.f32 0.0, %v1483
        %v1485 = vpop.f32.mrb[0].mxu0
        %v1486 = vadd.f32 0.0, %v1485
        %v1487 = vpop.f32.mrb[0].mxu0
        %v1488 = vadd.f32 0.0, %v1487
        %v1489 = vpop.f32.mrb[0].mxu0
        %v1490 = vadd.f32 0.0, %v1489
        %1491 = vmatprep.mubr.bf16.mxu0 0
        %1492 = vmatmul.mubr.bf16.gmra.mrb[0].mxu0 %v774
        %v1493 = vpop.f32.mrb[0].mxu0
        %v1494 = vadd.f32 0.0, %v1493
        %v1495 = vpop.f32.mrb[0].mxu0
        %v1496 = vadd.f32 0.0, %v1495
        %v1497 = vpop.f32.mrb[0].mxu0
        %v1498 = vadd.f32 0.0, %v1497
        %v1499 = vpop.f32.mrb[0].mxu0
        %v1500 = vadd.f32 0.0, %v1499
        %1501 = vmatprep.mubr.bf16.mxu0 0
        %1502 = vmatmul.mubr.bf16.gmra.mrb[0].mxu0 %v775
        %v1503 = vpop.f32.mrb[0].mxu0
        %v1504 = vadd.f32 0.0, %v1503
        %v1505 = vpop.f32.mrb[0].mxu0
        %v1506 = vadd.f32 0.0, %v1505
        %v1507 = vpop.f32.mrb[0].mxu0
        %v1508 = vadd.f32 0.0, %v1507
        %v1509 = vpop.f32.mrb[0].mxu0
        %v1510 = vadd.f32 0.0, %v1509
        %1511 = vmatprep.mubr.bf16.mxu0 0
        %1512 = vmatmul.mubr.bf16.gmra.mrb[0].mxu0 %v776
        %v1513 = vpop.f32.mrb[0].mxu0
        %v1514 = vadd.f32 0.0, %v1513
        %v1515 = vpop.f32.mrb[0].mxu0
        %v1516 = vadd.f32 0.0, %v1515
        %v1517 = vpop.f32.mrb[0].mxu0
        %v1518 = vadd.f32 0.0, %v1517
        %v1519 = vpop.f32.mrb[0].mxu0
        %v1520 = vadd.f32 0.0, %v1519
        %1521 = vmatprep.mubr.bf16.mxu0 0
        %1522 = vmatmul.mubr.bf16.gmra.mrb[0].mxu0 %v777
        %v1523 = vpop.f32.mrb[0].mxu0
        %v1524 = vadd.f32 0.0, %v1523
        %v1525 = vpop.f32.mrb[0].mxu0
        %v1526 = vadd.f32 0.0, %v1525
        %v1527 = vpop.f32.mrb[0].mxu0
        %v1528 = vadd.f32 0.0, %v1527
        %v1529 = vpop.f32.mrb[0].mxu0
        %v1530 = vadd.f32 0.0, %v1529
        %1531 = vmatprep.mubr.bf16.mxu0 0
        %1532 = vmatmul.mubr.bf16.gmra.mrb[0].mxu0 %v778
        %v1533 = vpop.f32.mrb[0].mxu0
        %v1534 = vadd.f32 0.0, %v1533
        %v1535 = vpop.f32.mrb[0].mxu0
        %v1536 = vadd.f32 0.0, %v1535
        %v1537 = vpop.f32.mrb[0].mxu0
        %v1538 = vadd.f32 0.0, %v1537
        %v1539 = vpop.f32.mrb[0].mxu0
        %v1540 = vadd.f32 0.0, %v1539
        %1541 = vmatprep.mubr.bf16.mxu0 0
        %1542 = vmatmul.mubr.bf16.gmra.mrb[0].mxu0 %v779
        %v1543 = vpop.f32.mrb[0].mxu0
        %v1544 = vadd.f32 0.0, %v1543
        %v1545 = vpop.f32.mrb[0].mxu0
        %v1546 = vadd.f32 0.0, %v1545
        %v1547 = vpop.f32.mrb[0].mxu0
        %v1548 = vadd.f32 0.0, %v1547
        %v1549 = vpop.f32.mrb[0].mxu0
        %v1550 = vadd.f32 0.0, %v1549
        %1551 = vmatprep.mubr.bf16.mxu0 0
        %1552 = vmatmul.mubr.bf16.gmra.mrb[0].mxu0 %v780
        %v1553 = vpop.f32.mrb[0].mxu0
        %v1554 = vadd.f32 0.0, %v1553
        %v1555 = vpop.f32.mrb[0].mxu0
        %v1556 = vadd.f32 0.0, %v1555
        %v1557 = vpop.f32.mrb[0].mxu0
        %v1558 = vadd.f32 0.0, %v1557
        %v1559 = vpop.f32.mrb[0].mxu0
        %v1560 = vadd.f32 0.0, %v1559
        %1561 = vmatprep.mubr.bf16.mxu0 0
        %1562 = vmatmul.mubr.bf16.gmra.mrb[0].mxu0 %v781
        %v1563 = vpop.f32.mrb[0].mxu0
        %v1564 = vadd.f32 0.0, %v1563
        %v1565 = vpop.f32.mrb[0].mxu0
        %v1566 = vadd.f32 0.0, %v1565
        %v1567 = vpop.f32.mrb[0].mxu0
        %v1568 = vadd.f32 0.0, %v1567
        %v1569 = vpop.f32.mrb[0].mxu0
        %v1570 = vadd.f32 0.0, %v1569
        %1571 = vmatprep.mubr.bf16.mxu0 0
        %1572 = vmatmul.mubr.bf16.gmra.mrb[0].mxu0 %v782
        %v1573 = vpop.f32.mrb[0].mxu0
        %v1574 = vadd.f32 0.0, %v1573
        %v1575 = vpop.f32.mrb[0].mxu0
        %v1576 = vadd.f32 0.0, %v1575
        %v1577 = vpop.f32.mrb[0].mxu0
        %v1578 = vadd.f32 0.0, %v1577
        %v1579 = vpop.f32.mrb[0].mxu0
        %v1580 = vadd.f32 0.0, %v1579
        %1581 = vmatprep.mubr.bf16.mxu0 0
        %1582 = vmatmul.mubr.bf16.gmra.mrb[0].mxu0 %v783
        %v1583 = vpop.f32.mrb[0].mxu0
        %v1584 = vadd.f32 0.0, %v1583
        %v1585 = vpop.f32.mrb[0].mxu0
        %v1586 = vadd.f32 0.0, %v1585
        %v1587 = vpop.f32.mrb[0].mxu0
        %v1588 = vadd.f32 0.0, %v1587
        %v1589 = vpop.f32.mrb[0].mxu0
        %v1590 = vadd.f32 0.0, %v1589
        %1591 = vmatprep.mubr.bf16.mxu0 0
        %1592 = vmatmul.mubr.bf16.gmra.mrb[0].mxu0 %v784
        %v1593 = vpop.f32.mrb[0].mxu0
        %v1594 = vadd.f32 0.0, %v1593
        %v1595 = vpop.f32.mrb[0].mxu0
        %v1596 = vadd.f32 0.0, %v1595
        %v1597 = vpop.f32.mrb[0].mxu0
        %v1598 = vadd.f32 0.0, %v1597
        %v1599 = vpop.f32.mrb[0].mxu0
        %v1600 = vadd.f32 0.0, %v1599
        %1601 = vmatprep.mubr.bf16.mxu0 0
        %1602 = vmatmul.mubr.bf16.gmra.mrb[0].mxu0 %v785
        %v1603 = vpop.f32.mrb[0].mxu0
        %v1604 = vadd.f32 0.0, %v1603
        %v1605 = vpop.f32.mrb[0].mxu0
        %v1606 = vadd.f32 0.0, %v1605
        %v1607 = vpop.f32.mrb[0].mxu0
        %v1608 = vadd.f32 0.0, %v1607
        %v1609 = vpop.f32.mrb[0].mxu0
        %v1610 = vadd.f32 0.0, %v1609
        %1611 = vmatprep.mubr.bf16.mxu0 0
        %1612 = vmatmul.mubr.bf16.gmra.mrb[0].mxu0 %v786
        %v1613 = vpop.f32.mrb[0].mxu0
        %v1614 = vadd.f32 0.0, %v1613
        %v1615 = vpop.f32.mrb[0].mxu0
        %v1616 = vadd.f32 0.0, %v1615
        %v1617 = vpop.f32.mrb[0].mxu0
        %v1618 = vadd.f32 0.0, %v1617
        %v1619 = vpop.f32.mrb[0].mxu0
        %v1620 = vadd.f32 0.0, %v1619
        %1621 = vmatprep.mubr.bf16.mxu0 0
        %1622 = vmatmul.mubr.bf16.gmra.mrb[0].mxu0 %v787
        %v1623 = vpop.f32.mrb[0].mxu0
        %v1624 = vadd.f32 0.0, %v1623
        %v1625 = vpop.f32.mrb[0].mxu0
        %v1626 = vadd.f32 0.0, %v1625
        %v1627 = vpop.f32.mrb[0].mxu0
        %v1628 = vadd.f32 0.0, %v1627
        %v1629 = vpop.f32.mrb[0].mxu0
        %v1630 = vadd.f32 0.0, %v1629
        %1631 = vmatprep.mubr.bf16.mxu0 0
        %1632 = vmatmul.mubr.bf16.gmra.mrb[0].mxu0 %v788
        %v1633 = vpop.f32.mrb[0].mxu0
        %v1634 = vadd.f32 0.0, %v1633
        %v1635 = vpop.f32.mrb[0].mxu0
        %v1636 = vadd.f32 0.0, %v1635
        %v1637 = vpop.f32.mrb[0].mxu0
        %v1638 = vadd.f32 0.0, %v1637
        %v1639 = vpop.f32.mrb[0].mxu0
        %v1640 = vadd.f32 0.0, %v1639
        %1641 = vmatprep.mubr.bf16.mxu0 0
        %1642 = vmatmul.mubr.bf16.gmra.mrb[0].mxu0 %v789
        %v1643 = vpop.f32.mrb[0].mxu0
        %v1644 = vadd.f32 0.0, %v1643
        %v1645 = vpop.f32.mrb[0].mxu0
        %v1646 = vadd.f32 0.0, %v1645
        %v1647 = vpop.f32.mrb[0].mxu0
        %v1648 = vadd.f32 0.0, %v1647
        %v1649 = vpop.f32.mrb[0].mxu0
        %v1650 = vadd.f32 0.0, %v1649
        %1651 = vmatprep.mubr.bf16.mxu0 0
        %1652 = vmatmul.mubr.bf16.gmra.mrb[0].mxu0 %v790
        %v1653 = vpop.f32.mrb[0].mxu0
        %v1654 = vadd.f32 0.0, %v1653
        %v1655 = vpop.f32.mrb[0].mxu0
        %v1656 = vadd.f32 0.0, %v1655
        %v1657 = vpop.f32.mrb[0].mxu0
        %v1658 = vadd.f32 0.0, %v1657
        %v1659 = vpop.f32.mrb[0].mxu0
        %v1660 = vadd.f32 0.0, %v1659
        %1661 = vmatprep.mubr.bf16.mxu0 0
        %1662 = vmatmul.mubr.bf16.gmra.mrb[0].mxu0 %v791
        %v1663 = vpop.f32.mrb[0].mxu0
        %v1664 = vadd.f32 0.0, %v1663
        %v1665 = vpop.f32.mrb[0].mxu0
        %v1666 = vadd.f32 0.0, %v1665
        %v1667 = vpop.f32.mrb[0].mxu0
        %v1668 = vadd.f32 0.0, %v1667
        %v1669 = vpop.f32.mrb[0].mxu0
        %v1670 = vadd.f32 0.0, %v1669
        %1671 = vmatprep.mubr.bf16.mxu0 0
        %1672 = vmatmul.mubr.bf16.gmra.mrb[0].mxu0 %v792
        %v1673 = vpop.f32.mrb[0].mxu0
        %v1674 = vadd.f32 0.0, %v1673
        %v1675 = vpop.f32.mrb[0].mxu0
        %v1676 = vadd.f32 0.0, %v1675
        %v1677 = vpop.f32.mrb[0].mxu0
        %v1678 = vadd.f32 0.0, %v1677
        %v1679 = vpop.f32.mrb[0].mxu0
        %v1680 = vadd.f32 0.0, %v1679
        %1681 = vmatprep.mubr.bf16.mxu0 0
        %1682 = vmatmul.mubr.bf16.gmra.mrb[0].mxu0 %v793
        %v1683 = vpop.f32.mrb[0].mxu0
        %v1684 = vadd.f32 0.0, %v1683
        %v1685 = vpop.f32.mrb[0].mxu0
        %v1686 = vadd.f32 0.0, %v1685
        %v1687 = vpop.f32.mrb[0].mxu0
        %v1688 = vadd.f32 0.0, %v1687
        %v1689 = vpop.f32.mrb[0].mxu0
        %v1690 = vadd.f32 0.0, %v1689
        %1691 = vdwg.mxu0
        %v1756 = vunpack.c.l.b16 %v442
        %v1757 = vunpack.c.l.b16 %v443
        %v1758 = vunpack.c.l.b16 %v444
        %v1759 = vunpack.c.l.b16 %v445
        %v1760 = vunpack.c.l.b16 %v446
        %v1761 = vunpack.c.l.b16 %v447
        %v1762 = vunpack.c.l.b16 %v448
        %v1763 = vunpack.c.l.b16 %v449
        %v1764 = vunpack.c.l.b16 %v450
        %v1765 = vunpack.c.l.b16 %v451
        %v1766 = vunpack.c.l.b16 %v452
        %v1767 = vunpack.c.l.b16 %v453
        %v1768 = vunpack.c.l.b16 %v454
        %v1769 = vunpack.c.l.b16 %v455
        %v1770 = vunpack.c.l.b16 %v456
        %v1771 = vunpack.c.l.b16 %v457
        %v1772 = vunpack.c.l.b16 %v458
        %v1773 = vunpack.c.l.b16 %v459
        %v1774 = vunpack.c.l.b16 %v460
        %v1775 = vunpack.c.l.b16 %v461
        %v1776 = vunpack.c.l.b16 %v462
        %v1777 = vunpack.c.l.b16 %v463
        %v1778 = vunpack.c.l.b16 %v464
        %v1779 = vunpack.c.l.b16 %v465
        %v1780 = vunpack.c.l.b16 %v466
        %v1781 = vunpack.c.l.b16 %v467
        %v1782 = vunpack.c.l.b16 %v468
        %v1783 = vunpack.c.l.b16 %v469
        %v1784 = vunpack.c.l.b16 %v470
        %v1785 = vunpack.c.l.b16 %v471
        %v1786 = vunpack.c.l.b16 %v472
        %v1787 = vunpack.c.l.b16 %v473
        %v1788 = vunpack.c.l.b16 %v474
        %v1789 = vunpack.c.l.b16 %v475
        %v1790 = vunpack.c.l.b16 %v476
        %v1791 = vunpack.c.l.b16 %v477
        %v1792 = vunpack.c.l.b16 %v478
        %v1793 = vunpack.c.l.b16 %v479
        %v1794 = vunpack.c.l.b16 %v480
        %v1795 = vunpack.c.l.b16 %v481
        %v1796 = vunpack.c.l.b16 %v482
        %v1797 = vunpack.c.l.b16 %v483
        %v1798 = vunpack.c.l.b16 %v484
        %v1799 = vunpack.c.l.b16 %v485
        %v1800 = vunpack.c.l.b16 %v486
        %v1801 = vunpack.c.l.b16 %v487
        %v1802 = vunpack.c.l.b16 %v488
        %v1803 = vunpack.c.l.b16 %v489
        %v1804 = vunpack.c.l.b16 %v490
        %v1805 = vunpack.c.l.b16 %v491
        %v1806 = vunpack.c.l.b16 %v492
        %v1807 = vunpack.c.l.b16 %v493
        %v1808 = vunpack.c.l.b16 %v494
        %v1809 = vunpack.c.l.b16 %v495
        %v1810 = vunpack.c.l.b16 %v496
        %v1811 = vunpack.c.l.b16 %v497
        %v1812 = vunpack.c.l.b16 %v498
        %v1813 = vunpack.c.l.b16 %v499
        %v1814 = vunpack.c.l.b16 %v500
        %v1815 = vunpack.c.l.b16 %v501
        %v1816 = vunpack.c.l.b16 %v502
        %v1817 = vunpack.c.l.b16 %v503
        %v1818 = vunpack.c.l.b16 %v504
        %v1819 = vunpack.c.l.b16 %v505
        %v1820 = vpack.c.b16 %v1757, %v1756
        %v1821 = vpack.c.b16 %v1759, %v1758
        %v1822 = vpack.c.b16 %v1761, %v1760
        %v1823 = vpack.c.b16 %v1763, %v1762
        %v1824 = vpack.c.b16 %v1765, %v1764
        %v1825 = vpack.c.b16 %v1767, %v1766
        %v1826 = vpack.c.b16 %v1769, %v1768
        %v1827 = vpack.c.b16 %v1771, %v1770
        %v1828 = vpack.c.b16 %v1773, %v1772
        %v1829 = vpack.c.b16 %v1775, %v1774
        %v1830 = vpack.c.b16 %v1777, %v1776
        %v1831 = vpack.c.b16 %v1779, %v1778
        %v1832 = vpack.c.b16 %v1781, %v1780
        %v1833 = vpack.c.b16 %v1783, %v1782
        %v1834 = vpack.c.b16 %v1785, %v1784
        %v1835 = vpack.c.b16 %v1787, %v1786
        %v1836 = vpack.c.b16 %v1789, %v1788
        %v1837 = vpack.c.b16 %v1791, %v1790
        %v1838 = vpack.c.b16 %v1793, %v1792
        %v1839 = vpack.c.b16 %v1795, %v1794
        %v1840 = vpack.c.b16 %v1797, %v1796
        %v1841 = vpack.c.b16 %v1799, %v1798
        %v1842 = vpack.c.b16 %v1801, %v1800
        %v1843 = vpack.c.b16 %v1803, %v1802
        %v1844 = vpack.c.b16 %v1805, %v1804
        %v1845 = vpack.c.b16 %v1807, %v1806
        %v1846 = vpack.c.b16 %v1809, %v1808
        %v1847 = vpack.c.b16 %v1811, %v1810
        %v1848 = vpack.c.b16 %v1813, %v1812
        %v1849 = vpack.c.b16 %v1815, %v1814
        %v1850 = vpack.c.b16 %v1817, %v1816
        %v1851 = vpack.c.b16 %v1819, %v1818
        %v1916 = vunpack.c.l.b16 %v506
        %v1917 = vunpack.c.h.b16 %v506
        %v1918 = vunpack.c.l.b16 %v507
        %v1919 = vunpack.c.h.b16 %v507
        %v1920 = vunpack.c.l.b16 %v508
        %v1921 = vunpack.c.h.b16 %v508
        %v1922 = vunpack.c.l.b16 %v509
        %v1923 = vunpack.c.h.b16 %v509
        %v1924 = vunpack.c.l.b16 %v510
        %v1925 = vunpack.c.h.b16 %v510
        %v1926 = vunpack.c.l.b16 %v511
        %v1927 = vunpack.c.h.b16 %v511
        %v1928 = vunpack.c.l.b16 %v512
        %v1929 = vunpack.c.h.b16 %v512
        %v1930 = vunpack.c.l.b16 %v513
        %v1931 = vunpack.c.h.b16 %v513
        %v1932 = vunpack.c.l.b16 %v514
        %v1933 = vunpack.c.h.b16 %v514
        %v1934 = vunpack.c.l.b16 %v515
        %v1935 = vunpack.c.h.b16 %v515
        %v1936 = vunpack.c.l.b16 %v516
        %v1937 = vunpack.c.h.b16 %v516
        %v1938 = vunpack.c.l.b16 %v517
        %v1939 = vunpack.c.h.b16 %v517
        %v1940 = vunpack.c.l.b16 %v518
        %v1941 = vunpack.c.h.b16 %v518
        %v1942 = vunpack.c.l.b16 %v519
        %v1943 = vunpack.c.h.b16 %v519
        %v1944 = vunpack.c.l.b16 %v520
        %v1945 = vunpack.c.h.b16 %v520
        %v1946 = vunpack.c.l.b16 %v521
        %v1947 = vunpack.c.h.b16 %v521
        %v1948 = vunpack.c.l.b16 %v522
        %v1949 = vunpack.c.h.b16 %v522
        %v1950 = vunpack.c.l.b16 %v523
        %v1951 = vunpack.c.h.b16 %v523
        %v1952 = vunpack.c.l.b16 %v524
        %v1953 = vunpack.c.h.b16 %v524
        %v1954 = vunpack.c.l.b16 %v525
        %v1955 = vunpack.c.h.b16 %v525
        %v1956 = vunpack.c.l.b16 %v526
        %v1957 = vunpack.c.h.b16 %v526
        %v1958 = vunpack.c.l.b16 %v527
        %v1959 = vunpack.c.h.b16 %v527
        %v1960 = vunpack.c.l.b16 %v528
        %v1961 = vunpack.c.h.b16 %v528
        %v1962 = vunpack.c.l.b16 %v529
        %v1963 = vunpack.c.h.b16 %v529
        %v1964 = vunpack.c.l.b16 %v530
        %v1965 = vunpack.c.h.b16 %v530
        %v1966 = vunpack.c.l.b16 %v531
        %v1967 = vunpack.c.h.b16 %v531
        %v1968 = vunpack.c.l.b16 %v532
        %v1969 = vunpack.c.h.b16 %v532
        %v1970 = vunpack.c.l.b16 %v533
        %v1971 = vunpack.c.h.b16 %v533
        %v1972 = vunpack.c.l.b16 %v534
        %v1973 = vunpack.c.h.b16 %v534
        %v1974 = vunpack.c.l.b16 %v535
        %v1975 = vunpack.c.h.b16 %v535
        %v1976 = vunpack.c.l.b16 %v536
        %v1977 = vunpack.c.h.b16 %v536
        %v1978 = vunpack.c.l.b16 %v537
        %v1979 = vunpack.c.h.b16 %v537
        %v1980 = vpack.c.b16 %v1920, %v1916
        %v1981 = vpack.c.b16 %v1921, %v1917
        %v1982 = vpack.c.b16 %v1922, %v1918
        %v1983 = vpack.c.b16 %v1923, %v1919
        %v1984 = vpack.c.b16 %v1928, %v1924
        %v1985 = vpack.c.b16 %v1929, %v1925
        %v1986 = vpack.c.b16 %v1930, %v1926
        %v1987 = vpack.c.b16 %v1931, %v1927
        %v1988 = vpack.c.b16 %v1936, %v1932
        %v1989 = vpack.c.b16 %v1937, %v1933
        %v1990 = vpack.c.b16 %v1938, %v1934
        %v1991 = vpack.c.b16 %v1939, %v1935
        %v1992 = vpack.c.b16 %v1944, %v1940
        %v1993 = vpack.c.b16 %v1945, %v1941
        %v1994 = vpack.c.b16 %v1946, %v1942
        %v1995 = vpack.c.b16 %v1947, %v1943
        %v1996 = vpack.c.b16 %v1952, %v1948
        %v1997 = vpack.c.b16 %v1953, %v1949
        %v1998 = vpack.c.b16 %v1954, %v1950
        %v1999 = vpack.c.b16 %v1955, %v1951
        %v2000 = vpack.c.b16 %v1960, %v1956
        %v2001 = vpack.c.b16 %v1961, %v1957
        %v2002 = vpack.c.b16 %v1962, %v1958
        %v2003 = vpack.c.b16 %v1963, %v1959
        %v2004 = vpack.c.b16 %v1968, %v1964
        %v2005 = vpack.c.b16 %v1969, %v1965
        %v2006 = vpack.c.b16 %v1970, %v1966
        %v2007 = vpack.c.b16 %v1971, %v1967
        %v2008 = vpack.c.b16 %v1976, %v1972
        %v2009 = vpack.c.b16 %v1977, %v1973
        %v2010 = vpack.c.b16 %v1978, %v1974
        %v2011 = vpack.c.b16 %v1979, %v1975
        %2044 = vmatprep.subr.bf16.mxu0 %v1981
        %2045 = vmatpush1.bf16.msra.mxu0 %v1980
        %2046 = vmatprep.subr.bf16.mxu0 %v1985
        %2047 = vmatpush1.bf16.msra.mxu0 %v1984
        %2048 = vmatprep.subr.bf16.mxu0 %v1989
        %2049 = vmatpush1.bf16.msra.mxu0 %v1988
        %2050 = vmatprep.subr.bf16.mxu0 %v1993
        %2051 = vmatpush1.bf16.msra.mxu0 %v1992
        %2052 = vmatprep.subr.bf16.mxu0 %v1997
        %2053 = vmatpush1.bf16.msra.mxu0 %v1996
        %2054 = vmatprep.subr.bf16.mxu0 %v2001
        %2055 = vmatpush1.bf16.msra.mxu0 %v2000
        %2056 = vmatprep.subr.bf16.mxu0 %v2005
        %2057 = vmatpush1.bf16.msra.mxu0 %v2004
        %2058 = vmatprep.subr.bf16.mxu0 %v2009
        %2059 = vmatpush1.bf16.msra.mxu0 %v2008
        %2060 = vmatprep.subr.bf16.mxu0 0
        %2061 = vmatpush1.bf16.msra.mxu0 0
        %2062 = vmatprep.subr.bf16.mxu0 0
        %2063 = vmatpush1.bf16.msra.mxu0 0
        %2064 = vmatprep.subr.bf16.mxu0 0
        %2065 = vmatpush1.bf16.msra.mxu0 0
        %2066 = vmatprep.subr.bf16.mxu0 0
        %2067 = vmatpush1.bf16.msra.mxu0 0
        %2068 = vmatprep.subr.bf16.mxu0 0
        %2069 = vmatpush1.bf16.msra.mxu0 0
        %2070 = vmatprep.subr.bf16.mxu0 0
        %2071 = vmatpush1.bf16.msra.mxu0 0
        %2072 = vmatprep.subr.bf16.mxu0 0
        %2073 = vmatpush1.bf16.msra.mxu0 0
        %2074 = vmatprep.subr.bf16.mxu0 0
        %2075 = vmatpush1.bf16.msra.mxu0 0
        %2076 = vmatprep.mubr.bf16.mxu0 0
        %2077 = vmatmul.mubr.bf16.gmra.mrb[0].mxu0 %v1820
        %v2078 = vpop.f32.mrb[0].mxu0
        %v2079 = vadd.f32 %v1021, %v2078
        %v2080 = vpop.f32.mrb[0].mxu0
        %v2081 = vadd.f32 %v1023, %v2080
        %v2082 = vpop.f32.mrb[0].mxu0
        %v2083 = vadd.f32 %v1025, %v2082
        %v2084 = vpop.f32.mrb[0].mxu0
        %v2085 = vadd.f32 %v1027, %v2084
        %2086 = vmatprep.mubr.bf16.mxu0 0
        %2087 = vmatmul.mubr.bf16.gmra.mrb[0].mxu0 %v1821
        %v2088 = vpop.f32.mrb[0].mxu0
        %v2089 = vadd.f32 %v1031, %v2088
        %v2090 = vpop.f32.mrb[0].mxu0
        %v2091 = vadd.f32 %v1033, %v2090
        %v2092 = vpop.f32.mrb[0].mxu0
        %v2093 = vadd.f32 %v1035, %v2092
        %v2094 = vpop.f32.mrb[0].mxu0
        %v2095 = vadd.f32 %v1037, %v2094
        %2096 = vmatprep.mubr.bf16.mxu0 0
        %2097 = vmatmul.mubr.bf16.gmra.mrb[0].mxu0 %v1822
        %v2098 = vpop.f32.mrb[0].mxu0
        %v2099 = vadd.f32 %v1041, %v2098
        %v2100 = vpop.f32.mrb[0].mxu0
        %v2101 = vadd.f32 %v1043, %v2100
        %v2102 = vpop.f32.mrb[0].mxu0
        %v2103 = vadd.f32 %v1045, %v2102
        %v2104 = vpop.f32.mrb[0].mxu0
        %v2105 = vadd.f32 %v1047, %v2104
        %2106 = vmatprep.mubr.bf16.mxu0 0
        %2107 = vmatmul.mubr.bf16.gmra.mrb[0].mxu0 %v1823
        %v2108 = vpop.f32.mrb[0].mxu0
        %v2109 = vadd.f32 %v1051, %v2108
        %v2110 = vpop.f32.mrb[0].mxu0
        %v2111 = vadd.f32 %v1053, %v2110
        %v2112 = vpop.f32.mrb[0].mxu0
        %v2113 = vadd.f32 %v1055, %v2112
        %v2114 = vpop.f32.mrb[0].mxu0
        %v2115 = vadd.f32 %v1057, %v2114
        %2116 = vmatprep.mubr.bf16.mxu0 0
        %2117 = vmatmul.mubr.bf16.gmra.mrb[0].mxu0 %v1824
        %v2118 = vpop.f32.mrb[0].mxu0
        %v2119 = vadd.f32 %v1061, %v2118
        %v2120 = vpop.f32.mrb[0].mxu0
        %v2121 = vadd.f32 %v1063, %v2120
        %v2122 = vpop.f32.mrb[0].mxu0
        %v2123 = vadd.f32 %v1065, %v2122
        %v2124 = vpop.f32.mrb[0].mxu0
        %v2125 = vadd.f32 %v1067, %v2124
        %2126 = vmatprep.mubr.bf16.mxu0 0
        %2127 = vmatmul.mubr.bf16.gmra.mrb[0].mxu0 %v1825
        %v2128 = vpop.f32.mrb[0].mxu0
        %v2129 = vadd.f32 %v1071, %v2128
        %v2130 = vpop.f32.mrb[0].mxu0
        %v2131 = vadd.f32 %v1073, %v2130
        %v2132 = vpop.f32.mrb[0].mxu0
        %v2133 = vadd.f32 %v1075, %v2132
        %v2134 = vpop.f32.mrb[0].mxu0
        %v2135 = vadd.f32 %v1077, %v2134
        %2136 = vmatprep.mubr.bf16.mxu0 0
        %2137 = vmatmul.mubr.bf16.gmra.mrb[0].mxu0 %v1826
        %v2138 = vpop.f32.mrb[0].mxu0
        %v2139 = vadd.f32 %v1081, %v2138
        %v2140 = vpop.f32.mrb[0].mxu0
        %v2141 = vadd.f32 %v1083, %v2140
        %v2142 = vpop.f32.mrb[0].mxu0
        %v2143 = vadd.f32 %v1085, %v2142
        %v2144 = vpop.f32.mrb[0].mxu0
        %v2145 = vadd.f32 %v1087, %v2144
        %2146 = vmatprep.mubr.bf16.mxu0 0
        %2147 = vmatmul.mubr.bf16.gmra.mrb[0].mxu0 %v1827
        %v2148 = vpop.f32.mrb[0].mxu0
        %v2149 = vadd.f32 %v1091, %v2148
        %v2150 = vpop.f32.mrb[0].mxu0
        %v2151 = vadd.f32 %v1093, %v2150
        %v2152 = vpop.f32.mrb[0].mxu0
        %v2153 = vadd.f32 %v1095, %v2152
        %v2154 = vpop.f32.mrb[0].mxu0
        %v2155 = vadd.f32 %v1097, %v2154
        %2156 = vmatprep.mubr.bf16.mxu0 0
        %2157 = vmatmul.mubr.bf16.gmra.mrb[0].mxu0 %v1828
        %v2158 = vpop.f32.mrb[0].mxu0
        %v2159 = vadd.f32 %v1101, %v2158
        %v2160 = vpop.f32.mrb[0].mxu0
        %v2161 = vadd.f32 %v1103, %v2160
        %v2162 = vpop.f32.mrb[0].mxu0
        %v2163 = vadd.f32 %v1105, %v2162
        %v2164 = vpop.f32.mrb[0].mxu0
        %v2165 = vadd.f32 %v1107, %v2164
        %2166 = vmatprep.mubr.bf16.mxu0 0
        %2167 = vmatmul.mubr.bf16.gmra.mrb[0].mxu0 %v1829
        %v2168 = vpop.f32.mrb[0].mxu0
        %v2169 = vadd.f32 %v1111, %v2168
        %v2170 = vpop.f32.mrb[0].mxu0
        %v2171 = vadd.f32 %v1113, %v2170
        %v2172 = vpop.f32.mrb[0].mxu0
        %v2173 = vadd.f32 %v1115, %v2172
        %v2174 = vpop.f32.mrb[0].mxu0
        %v2175 = vadd.f32 %v1117, %v2174
        %2176 = vmatprep.mubr.bf16.mxu0 0
        %2177 = vmatmul.mubr.bf16.gmra.mrb[0].mxu0 %v1830
        %v2178 = vpop.f32.mrb[0].mxu0
        %v2179 = vadd.f32 %v1121, %v2178
        %v2180 = vpop.f32.mrb[0].mxu0
        %v2181 = vadd.f32 %v1123, %v2180
        %v2182 = vpop.f32.mrb[0].mxu0
        %v2183 = vadd.f32 %v1125, %v2182
        %v2184 = vpop.f32.mrb[0].mxu0
        %v2185 = vadd.f32 %v1127, %v2184
        %2186 = vmatprep.mubr.bf16.mxu0 0
        %2187 = vmatmul.mubr.bf16.gmra.mrb[0].mxu0 %v1831
        %v2188 = vpop.f32.mrb[0].mxu0
        %v2189 = vadd.f32 %v1131, %v2188
        %v2190 = vpop.f32.mrb[0].mxu0
        %v2191 = vadd.f32 %v1133, %v2190
        %v2192 = vpop.f32.mrb[0].mxu0
        %v2193 = vadd.f32 %v1135, %v2192
        %v2194 = vpop.f32.mrb[0].mxu0
        %v2195 = vadd.f32 %v1137, %v2194
        %2196 = vmatprep.mubr.bf16.mxu0 0
        %2197 = vmatmul.mubr.bf16.gmra.mrb[0].mxu0 %v1832
        %v2198 = vpop.f32.mrb[0].mxu0
        %v2199 = vadd.f32 %v1141, %v2198
        %v2200 = vpop.f32.mrb[0].mxu0
        %v2201 = vadd.f32 %v1143, %v2200
        %v2202 = vpop.f32.mrb[0].mxu0
        %v2203 = vadd.f32 %v1145, %v2202
        %v2204 = vpop.f32.mrb[0].mxu0
        %v2205 = vadd.f32 %v1147, %v2204
        %2206 = vmatprep.mubr.bf16.mxu0 0
        %2207 = vmatmul.mubr.bf16.gmra.mrb[0].mxu0 %v1833
        %v2208 = vpop.f32.mrb[0].mxu0
        %v2209 = vadd.f32 %v1151, %v2208
        %v2210 = vpop.f32.mrb[0].mxu0
        %v2211 = vadd.f32 %v1153, %v2210
        %v2212 = vpop.f32.mrb[0].mxu0
        %v2213 = vadd.f32 %v1155, %v2212
        %v2214 = vpop.f32.mrb[0].mxu0
        %v2215 = vadd.f32 %v1157, %v2214
        %2216 = vmatprep.mubr.bf16.mxu0 0
        %2217 = vmatmul.mubr.bf16.gmra.mrb[0].mxu0 %v1834
        %v2218 = vpop.f32.mrb[0].mxu0
        %v2219 = vadd.f32 %v1161, %v2218
        %v2220 = vpop.f32.mrb[0].mxu0
        %v2221 = vadd.f32 %v1163, %v2220
        %v2222 = vpop.f32.mrb[0].mxu0
        %v2223 = vadd.f32 %v1165, %v2222
        %v2224 = vpop.f32.mrb[0].mxu0
        %v2225 = vadd.f32 %v1167, %v2224
        %2226 = vmatprep.mubr.bf16.mxu0 0
        %2227 = vmatmul.mubr.bf16.gmra.mrb[0].mxu0 %v1835
        %v2228 = vpop.f32.mrb[0].mxu0
        %v2229 = vadd.f32 %v1171, %v2228
        %v2230 = vpop.f32.mrb[0].mxu0
        %v2231 = vadd.f32 %v1173, %v2230
        %v2232 = vpop.f32.mrb[0].mxu0
        %v2233 = vadd.f32 %v1175, %v2232
        %v2234 = vpop.f32.mrb[0].mxu0
        %v2235 = vadd.f32 %v1177, %v2234
        %2236 = vmatprep.mubr.bf16.mxu0 0
        %2237 = vmatmul.mubr.bf16.gmra.mrb[0].mxu0 %v1836
        %v2238 = vpop.f32.mrb[0].mxu0
        %v2239 = vadd.f32 %v1181, %v2238
        %v2240 = vpop.f32.mrb[0].mxu0
        %v2241 = vadd.f32 %v1183, %v2240
        %v2242 = vpop.f32.mrb[0].mxu0
        %v2243 = vadd.f32 %v1185, %v2242
        %v2244 = vpop.f32.mrb[0].mxu0
        %v2245 = vadd.f32 %v1187, %v2244
        %2246 = vmatprep.mubr.bf16.mxu0 0
        %2247 = vmatmul.mubr.bf16.gmra.mrb[0].mxu0 %v1837
        %v2248 = vpop.f32.mrb[0].mxu0
        %v2249 = vadd.f32 %v1191, %v2248
        %v2250 = vpop.f32.mrb[0].mxu0
        %v2251 = vadd.f32 %v1193, %v2250
        %v2252 = vpop.f32.mrb[0].mxu0
        %v2253 = vadd.f32 %v1195, %v2252
        %v2254 = vpop.f32.mrb[0].mxu0
        %v2255 = vadd.f32 %v1197, %v2254
        %2256 = vmatprep.mubr.bf16.mxu0 0
        %2257 = vmatmul.mubr.bf16.gmra.mrb[0].mxu0 %v1838
        %v2258 = vpop.f32.mrb[0].mxu0
        %v2259 = vadd.f32 %v1201, %v2258
        %v2260 = vpop.f32.mrb[0].mxu0
        %v2261 = vadd.f32 %v1203, %v2260
        %v2262 = vpop.f32.mrb[0].mxu0
        %v2263 = vadd.f32 %v1205, %v2262
        %v2264 = vpop.f32.mrb[0].mxu0
        %v2265 = vadd.f32 %v1207, %v2264
        %2266 = vmatprep.mubr.bf16.mxu0 0
        %2267 = vmatmul.mubr.bf16.gmra.mrb[0].mxu0 %v1839
        %v2268 = vpop.f32.mrb[0].mxu0
        %v2269 = vadd.f32 %v1211, %v2268
        %v2270 = vpop.f32.mrb[0].mxu0
        %v2271 = vadd.f32 %v1213, %v2270
        %v2272 = vpop.f32.mrb[0].mxu0
        %v2273 = vadd.f32 %v1215, %v2272
        %v2274 = vpop.f32.mrb[0].mxu0
        %v2275 = vadd.f32 %v1217, %v2274
        %2276 = vmatprep.mubr.bf16.mxu0 0
        %2277 = vmatmul.mubr.bf16.gmra.mrb[0].mxu0 %v1840
        %v2278 = vpop.f32.mrb[0].mxu0
        %v2279 = vadd.f32 %v1221, %v2278
        %v2280 = vpop.f32.mrb[0].mxu0
        %v2281 = vadd.f32 %v1223, %v2280
        %v2282 = vpop.f32.mrb[0].mxu0
        %v2283 = vadd.f32 %v1225, %v2282
        %v2284 = vpop.f32.mrb[0].mxu0
        %v2285 = vadd.f32 %v1227, %v2284
        %2286 = vmatprep.mubr.bf16.mxu0 0
        %2287 = vmatmul.mubr.bf16.gmra.mrb[0].mxu0 %v1841
        %v2288 = vpop.f32.mrb[0].mxu0
        %v2289 = vadd.f32 %v1231, %v2288
        %v2290 = vpop.f32.mrb[0].mxu0
        %v2291 = vadd.f32 %v1233, %v2290
        %v2292 = vpop.f32.mrb[0].mxu0
        %v2293 = vadd.f32 %v1235, %v2292
        %v2294 = vpop.f32.mrb[0].mxu0
        %v2295 = vadd.f32 %v1237, %v2294
        %2296 = vmatprep.mubr.bf16.mxu0 0
        %2297 = vmatmul.mubr.bf16.gmra.mrb[0].mxu0 %v1842
        %v2298 = vpop.f32.mrb[0].mxu0
        %v2299 = vadd.f32 %v1241, %v2298
        %v2300 = vpop.f32.mrb[0].mxu0
        %v2301 = vadd.f32 %v1243, %v2300
        %v2302 = vpop.f32.mrb[0].mxu0
        %v2303 = vadd.f32 %v1245, %v2302
        %v2304 = vpop.f32.mrb[0].mxu0
        %v2305 = vadd.f32 %v1247, %v2304
        %2306 = vmatprep.mubr.bf16.mxu0 0
        %2307 = vmatmul.mubr.bf16.gmra.mrb[0].mxu0 %v1843
        %v2308 = vpop.f32.mrb[0].mxu0
        %v2309 = vadd.f32 %v1251, %v2308
        %v2310 = vpop.f32.mrb[0].mxu0
        %v2311 = vadd.f32 %v1253, %v2310
        %v2312 = vpop.f32.mrb[0].mxu0
        %v2313 = vadd.f32 %v1255, %v2312
        %v2314 = vpop.f32.mrb[0].mxu0
        %v2315 = vadd.f32 %v1257, %v2314
        %2316 = vmatprep.mubr.bf16.mxu0 0
        %2317 = vmatmul.mubr.bf16.gmra.mrb[0].mxu0 %v1844
        %v2318 = vpop.f32.mrb[0].mxu0
        %v2319 = vadd.f32 %v1261, %v2318
        %v2320 = vpop.f32.mrb[0].mxu0
        %v2321 = vadd.f32 %v1263, %v2320
        %v2322 = vpop.f32.mrb[0].mxu0
        %v2323 = vadd.f32 %v1265, %v2322
        %v2324 = vpop.f32.mrb[0].mxu0
        %v2325 = vadd.f32 %v1267, %v2324
        %2326 = vmatprep.mubr.bf16.mxu0 0
        %2327 = vmatmul.mubr.bf16.gmra.mrb[0].mxu0 %v1845
        %v2328 = vpop.f32.mrb[0].mxu0
        %v2329 = vadd.f32 %v1271, %v2328
        %v2330 = vpop.f32.mrb[0].mxu0
        %v2331 = vadd.f32 %v1273, %v2330
        %v2332 = vpop.f32.mrb[0].mxu0
        %v2333 = vadd.f32 %v1275, %v2332
        %v2334 = vpop.f32.mrb[0].mxu0
        %v2335 = vadd.f32 %v1277, %v2334
        %2336 = vmatprep.mubr.bf16.mxu0 0
        %2337 = vmatmul.mubr.bf16.gmra.mrb[0].mxu0 %v1846
        %v2338 = vpop.f32.mrb[0].mxu0
        %v2339 = vadd.f32 %v1281, %v2338
        %v2340 = vpop.f32.mrb[0].mxu0
        %v2341 = vadd.f32 %v1283, %v2340
        %v2342 = vpop.f32.mrb[0].mxu0
        %v2343 = vadd.f32 %v1285, %v2342
        %v2344 = vpop.f32.mrb[0].mxu0
        %v2345 = vadd.f32 %v1287, %v2344
        %2346 = vmatprep.mubr.bf16.mxu0 0
        %2347 = vmatmul.mubr.bf16.gmra.mrb[0].mxu0 %v1847
        %v2348 = vpop.f32.mrb[0].mxu0
        %v2349 = vadd.f32 %v1291, %v2348
        %v2350 = vpop.f32.mrb[0].mxu0
        %v2351 = vadd.f32 %v1293, %v2350
        %v2352 = vpop.f32.mrb[0].mxu0
        %v2353 = vadd.f32 %v1295, %v2352
        %v2354 = vpop.f32.mrb[0].mxu0
        %v2355 = vadd.f32 %v1297, %v2354
        %2356 = vmatprep.mubr.bf16.mxu0 0
        %2357 = vmatmul.mubr.bf16.gmra.mrb[0].mxu0 %v1848
        %v2358 = vpop.f32.mrb[0].mxu0
        %v2359 = vadd.f32 %v1301, %v2358
        %v2360 = vpop.f32.mrb[0].mxu0
        %v2361 = vadd.f32 %v1303, %v2360
        %v2362 = vpop.f32.mrb[0].mxu0
        %v2363 = vadd.f32 %v1305, %v2362
        %v2364 = vpop.f32.mrb[0].mxu0
        %v2365 = vadd.f32 %v1307, %v2364
        %2366 = vmatprep.mubr.bf16.mxu0 0
        %2367 = vmatmul.mubr.bf16.gmra.mrb[0].mxu0 %v1849
        %v2368 = vpop.f32.mrb[0].mxu0
        %v2369 = vadd.f32 %v1311, %v2368
        %v2370 = vpop.f32.mrb[0].mxu0
        %v2371 = vadd.f32 %v1313, %v2370
        %v2372 = vpop.f32.mrb[0].mxu0
        %v2373 = vadd.f32 %v1315, %v2372
        %v2374 = vpop.f32.mrb[0].mxu0
        %v2375 = vadd.f32 %v1317, %v2374
        %2376 = vmatprep.mubr.bf16.mxu0 0
        %2377 = vmatmul.mubr.bf16.gmra.mrb[0].mxu0 %v1850
        %v2378 = vpop.f32.mrb[0].mxu0
        %v2379 = vadd.f32 %v1321, %v2378
        %v2380 = vpop.f32.mrb[0].mxu0
        %v2381 = vadd.f32 %v1323, %v2380
        %v2382 = vpop.f32.mrb[0].mxu0
        %v2383 = vadd.f32 %v1325, %v2382
        %v2384 = vpop.f32.mrb[0].mxu0
        %v2385 = vadd.f32 %v1327, %v2384
        %2386 = vmatprep.mubr.bf16.mxu0 0
        %2387 = vmatmul.mubr.bf16.gmra.mrb[0].mxu0 %v1851
        %v2388 = vpop.f32.mrb[0].mxu0
        %v2389 = vadd.f32 %v1331, %v2388
        %v2390 = vpop.f32.mrb[0].mxu0
        %v2391 = vadd.f32 %v1333, %v2390
        %v2392 = vpop.f32.mrb[0].mxu0
        %v2393 = vadd.f32 %v1335, %v2392
        %v2394 = vpop.f32.mrb[0].mxu0
        %v2395 = vadd.f32 %v1337, %v2394
        %2396 = vdwg.mxu0
        %2397 = vmatprep.subr.bf16.mxu0 %v1983
        %2398 = vmatpush1.bf16.msra.mxu0 %v1982
        %2399 = vmatprep.subr.bf16.mxu0 %v1987
        %2400 = vmatpush1.bf16.msra.mxu0 %v1986
        %2401 = vmatprep.subr.bf16.mxu0 %v1991
        %2402 = vmatpush1.bf16.msra.mxu0 %v1990
        %2403 = vmatprep.subr.bf16.mxu0 %v1995
        %2404 = vmatpush1.bf16.msra.mxu0 %v1994
        %2405 = vmatprep.subr.bf16.mxu0 %v1999
        %2406 = vmatpush1.bf16.msra.mxu0 %v1998
        %2407 = vmatprep.subr.bf16.mxu0 %v2003
        %2408 = vmatpush1.bf16.msra.mxu0 %v2002
        %2409 = vmatprep.subr.bf16.mxu0 %v2007
        %2410 = vmatpush1.bf16.msra.mxu0 %v2006
        %2411 = vmatprep.subr.bf16.mxu0 %v2011
        %2412 = vmatpush1.bf16.msra.mxu0 %v2010
        %2413 = vmatprep.subr.bf16.mxu0 0
        %2414 = vmatpush1.bf16.msra.mxu0 0
        %2415 = vmatprep.subr.bf16.mxu0 0
        %2416 = vmatpush1.bf16.msra.mxu0 0
        %2417 = vmatprep.subr.bf16.mxu0 0
        %2418 = vmatpush1.bf16.msra.mxu0 0
        %2419 = vmatprep.subr.bf16.mxu0 0
        %2420 = vmatpush1.bf16.msra.mxu0 0
        %2421 = vmatprep.subr.bf16.mxu0 0
        %2422 = vmatpush1.bf16.msra.mxu0 0
        %2423 = vmatprep.subr.bf16.mxu0 0
        %2424 = vmatpush1.bf16.msra.mxu0 0
        %2425 = vmatprep.subr.bf16.mxu0 0
        %2426 = vmatpush1.bf16.msra.mxu0 0
        %2427 = vmatprep.subr.bf16.mxu0 0
        %2428 = vmatpush1.bf16.msra.mxu0 0
        %2429 = vmatprep.mubr.bf16.mxu0 0
        %2430 = vmatmul.mubr.bf16.gmra.mrb[0].mxu0 %v1820
        %v2431 = vpop.f32.mrb[0].mxu0
        %v2432 = vadd.f32 %v1374, %v2431
        %v2433 = vpop.f32.mrb[0].mxu0
        %v2434 = vadd.f32 %v1376, %v2433
        %v2435 = vpop.f32.mrb[0].mxu0
        %v2436 = vadd.f32 %v1378, %v2435
        %v2437 = vpop.f32.mrb[0].mxu0
        %v2438 = vadd.f32 %v1380, %v2437
        %2439 = vmatprep.mubr.bf16.mxu0 0
        %2440 = vmatmul.mubr.bf16.gmra.mrb[0].mxu0 %v1821
        %v2441 = vpop.f32.mrb[0].mxu0
        %v2442 = vadd.f32 %v1384, %v2441
        %v2443 = vpop.f32.mrb[0].mxu0
        %v2444 = vadd.f32 %v1386, %v2443
        %v2445 = vpop.f32.mrb[0].mxu0
        %v2446 = vadd.f32 %v1388, %v2445
        %v2447 = vpop.f32.mrb[0].mxu0
        %v2448 = vadd.f32 %v1390, %v2447
        %2449 = vmatprep.mubr.bf16.mxu0 0
        %2450 = vmatmul.mubr.bf16.gmra.mrb[0].mxu0 %v1822
        %v2451 = vpop.f32.mrb[0].mxu0
        %v2452 = vadd.f32 %v1394, %v2451
        %v2453 = vpop.f32.mrb[0].mxu0
        %v2454 = vadd.f32 %v1396, %v2453
        %v2455 = vpop.f32.mrb[0].mxu0
        %v2456 = vadd.f32 %v1398, %v2455
        %v2457 = vpop.f32.mrb[0].mxu0
        %v2458 = vadd.f32 %v1400, %v2457
        %2459 = vmatprep.mubr.bf16.mxu0 0
        %2460 = vmatmul.mubr.bf16.gmra.mrb[0].mxu0 %v1823
        %v2461 = vpop.f32.mrb[0].mxu0
        %v2462 = vadd.f32 %v1404, %v2461
        %v2463 = vpop.f32.mrb[0].mxu0
        %v2464 = vadd.f32 %v1406, %v2463
        %v2465 = vpop.f32.mrb[0].mxu0
        %v2466 = vadd.f32 %v1408, %v2465
        %v2467 = vpop.f32.mrb[0].mxu0
        %v2468 = vadd.f32 %v1410, %v2467
        %2469 = vmatprep.mubr.bf16.mxu0 0
        %2470 = vmatmul.mubr.bf16.gmra.mrb[0].mxu0 %v1824
        %v2471 = vpop.f32.mrb[0].mxu0
        %v2472 = vadd.f32 %v1414, %v2471
        %v2473 = vpop.f32.mrb[0].mxu0
        %v2474 = vadd.f32 %v1416, %v2473
        %v2475 = vpop.f32.mrb[0].mxu0
        %v2476 = vadd.f32 %v1418, %v2475
        %v2477 = vpop.f32.mrb[0].mxu0
        %v2478 = vadd.f32 %v1420, %v2477
        %2479 = vmatprep.mubr.bf16.mxu0 0
        %2480 = vmatmul.mubr.bf16.gmra.mrb[0].mxu0 %v1825
        %v2481 = vpop.f32.mrb[0].mxu0
        %v2482 = vadd.f32 %v1424, %v2481
        %v2483 = vpop.f32.mrb[0].mxu0
        %v2484 = vadd.f32 %v1426, %v2483
        %v2485 = vpop.f32.mrb[0].mxu0
        %v2486 = vadd.f32 %v1428, %v2485
        %v2487 = vpop.f32.mrb[0].mxu0
        %v2488 = vadd.f32 %v1430, %v2487
        %2489 = vmatprep.mubr.bf16.mxu0 0
        %2490 = vmatmul.mubr.bf16.gmra.mrb[0].mxu0 %v1826
        %v2491 = vpop.f32.mrb[0].mxu0
        %v2492 = vadd.f32 %v1434, %v2491
        %v2493 = vpop.f32.mrb[0].mxu0
        %v2494 = vadd.f32 %v1436, %v2493
        %v2495 = vpop.f32.mrb[0].mxu0
        %v2496 = vadd.f32 %v1438, %v2495
        %v2497 = vpop.f32.mrb[0].mxu0
        %v2498 = vadd.f32 %v1440, %v2497
        %2499 = vmatprep.mubr.bf16.mxu0 0
        %2500 = vmatmul.mubr.bf16.gmra.mrb[0].mxu0 %v1827
        %v2501 = vpop.f32.mrb[0].mxu0
        %v2502 = vadd.f32 %v1444, %v2501
        %v2503 = vpop.f32.mrb[0].mxu0
        %v2504 = vadd.f32 %v1446, %v2503
        %v2505 = vpop.f32.mrb[0].mxu0
        %v2506 = vadd.f32 %v1448, %v2505
        %v2507 = vpop.f32.mrb[0].mxu0
        %v2508 = vadd.f32 %v1450, %v2507
        %2509 = vmatprep.mubr.bf16.mxu0 0
        %2510 = vmatmul.mubr.bf16.gmra.mrb[0].mxu0 %v1828
        %v2511 = vpop.f32.mrb[0].mxu0
        %v2512 = vadd.f32 %v1454, %v2511
        %v2513 = vpop.f32.mrb[0].mxu0
        %v2514 = vadd.f32 %v1456, %v2513
        %v2515 = vpop.f32.mrb[0].mxu0
        %v2516 = vadd.f32 %v1458, %v2515
        %v2517 = vpop.f32.mrb[0].mxu0
        %v2518 = vadd.f32 %v1460, %v2517
        %2519 = vmatprep.mubr.bf16.mxu0 0
        %2520 = vmatmul.mubr.bf16.gmra.mrb[0].mxu0 %v1829
        %v2521 = vpop.f32.mrb[0].mxu0
        %v2522 = vadd.f32 %v1464, %v2521
        %v2523 = vpop.f32.mrb[0].mxu0
        %v2524 = vadd.f32 %v1466, %v2523
        %v2525 = vpop.f32.mrb[0].mxu0
        %v2526 = vadd.f32 %v1468, %v2525
        %v2527 = vpop.f32.mrb[0].mxu0
        %v2528 = vadd.f32 %v1470, %v2527
        %2529 = vmatprep.mubr.bf16.mxu0 0
        %2530 = vmatmul.mubr.bf16.gmra.mrb[0].mxu0 %v1830
        %v2531 = vpop.f32.mrb[0].mxu0
        %v2532 = vadd.f32 %v1474, %v2531
        %v2533 = vpop.f32.mrb[0].mxu0
        %v2534 = vadd.f32 %v1476, %v2533
        %v2535 = vpop.f32.mrb[0].mxu0
        %v2536 = vadd.f32 %v1478, %v2535
        %v2537 = vpop.f32.mrb[0].mxu0
        %v2538 = vadd.f32 %v1480, %v2537
        %2539 = vmatprep.mubr.bf16.mxu0 0
        %2540 = vmatmul.mubr.bf16.gmra.mrb[0].mxu0 %v1831
        %v2541 = vpop.f32.mrb[0].mxu0
        %v2542 = vadd.f32 %v1484, %v2541
        %v2543 = vpop.f32.mrb[0].mxu0
        %v2544 = vadd.f32 %v1486, %v2543
        %v2545 = vpop.f32.mrb[0].mxu0
        %v2546 = vadd.f32 %v1488, %v2545
        %v2547 = vpop.f32.mrb[0].mxu0
        %v2548 = vadd.f32 %v1490, %v2547
        %2549 = vmatprep.mubr.bf16.mxu0 0
        %2550 = vmatmul.mubr.bf16.gmra.mrb[0].mxu0 %v1832
        %v2551 = vpop.f32.mrb[0].mxu0
        %v2552 = vadd.f32 %v1494, %v2551
        %v2553 = vpop.f32.mrb[0].mxu0
        %v2554 = vadd.f32 %v1496, %v2553
        %v2555 = vpop.f32.mrb[0].mxu0
        %v2556 = vadd.f32 %v1498, %v2555
        %v2557 = vpop.f32.mrb[0].mxu0
        %v2558 = vadd.f32 %v1500, %v2557
        %2559 = vmatprep.mubr.bf16.mxu0 0
        %2560 = vmatmul.mubr.bf16.gmra.mrb[0].mxu0 %v1833
        %v2561 = vpop.f32.mrb[0].mxu0
        %v2562 = vadd.f32 %v1504, %v2561
        %v2563 = vpop.f32.mrb[0].mxu0
        %v2564 = vadd.f32 %v1506, %v2563
        %v2565 = vpop.f32.mrb[0].mxu0
        %v2566 = vadd.f32 %v1508, %v2565
        %v2567 = vpop.f32.mrb[0].mxu0
        %v2568 = vadd.f32 %v1510, %v2567
        %2569 = vmatprep.mubr.bf16.mxu0 0
        %2570 = vmatmul.mubr.bf16.gmra.mrb[0].mxu0 %v1834
        %v2571 = vpop.f32.mrb[0].mxu0
        %v2572 = vadd.f32 %v1514, %v2571
        %v2573 = vpop.f32.mrb[0].mxu0
        %v2574 = vadd.f32 %v1516, %v2573
        %v2575 = vpop.f32.mrb[0].mxu0
        %v2576 = vadd.f32 %v1518, %v2575
        %v2577 = vpop.f32.mrb[0].mxu0
        %v2578 = vadd.f32 %v1520, %v2577
        %2579 = vmatprep.mubr.bf16.mxu0 0
        %2580 = vmatmul.mubr.bf16.gmra.mrb[0].mxu0 %v1835
        %v2581 = vpop.f32.mrb[0].mxu0
        %v2582 = vadd.f32 %v1524, %v2581
        %v2583 = vpop.f32.mrb[0].mxu0
        %v2584 = vadd.f32 %v1526, %v2583
        %v2585 = vpop.f32.mrb[0].mxu0
        %v2586 = vadd.f32 %v1528, %v2585
        %v2587 = vpop.f32.mrb[0].mxu0
        %v2588 = vadd.f32 %v1530, %v2587
        %2589 = vmatprep.mubr.bf16.mxu0 0
        %2590 = vmatmul.mubr.bf16.gmra.mrb[0].mxu0 %v1836
        %v2591 = vpop.f32.mrb[0].mxu0
        %v2592 = vadd.f32 %v1534, %v2591
        %v2593 = vpop.f32.mrb[0].mxu0
        %v2594 = vadd.f32 %v1536, %v2593
        %v2595 = vpop.f32.mrb[0].mxu0
        %v2596 = vadd.f32 %v1538, %v2595
        %v2597 = vpop.f32.mrb[0].mxu0
        %v2598 = vadd.f32 %v1540, %v2597
        %2599 = vmatprep.mubr.bf16.mxu0 0
        %2600 = vmatmul.mubr.bf16.gmra.mrb[0].mxu0 %v1837
        %v2601 = vpop.f32.mrb[0].mxu0
        %v2602 = vadd.f32 %v1544, %v2601
        %v2603 = vpop.f32.mrb[0].mxu0
        %v2604 = vadd.f32 %v1546, %v2603
        %v2605 = vpop.f32.mrb[0].mxu0
        %v2606 = vadd.f32 %v1548, %v2605
        %v2607 = vpop.f32.mrb[0].mxu0
        %v2608 = vadd.f32 %v1550, %v2607
        %2609 = vmatprep.mubr.bf16.mxu0 0
        %2610 = vmatmul.mubr.bf16.gmra.mrb[0].mxu0 %v1838
        %v2611 = vpop.f32.mrb[0].mxu0
        %v2612 = vadd.f32 %v1554, %v2611
        %v2613 = vpop.f32.mrb[0].mxu0
        %v2614 = vadd.f32 %v1556, %v2613
        %v2615 = vpop.f32.mrb[0].mxu0
        %v2616 = vadd.f32 %v1558, %v2615
        %v2617 = vpop.f32.mrb[0].mxu0
        %v2618 = vadd.f32 %v1560, %v2617
        %2619 = vmatprep.mubr.bf16.mxu0 0
        %2620 = vmatmul.mubr.bf16.gmra.mrb[0].mxu0 %v1839
        %v2621 = vpop.f32.mrb[0].mxu0
        %v2622 = vadd.f32 %v1564, %v2621
        %v2623 = vpop.f32.mrb[0].mxu0
        %v2624 = vadd.f32 %v1566, %v2623
        %v2625 = vpop.f32.mrb[0].mxu0
        %v2626 = vadd.f32 %v1568, %v2625
        %v2627 = vpop.f32.mrb[0].mxu0
        %v2628 = vadd.f32 %v1570, %v2627
        %2629 = vmatprep.mubr.bf16.mxu0 0
        %2630 = vmatmul.mubr.bf16.gmra.mrb[0].mxu0 %v1840
        %v2631 = vpop.f32.mrb[0].mxu0
        %v2632 = vadd.f32 %v1574, %v2631
        %v2633 = vpop.f32.mrb[0].mxu0
        %v2634 = vadd.f32 %v1576, %v2633
        %v2635 = vpop.f32.mrb[0].mxu0
        %v2636 = vadd.f32 %v1578, %v2635
        %v2637 = vpop.f32.mrb[0].mxu0
        %v2638 = vadd.f32 %v1580, %v2637
        %2639 = vmatprep.mubr.bf16.mxu0 0
        %2640 = vmatmul.mubr.bf16.gmra.mrb[0].mxu0 %v1841
        %v2641 = vpop.f32.mrb[0].mxu0
        %v2642 = vadd.f32 %v1584, %v2641
        %v2643 = vpop.f32.mrb[0].mxu0
        %v2644 = vadd.f32 %v1586, %v2643
        %v2645 = vpop.f32.mrb[0].mxu0
        %v2646 = vadd.f32 %v1588, %v2645
        %v2647 = vpop.f32.mrb[0].mxu0
        %v2648 = vadd.f32 %v1590, %v2647
        %2649 = vmatprep.mubr.bf16.mxu0 0
        %2650 = vmatmul.mubr.bf16.gmra.mrb[0].mxu0 %v1842
        %v2651 = vpop.f32.mrb[0].mxu0
        %v2652 = vadd.f32 %v1594, %v2651
        %v2653 = vpop.f32.mrb[0].mxu0
        %v2654 = vadd.f32 %v1596, %v2653
        %v2655 = vpop.f32.mrb[0].mxu0
        %v2656 = vadd.f32 %v1598, %v2655
        %v2657 = vpop.f32.mrb[0].mxu0
        %v2658 = vadd.f32 %v1600, %v2657
        %2659 = vmatprep.mubr.bf16.mxu0 0
        %2660 = vmatmul.mubr.bf16.gmra.mrb[0].mxu0 %v1843
        %v2661 = vpop.f32.mrb[0].mxu0
        %v2662 = vadd.f32 %v1604, %v2661
        %v2663 = vpop.f32.mrb[0].mxu0
        %v2664 = vadd.f32 %v1606, %v2663
        %v2665 = vpop.f32.mrb[0].mxu0
        %v2666 = vadd.f32 %v1608, %v2665
        %v2667 = vpop.f32.mrb[0].mxu0
        %v2668 = vadd.f32 %v1610, %v2667
        %2669 = vmatprep.mubr.bf16.mxu0 0
        %2670 = vmatmul.mubr.bf16.gmra.mrb[0].mxu0 %v1844
        %v2671 = vpop.f32.mrb[0].mxu0
        %v2672 = vadd.f32 %v1614, %v2671
        %v2673 = vpop.f32.mrb[0].mxu0
        %v2674 = vadd.f32 %v1616, %v2673
        %v2675 = vpop.f32.mrb[0].mxu0
        %v2676 = vadd.f32 %v1618, %v2675
        %v2677 = vpop.f32.mrb[0].mxu0
        %v2678 = vadd.f32 %v1620, %v2677
        %2679 = vmatprep.mubr.bf16.mxu0 0
        %2680 = vmatmul.mubr.bf16.gmra.mrb[0].mxu0 %v1845
        %v2681 = vpop.f32.mrb[0].mxu0
        %v2682 = vadd.f32 %v1624, %v2681
        %v2683 = vpop.f32.mrb[0].mxu0
        %v2684 = vadd.f32 %v1626, %v2683
        %v2685 = vpop.f32.mrb[0].mxu0
        %v2686 = vadd.f32 %v1628, %v2685
        %v2687 = vpop.f32.mrb[0].mxu0
        %v2688 = vadd.f32 %v1630, %v2687
        %2689 = vmatprep.mubr.bf16.mxu0 0
        %2690 = vmatmul.mubr.bf16.gmra.mrb[0].mxu0 %v1846
        %v2691 = vpop.f32.mrb[0].mxu0
        %v2692 = vadd.f32 %v1634, %v2691
        %v2693 = vpop.f32.mrb[0].mxu0
        %v2694 = vadd.f32 %v1636, %v2693
        %v2695 = vpop.f32.mrb[0].mxu0
        %v2696 = vadd.f32 %v1638, %v2695
        %v2697 = vpop.f32.mrb[0].mxu0
        %v2698 = vadd.f32 %v1640, %v2697
        %2699 = vmatprep.mubr.bf16.mxu0 0
        %2700 = vmatmul.mubr.bf16.gmra.mrb[0].mxu0 %v1847
        %v2701 = vpop.f32.mrb[0].mxu0
        %v2702 = vadd.f32 %v1644, %v2701
        %v2703 = vpop.f32.mrb[0].mxu0
        %v2704 = vadd.f32 %v1646, %v2703
        %v2705 = vpop.f32.mrb[0].mxu0
        %v2706 = vadd.f32 %v1648, %v2705
        %v2707 = vpop.f32.mrb[0].mxu0
        %v2708 = vadd.f32 %v1650, %v2707
        %2709 = vmatprep.mubr.bf16.mxu0 0
        %2710 = vmatmul.mubr.bf16.gmra.mrb[0].mxu0 %v1848
        %v2711 = vpop.f32.mrb[0].mxu0
        %v2712 = vadd.f32 %v1654, %v2711
        %v2713 = vpop.f32.mrb[0].mxu0
        %v2714 = vadd.f32 %v1656, %v2713
        %v2715 = vpop.f32.mrb[0].mxu0
        %v2716 = vadd.f32 %v1658, %v2715
        %v2717 = vpop.f32.mrb[0].mxu0
        %v2718 = vadd.f32 %v1660, %v2717
        %2719 = vmatprep.mubr.bf16.mxu0 0
        %2720 = vmatmul.mubr.bf16.gmra.mrb[0].mxu0 %v1849
        %v2721 = vpop.f32.mrb[0].mxu0
        %v2722 = vadd.f32 %v1664, %v2721
        %v2723 = vpop.f32.mrb[0].mxu0
        %v2724 = vadd.f32 %v1666, %v2723
        %v2725 = vpop.f32.mrb[0].mxu0
        %v2726 = vadd.f32 %v1668, %v2725
        %v2727 = vpop.f32.mrb[0].mxu0
        %v2728 = vadd.f32 %v1670, %v2727
        %2729 = vmatprep.mubr.bf16.mxu0 0
        %2730 = vmatmul.mubr.bf16.gmra.mrb[0].mxu0 %v1850
        %v2731 = vpop.f32.mrb[0].mxu0
        %v2732 = vadd.f32 %v1674, %v2731
        %v2733 = vpop.f32.mrb[0].mxu0
        %v2734 = vadd.f32 %v1676, %v2733
        %v2735 = vpop.f32.mrb[0].mxu0
        %v2736 = vadd.f32 %v1678, %v2735
        %v2737 = vpop.f32.mrb[0].mxu0
        %v2738 = vadd.f32 %v1680, %v2737
        %2739 = vmatprep.mubr.bf16.mxu0 0
        %2740 = vmatmul.mubr.bf16.gmra.mrb[0].mxu0 %v1851
        %v2741 = vpop.f32.mrb[0].mxu0
        %v2742 = vadd.f32 %v1684, %v2741
        %v2743 = vpop.f32.mrb[0].mxu0
        %v2744 = vadd.f32 %v1686, %v2743
        %v2745 = vpop.f32.mrb[0].mxu0
        %v2746 = vadd.f32 %v1688, %v2745
        %v2747 = vpop.f32.mrb[0].mxu0
        %v2748 = vadd.f32 %v1690, %v2747
        %2749 = vdwg.mxu0
        %v2750 = vld [vmem:[%s374] sm:$0xf]
        %v2752 = vlaneseq
        %v2753 = vshrl.u32 %v2752, 7
        %v2754 = vsub.s32 0, %v2753
        %v2755 = vrot.slane %v2750, %v2754
        %v2756 = vlaneseq
        %v2757 = vshrl.u32 %v2756, 7
        %v2758 = vsub.s32 1, %v2757
        %v2759 = vrot.slane %v2750, %v2758
        %v2760 = vlaneseq
        %v2761 = vshrl.u32 %v2760, 7
        %v2762 = vsub.s32 2, %v2761
        %v2763 = vrot.slane %v2750, %v2762
        %v2764 = vlaneseq
        %v2765 = vshrl.u32 %v2764, 7
        %v2766 = vsub.s32 3, %v2765
        %v2767 = vrot.slane %v2750, %v2766
        %v2772 = vadd.f32 %v2079, %v2755
        %v2773 = vadd.f32 %v2081, %v2759
        %v2774 = vadd.f32 %v2432, %v2763
        %v2775 = vadd.f32 %v2434, %v2767
        %v2776 = vadd.f32 %v2083, %v2755
        %v2777 = vadd.f32 %v2085, %v2759
        %v2778 = vadd.f32 %v2436, %v2763
        %v2779 = vadd.f32 %v2438, %v2767
        %v2780 = vadd.f32 %v2089, %v2755
        %v2781 = vadd.f32 %v2091, %v2759
        %v2782 = vadd.f32 %v2442, %v2763
        %v2783 = vadd.f32 %v2444, %v2767
        %v2784 = vadd.f32 %v2093, %v2755
        %v2785 = vadd.f32 %v2095, %v2759
        %v2786 = vadd.f32 %v2446, %v2763
        %v2787 = vadd.f32 %v2448, %v2767
        %v2788 = vadd.f32 %v2099, %v2755
        %v2789 = vadd.f32 %v2101, %v2759
        %v2790 = vadd.f32 %v2452, %v2763
        %v2791 = vadd.f32 %v2454, %v2767
        %v2792 = vadd.f32 %v2103, %v2755
        %v2793 = vadd.f32 %v2105, %v2759
        %v2794 = vadd.f32 %v2456, %v2763
        %v2795 = vadd.f32 %v2458, %v2767
        %v2796 = vadd.f32 %v2109, %v2755
        %v2797 = vadd.f32 %v2111, %v2759
        %v2798 = vadd.f32 %v2462, %v2763
        %v2799 = vadd.f32 %v2464, %v2767
        %v2800 = vadd.f32 %v2113, %v2755
        %v2801 = vadd.f32 %v2115, %v2759
        %v2802 = vadd.f32 %v2466, %v2763
        %v2803 = vadd.f32 %v2468, %v2767
        %v2804 = vadd.f32 %v2119, %v2755
        %v2805 = vadd.f32 %v2121, %v2759
        %v2806 = vadd.f32 %v2472, %v2763
        %v2807 = vadd.f32 %v2474, %v2767
        %v2808 = vadd.f32 %v2123, %v2755
        %v2809 = vadd.f32 %v2125, %v2759
        %v2810 = vadd.f32 %v2476, %v2763
        %v2811 = vadd.f32 %v2478, %v2767
        %v2812 = vadd.f32 %v2129, %v2755
        %v2813 = vadd.f32 %v2131, %v2759
        %v2814 = vadd.f32 %v2482, %v2763
        %v2815 = vadd.f32 %v2484, %v2767
        %v2816 = vadd.f32 %v2133, %v2755
        %v2817 = vadd.f32 %v2135, %v2759
        %v2818 = vadd.f32 %v2486, %v2763
        %v2819 = vadd.f32 %v2488, %v2767
        %v2820 = vadd.f32 %v2139, %v2755
        %v2821 = vadd.f32 %v2141, %v2759
        %v2822 = vadd.f32 %v2492, %v2763
        %v2823 = vadd.f32 %v2494, %v2767
        %v2824 = vadd.f32 %v2143, %v2755
        %v2825 = vadd.f32 %v2145, %v2759
        %v2826 = vadd.f32 %v2496, %v2763
        %v2827 = vadd.f32 %v2498, %v2767
        %v2828 = vadd.f32 %v2149, %v2755
        %v2829 = vadd.f32 %v2151, %v2759
        %v2830 = vadd.f32 %v2502, %v2763
        %v2831 = vadd.f32 %v2504, %v2767
        %v2832 = vadd.f32 %v2153, %v2755
        %v2833 = vadd.f32 %v2155, %v2759
        %v2834 = vadd.f32 %v2506, %v2763
        %v2835 = vadd.f32 %v2508, %v2767
        %v2836 = vadd.f32 %v2159, %v2755
        %v2837 = vadd.f32 %v2161, %v2759
        %v2838 = vadd.f32 %v2512, %v2763
        %v2839 = vadd.f32 %v2514, %v2767
        %v2840 = vadd.f32 %v2163, %v2755
        %v2841 = vadd.f32 %v2165, %v2759
        %v2842 = vadd.f32 %v2516, %v2763
        %v2843 = vadd.f32 %v2518, %v2767
        %v2844 = vadd.f32 %v2169, %v2755
        %v2845 = vadd.f32 %v2171, %v2759
        %v2846 = vadd.f32 %v2522, %v2763
        %v2847 = vadd.f32 %v2524, %v2767
        %v2848 = vadd.f32 %v2173, %v2755
        %v2849 = vadd.f32 %v2175, %v2759
        %v2850 = vadd.f32 %v2526, %v2763
        %v2851 = vadd.f32 %v2528, %v2767
        %v2852 = vadd.f32 %v2179, %v2755
        %v2853 = vadd.f32 %v2181, %v2759
        %v2854 = vadd.f32 %v2532, %v2763
        %v2855 = vadd.f32 %v2534, %v2767
        %v2856 = vadd.f32 %v2183, %v2755
        %v2857 = vadd.f32 %v2185, %v2759
        %v2858 = vadd.f32 %v2536, %v2763
        %v2859 = vadd.f32 %v2538, %v2767
        %v2860 = vadd.f32 %v2189, %v2755
        %v2861 = vadd.f32 %v2191, %v2759
        %v2862 = vadd.f32 %v2542, %v2763
        %v2863 = vadd.f32 %v2544, %v2767
        %v2864 = vadd.f32 %v2193, %v2755
        %v2865 = vadd.f32 %v2195, %v2759
        %v2866 = vadd.f32 %v2546, %v2763
        %v2867 = vadd.f32 %v2548, %v2767
        %v2868 = vadd.f32 %v2199, %v2755
        %v2869 = vadd.f32 %v2201, %v2759
        %v2870 = vadd.f32 %v2552, %v2763
        %v2871 = vadd.f32 %v2554, %v2767
        %v2872 = vadd.f32 %v2203, %v2755
        %v2873 = vadd.f32 %v2205, %v2759
        %v2874 = vadd.f32 %v2556, %v2763
        %v2875 = vadd.f32 %v2558, %v2767
        %v2876 = vadd.f32 %v2209, %v2755
        %v2877 = vadd.f32 %v2211, %v2759
        %v2878 = vadd.f32 %v2562, %v2763
        %v2879 = vadd.f32 %v2564, %v2767
        %v2880 = vadd.f32 %v2213, %v2755
        %v2881 = vadd.f32 %v2215, %v2759
        %v2882 = vadd.f32 %v2566, %v2763
        %v2883 = vadd.f32 %v2568, %v2767
        %v2884 = vadd.f32 %v2219, %v2755
        %v2885 = vadd.f32 %v2221, %v2759
        %v2886 = vadd.f32 %v2572, %v2763
        %v2887 = vadd.f32 %v2574, %v2767
        %v2888 = vadd.f32 %v2223, %v2755
        %v2889 = vadd.f32 %v2225, %v2759
        %v2890 = vadd.f32 %v2576, %v2763
        %v2891 = vadd.f32 %v2578, %v2767
        %v2892 = vadd.f32 %v2229, %v2755
        %v2893 = vadd.f32 %v2231, %v2759
        %v2894 = vadd.f32 %v2582, %v2763
        %v2895 = vadd.f32 %v2584, %v2767
        %v2896 = vadd.f32 %v2233, %v2755
        %v2897 = vadd.f32 %v2235, %v2759
        %v2898 = vadd.f32 %v2586, %v2763
        %v2899 = vadd.f32 %v2588, %v2767
        %v2900 = vadd.f32 %v2239, %v2755
        %v2901 = vadd.f32 %v2241, %v2759
        %v2902 = vadd.f32 %v2592, %v2763
        %v2903 = vadd.f32 %v2594, %v2767
        %v2904 = vadd.f32 %v2243, %v2755
        %v2905 = vadd.f32 %v2245, %v2759
        %v2906 = vadd.f32 %v2596, %v2763
        %v2907 = vadd.f32 %v2598, %v2767
        %v2908 = vadd.f32 %v2249, %v2755
        %v2909 = vadd.f32 %v2251, %v2759
        %v2910 = vadd.f32 %v2602, %v2763
        %v2911 = vadd.f32 %v2604, %v2767
        %v2912 = vadd.f32 %v2253, %v2755
        %v2913 = vadd.f32 %v2255, %v2759
        %v2914 = vadd.f32 %v2606, %v2763
        %v2915 = vadd.f32 %v2608, %v2767
        %v2916 = vadd.f32 %v2259, %v2755
        %v2917 = vadd.f32 %v2261, %v2759
        %v2918 = vadd.f32 %v2612, %v2763
        %v2919 = vadd.f32 %v2614, %v2767
        %v2920 = vadd.f32 %v2263, %v2755
        %v2921 = vadd.f32 %v2265, %v2759
        %v2922 = vadd.f32 %v2616, %v2763
        %v2923 = vadd.f32 %v2618, %v2767
        %v2924 = vadd.f32 %v2269, %v2755
        %v2925 = vadd.f32 %v2271, %v2759
        %v2926 = vadd.f32 %v2622, %v2763
        %v2927 = vadd.f32 %v2624, %v2767
        %v2928 = vadd.f32 %v2273, %v2755
        %v2929 = vadd.f32 %v2275, %v2759
        %v2930 = vadd.f32 %v2626, %v2763
        %v2931 = vadd.f32 %v2628, %v2767
        %v2932 = vadd.f32 %v2279, %v2755
        %v2933 = vadd.f32 %v2281, %v2759
        %v2934 = vadd.f32 %v2632, %v2763
        %v2935 = vadd.f32 %v2634, %v2767
        %v2936 = vadd.f32 %v2283, %v2755
        %v2937 = vadd.f32 %v2285, %v2759
        %v2938 = vadd.f32 %v2636, %v2763
        %v2939 = vadd.f32 %v2638, %v2767
        %v2940 = vadd.f32 %v2289, %v2755
        %v2941 = vadd.f32 %v2291, %v2759
        %v2942 = vadd.f32 %v2642, %v2763
        %v2943 = vadd.f32 %v2644, %v2767
        %v2944 = vadd.f32 %v2293, %v2755
        %v2945 = vadd.f32 %v2295, %v2759
        %v2946 = vadd.f32 %v2646, %v2763
        %v2947 = vadd.f32 %v2648, %v2767
        %v2948 = vadd.f32 %v2299, %v2755
        %v2949 = vadd.f32 %v2301, %v2759
        %v2950 = vadd.f32 %v2652, %v2763
        %v2951 = vadd.f32 %v2654, %v2767
        %v2952 = vadd.f32 %v2303, %v2755
        %v2953 = vadd.f32 %v2305, %v2759
        %v2954 = vadd.f32 %v2656, %v2763
        %v2955 = vadd.f32 %v2658, %v2767
        %v2956 = vadd.f32 %v2309, %v2755
        %v2957 = vadd.f32 %v2311, %v2759
        %v2958 = vadd.f32 %v2662, %v2763
        %v2959 = vadd.f32 %v2664, %v2767
        %v2960 = vadd.f32 %v2313, %v2755
        %v2961 = vadd.f32 %v2315, %v2759
        %v2962 = vadd.f32 %v2666, %v2763
        %v2963 = vadd.f32 %v2668, %v2767
        %v2964 = vadd.f32 %v2319, %v2755
        %v2965 = vadd.f32 %v2321, %v2759
        %v2966 = vadd.f32 %v2672, %v2763
        %v2967 = vadd.f32 %v2674, %v2767
        %v2968 = vadd.f32 %v2323, %v2755
        %v2969 = vadd.f32 %v2325, %v2759
        %v2970 = vadd.f32 %v2676, %v2763
        %v2971 = vadd.f32 %v2678, %v2767
        %v2972 = vadd.f32 %v2329, %v2755
        %v2973 = vadd.f32 %v2331, %v2759
        %v2974 = vadd.f32 %v2682, %v2763
        %v2975 = vadd.f32 %v2684, %v2767
        %v2976 = vadd.f32 %v2333, %v2755
        %v2977 = vadd.f32 %v2335, %v2759
        %v2978 = vadd.f32 %v2686, %v2763
        %v2979 = vadd.f32 %v2688, %v2767
        %v2980 = vadd.f32 %v2339, %v2755
        %v2981 = vadd.f32 %v2341, %v2759
        %v2982 = vadd.f32 %v2692, %v2763
        %v2983 = vadd.f32 %v2694, %v2767
        %v2984 = vadd.f32 %v2343, %v2755
        %v2985 = vadd.f32 %v2345, %v2759
        %v2986 = vadd.f32 %v2696, %v2763
        %v2987 = vadd.f32 %v2698, %v2767
        %v2988 = vadd.f32 %v2349, %v2755
        %v2989 = vadd.f32 %v2351, %v2759
        %v2990 = vadd.f32 %v2702, %v2763
        %v2991 = vadd.f32 %v2704, %v2767
        %v2992 = vadd.f32 %v2353, %v2755
        %v2993 = vadd.f32 %v2355, %v2759
        %v2994 = vadd.f32 %v2706, %v2763
        %v2995 = vadd.f32 %v2708, %v2767
        %v2996 = vadd.f32 %v2359, %v2755
        %v2997 = vadd.f32 %v2361, %v2759
        %v2998 = vadd.f32 %v2712, %v2763
        %v2999 = vadd.f32 %v2714, %v2767
        %v3000 = vadd.f32 %v2363, %v2755
        %v3001 = vadd.f32 %v2365, %v2759
        %v3002 = vadd.f32 %v2716, %v2763
        %v3003 = vadd.f32 %v2718, %v2767
        %v3004 = vadd.f32 %v2369, %v2755
        %v3005 = vadd.f32 %v2371, %v2759
        %v3006 = vadd.f32 %v2722, %v2763
        %v3007 = vadd.f32 %v2724, %v2767
        %v3008 = vadd.f32 %v2373, %v2755
        %v3009 = vadd.f32 %v2375, %v2759
        %v3010 = vadd.f32 %v2726, %v2763
        %v3011 = vadd.f32 %v2728, %v2767
        %v3012 = vadd.f32 %v2379, %v2755
        %v3013 = vadd.f32 %v2381, %v2759
        %v3014 = vadd.f32 %v2732, %v2763
        %v3015 = vadd.f32 %v2734, %v2767
        %v3016 = vadd.f32 %v2383, %v2755
        %v3017 = vadd.f32 %v2385, %v2759
        %v3018 = vadd.f32 %v2736, %v2763
        %v3019 = vadd.f32 %v2738, %v2767
        %v3020 = vadd.f32 %v2389, %v2755
        %v3021 = vadd.f32 %v2391, %v2759
        %v3022 = vadd.f32 %v2742, %v2763
        %v3023 = vadd.f32 %v2744, %v2767
        %v3024 = vadd.f32 %v2393, %v2755
        %v3025 = vadd.f32 %v2395, %v2759
        %v3026 = vadd.f32 %v2746, %v2763
        %v3027 = vadd.f32 %v2748, %v2767
        %v3028 = vmul.f32 %v2772, 0.5
        %v3029 = vmul.f32 %v2773, 0.5
        %v3030 = vmul.f32 %v2774, 0.5
        %v3031 = vmul.f32 %v2775, 0.5
        %v3032 = vmul.f32 %v2776, 0.5
        %v3033 = vmul.f32 %v2777, 0.5
        %v3034 = vmul.f32 %v2778, 0.5
        %v3035 = vmul.f32 %v2779, 0.5
        %v3036 = vmul.f32 %v2780, 0.5
        %v3037 = vmul.f32 %v2781, 0.5
        %v3038 = vmul.f32 %v2782, 0.5
        %v3039 = vmul.f32 %v2783, 0.5
        %v3040 = vmul.f32 %v2784, 0.5
        %v3041 = vmul.f32 %v2785, 0.5
        %v3042 = vmul.f32 %v2786, 0.5
        %v3043 = vmul.f32 %v2787, 0.5
        %v3044 = vmul.f32 %v2788, 0.5
        %v3045 = vmul.f32 %v2789, 0.5
        %v3046 = vmul.f32 %v2790, 0.5
        %v3047 = vmul.f32 %v2791, 0.5
        %v3048 = vmul.f32 %v2792, 0.5
        %v3049 = vmul.f32 %v2793, 0.5
        %v3050 = vmul.f32 %v2794, 0.5
        %v3051 = vmul.f32 %v2795, 0.5
        %v3052 = vmul.f32 %v2796, 0.5
        %v3053 = vmul.f32 %v2797, 0.5
        %v3054 = vmul.f32 %v2798, 0.5
        %v3055 = vmul.f32 %v2799, 0.5
        %v3056 = vmul.f32 %v2800, 0.5
        %v3057 = vmul.f32 %v2801, 0.5
        %v3058 = vmul.f32 %v2802, 0.5
        %v3059 = vmul.f32 %v2803, 0.5
        %v3060 = vmul.f32 %v2804, 0.5
        %v3061 = vmul.f32 %v2805, 0.5
        %v3062 = vmul.f32 %v2806, 0.5
        %v3063 = vmul.f32 %v2807, 0.5
        %v3064 = vmul.f32 %v2808, 0.5
        %v3065 = vmul.f32 %v2809, 0.5
        %v3066 = vmul.f32 %v2810, 0.5
        %v3067 = vmul.f32 %v2811, 0.5
        %v3068 = vmul.f32 %v2812, 0.5
        %v3069 = vmul.f32 %v2813, 0.5
        %v3070 = vmul.f32 %v2814, 0.5
        %v3071 = vmul.f32 %v2815, 0.5
        %v3072 = vmul.f32 %v2816, 0.5
        %v3073 = vmul.f32 %v2817, 0.5
        %v3074 = vmul.f32 %v2818, 0.5
        %v3075 = vmul.f32 %v2819, 0.5
        %v3076 = vmul.f32 %v2820, 0.5
        %v3077 = vmul.f32 %v2821, 0.5
        %v3078 = vmul.f32 %v2822, 0.5
        %v3079 = vmul.f32 %v2823, 0.5
        %v3080 = vmul.f32 %v2824, 0.5
        %v3081 = vmul.f32 %v2825, 0.5
        %v3082 = vmul.f32 %v2826, 0.5
        %v3083 = vmul.f32 %v2827, 0.5
        %v3084 = vmul.f32 %v2828, 0.5
        %v3085 = vmul.f32 %v2829, 0.5
        %v3086 = vmul.f32 %v2830, 0.5
        %v3087 = vmul.f32 %v2831, 0.5
        %v3088 = vmul.f32 %v2832, 0.5
        %v3089 = vmul.f32 %v2833, 0.5
        %v3090 = vmul.f32 %v2834, 0.5
        %v3091 = vmul.f32 %v2835, 0.5
        %v3092 = vmul.f32 %v2836, 0.5
        %v3093 = vmul.f32 %v2837, 0.5
        %v3094 = vmul.f32 %v2838, 0.5
        %v3095 = vmul.f32 %v2839, 0.5
        %v3096 = vmul.f32 %v2840, 0.5
        %v3097 = vmul.f32 %v2841, 0.5
        %v3098 = vmul.f32 %v2842, 0.5
        %v3099 = vmul.f32 %v2843, 0.5
        %v3100 = vmul.f32 %v2844, 0.5
        %v3101 = vmul.f32 %v2845, 0.5
        %v3102 = vmul.f32 %v2846, 0.5
        %v3103 = vmul.f32 %v2847, 0.5
        %v3104 = vmul.f32 %v2848, 0.5
        %v3105 = vmul.f32 %v2849, 0.5
        %v3106 = vmul.f32 %v2850, 0.5
        %v3107 = vmul.f32 %v2851, 0.5
        %v3108 = vmul.f32 %v2852, 0.5
        %v3109 = vmul.f32 %v2853, 0.5
        %v3110 = vmul.f32 %v2854, 0.5
        %v3111 = vmul.f32 %v2855, 0.5
        %v3112 = vmul.f32 %v2856, 0.5
        %v3113 = vmul.f32 %v2857, 0.5
        %v3114 = vmul.f32 %v2858, 0.5
        %v3115 = vmul.f32 %v2859, 0.5
        %v3116 = vmul.f32 %v2860, 0.5
        %v3117 = vmul.f32 %v2861, 0.5
        %v3118 = vmul.f32 %v2862, 0.5
        %v3119 = vmul.f32 %v2863, 0.5
        %v3120 = vmul.f32 %v2864, 0.5
        %v3121 = vmul.f32 %v2865, 0.5
        %v3122 = vmul.f32 %v2866, 0.5
        %v3123 = vmul.f32 %v2867, 0.5
        %v3124 = vmul.f32 %v2868, 0.5
        %v3125 = vmul.f32 %v2869, 0.5
        %v3126 = vmul.f32 %v2870, 0.5
        %v3127 = vmul.f32 %v2871, 0.5
        %v3128 = vmul.f32 %v2872, 0.5
        %v3129 = vmul.f32 %v2873, 0.5
        %v3130 = vmul.f32 %v2874, 0.5
        %v3131 = vmul.f32 %v2875, 0.5
        %v3132 = vmul.f32 %v2876, 0.5
        %v3133 = vmul.f32 %v2877, 0.5
        %v3134 = vmul.f32 %v2878, 0.5
        %v3135 = vmul.f32 %v2879, 0.5
        %v3136 = vmul.f32 %v2880, 0.5
        %v3137 = vmul.f32 %v2881, 0.5
        %v3138 = vmul.f32 %v2882, 0.5
        %v3139 = vmul.f32 %v2883, 0.5
        %v3140 = vmul.f32 %v2884, 0.5
        %v3141 = vmul.f32 %v2885, 0.5
        %v3142 = vmul.f32 %v2886, 0.5
        %v3143 = vmul.f32 %v2887, 0.5
        %v3144 = vmul.f32 %v2888, 0.5
        %v3145 = vmul.f32 %v2889, 0.5
        %v3146 = vmul.f32 %v2890, 0.5
        %v3147 = vmul.f32 %v2891, 0.5
        %v3148 = vmul.f32 %v2892, 0.5
        %v3149 = vmul.f32 %v2893, 0.5
        %v3150 = vmul.f32 %v2894, 0.5
        %v3151 = vmul.f32 %v2895, 0.5
        %v3152 = vmul.f32 %v2896, 0.5
        %v3153 = vmul.f32 %v2897, 0.5
        %v3154 = vmul.f32 %v2898, 0.5
        %v3155 = vmul.f32 %v2899, 0.5
        %v3156 = vmul.f32 %v2900, 0.5
        %v3157 = vmul.f32 %v2901, 0.5
        %v3158 = vmul.f32 %v2902, 0.5
        %v3159 = vmul.f32 %v2903, 0.5
        %v3160 = vmul.f32 %v2904, 0.5
        %v3161 = vmul.f32 %v2905, 0.5
        %v3162 = vmul.f32 %v2906, 0.5
        %v3163 = vmul.f32 %v2907, 0.5
        %v3164 = vmul.f32 %v2908, 0.5
        %v3165 = vmul.f32 %v2909, 0.5
        %v3166 = vmul.f32 %v2910, 0.5
        %v3167 = vmul.f32 %v2911, 0.5
        %v3168 = vmul.f32 %v2912, 0.5
        %v3169 = vmul.f32 %v2913, 0.5
        %v3170 = vmul.f32 %v2914, 0.5
        %v3171 = vmul.f32 %v2915, 0.5
        %v3172 = vmul.f32 %v2916, 0.5
        %v3173 = vmul.f32 %v2917, 0.5
        %v3174 = vmul.f32 %v2918, 0.5
        %v3175 = vmul.f32 %v2919, 0.5
        %v3176 = vmul.f32 %v2920, 0.5
        %v3177 = vmul.f32 %v2921, 0.5
        %v3178 = vmul.f32 %v2922, 0.5
        %v3179 = vmul.f32 %v2923, 0.5
        %v3180 = vmul.f32 %v2924, 0.5
        %v3181 = vmul.f32 %v2925, 0.5
        %v3182 = vmul.f32 %v2926, 0.5
        %v3183 = vmul.f32 %v2927, 0.5
        %v3184 = vmul.f32 %v2928, 0.5
        %v3185 = vmul.f32 %v2929, 0.5
        %v3186 = vmul.f32 %v2930, 0.5
        %v3187 = vmul.f32 %v2931, 0.5
        %v3188 = vmul.f32 %v2932, 0.5
        %v3189 = vmul.f32 %v2933, 0.5
        %v3190 = vmul.f32 %v2934, 0.5
        %v3191 = vmul.f32 %v2935, 0.5
        %v3192 = vmul.f32 %v2936, 0.5
        %v3193 = vmul.f32 %v2937, 0.5
        %v3194 = vmul.f32 %v2938, 0.5
        %v3195 = vmul.f32 %v2939, 0.5
        %v3196 = vmul.f32 %v2940, 0.5
        %v3197 = vmul.f32 %v2941, 0.5
        %v3198 = vmul.f32 %v2942, 0.5
        %v3199 = vmul.f32 %v2943, 0.5
        %v3200 = vmul.f32 %v2944, 0.5
        %v3201 = vmul.f32 %v2945, 0.5
        %v3202 = vmul.f32 %v2946, 0.5
        %v3203 = vmul.f32 %v2947, 0.5
        %v3204 = vmul.f32 %v2948, 0.5
        %v3205 = vmul.f32 %v2949, 0.5
        %v3206 = vmul.f32 %v2950, 0.5
        %v3207 = vmul.f32 %v2951, 0.5
        %v3208 = vmul.f32 %v2952, 0.5
        %v3209 = vmul.f32 %v2953, 0.5
        %v3210 = vmul.f32 %v2954, 0.5
        %v3211 = vmul.f32 %v2955, 0.5
        %v3212 = vmul.f32 %v2956, 0.5
        %v3213 = vmul.f32 %v2957, 0.5
        %v3214 = vmul.f32 %v2958, 0.5
        %v3215 = vmul.f32 %v2959, 0.5
        %v3216 = vmul.f32 %v2960, 0.5
        %v3217 = vmul.f32 %v2961, 0.5
        %v3218 = vmul.f32 %v2962, 0.5
        %v3219 = vmul.f32 %v2963, 0.5
        %v3220 = vmul.f32 %v2964, 0.5
        %v3221 = vmul.f32 %v2965, 0.5
        %v3222 = vmul.f32 %v2966, 0.5
        %v3223 = vmul.f32 %v2967, 0.5
        %v3224 = vmul.f32 %v2968, 0.5
        %v3225 = vmul.f32 %v2969, 0.5
        %v3226 = vmul.f32 %v2970, 0.5
        %v3227 = vmul.f32 %v2971, 0.5
        %v3228 = vmul.f32 %v2972, 0.5
        %v3229 = vmul.f32 %v2973, 0.5
        %v3230 = vmul.f32 %v2974, 0.5
        %v3231 = vmul.f32 %v2975, 0.5
        %v3232 = vmul.f32 %v2976, 0.5
        %v3233 = vmul.f32 %v2977, 0.5
        %v3234 = vmul.f32 %v2978, 0.5
        %v3235 = vmul.f32 %v2979, 0.5
        %v3236 = vmul.f32 %v2980, 0.5
        %v3237 = vmul.f32 %v2981, 0.5
        %v3238 = vmul.f32 %v2982, 0.5
        %v3239 = vmul.f32 %v2983, 0.5
        %v3240 = vmul.f32 %v2984, 0.5
        %v3241 = vmul.f32 %v2985, 0.5
        %v3242 = vmul.f32 %v2986, 0.5
        %v3243 = vmul.f32 %v2987, 0.5
        %v3244 = vmul.f32 %v2988, 0.5
        %v3245 = vmul.f32 %v2989, 0.5
        %v3246 = vmul.f32 %v2990, 0.5
        %v3247 = vmul.f32 %v2991, 0.5
        %v3248 = vmul.f32 %v2992, 0.5
        %v3249 = vmul.f32 %v2993, 0.5
        %v3250 = vmul.f32 %v2994, 0.5
        %v3251 = vmul.f32 %v2995, 0.5
        %v3252 = vmul.f32 %v2996, 0.5
        %v3253 = vmul.f32 %v2997, 0.5
        %v3254 = vmul.f32 %v2998, 0.5
        %v3255 = vmul.f32 %v2999, 0.5
        %v3256 = vmul.f32 %v3000, 0.5
        %v3257 = vmul.f32 %v3001, 0.5
        %v3258 = vmul.f32 %v3002, 0.5
        %v3259 = vmul.f32 %v3003, 0.5
        %v3260 = vmul.f32 %v3004, 0.5
        %v3261 = vmul.f32 %v3005, 0.5
        %v3262 = vmul.f32 %v3006, 0.5
        %v3263 = vmul.f32 %v3007, 0.5
        %v3264 = vmul.f32 %v3008, 0.5
        %v3265 = vmul.f32 %v3009, 0.5
        %v3266 = vmul.f32 %v3010, 0.5
        %v3267 = vmul.f32 %v3011, 0.5
        %v3268 = vmul.f32 %v3012, 0.5
        %v3269 = vmul.f32 %v3013, 0.5
        %v3270 = vmul.f32 %v3014, 0.5
        %v3271 = vmul.f32 %v3015, 0.5
        %v3272 = vmul.f32 %v3016, 0.5
        %v3273 = vmul.f32 %v3017, 0.5
        %v3274 = vmul.f32 %v3018, 0.5
        %v3275 = vmul.f32 %v3019, 0.5
        %v3276 = vmul.f32 %v3020, 0.5
        %v3277 = vmul.f32 %v3021, 0.5
        %v3278 = vmul.f32 %v3022, 0.5
        %v3279 = vmul.f32 %v3023, 0.5
        %v3280 = vmul.f32 %v3024, 0.5
        %v3281 = vmul.f32 %v3025, 0.5
        %v3282 = vmul.f32 %v3026, 0.5
        %v3283 = vmul.f32 %v3027, 0.5
        %v3284 = vtanh.pop %v3028
        %v3285 = vtanh.pop %v3029
        %v3286 = vtanh.pop %v3030
        %v3287 = vtanh.pop %v3031
        %v3288 = vtanh.pop %v3032
        %v3289 = vtanh.pop %v3033
        %v3290 = vtanh.pop %v3034
        %v3291 = vtanh.pop %v3035
        %v3292 = vtanh.pop %v3036
        %v3293 = vtanh.pop %v3037
        %v3294 = vtanh.pop %v3038
        %v3295 = vtanh.pop %v3039
        %v3296 = vtanh.pop %v3040
        %v3297 = vtanh.pop %v3041
        %v3298 = vtanh.pop %v3042
        %v3299 = vtanh.pop %v3043
        %v3300 = vtanh.pop %v3044
        %v3301 = vtanh.pop %v3045
        %v3302 = vtanh.pop %v3046
        %v3303 = vtanh.pop %v3047
        %v3304 = vtanh.pop %v3048
        %v3305 = vtanh.pop %v3049
        %v3306 = vtanh.pop %v3050
        %v3307 = vtanh.pop %v3051
        %v3308 = vtanh.pop %v3052
        %v3309 = vtanh.pop %v3053
        %v3310 = vtanh.pop %v3054
        %v3311 = vtanh.pop %v3055
        %v3312 = vtanh.pop %v3056
        %v3313 = vtanh.pop %v3057
        %v3314 = vtanh.pop %v3058
        %v3315 = vtanh.pop %v3059
        %v3316 = vtanh.pop %v3060
        %v3317 = vtanh.pop %v3061
        %v3318 = vtanh.pop %v3062
        %v3319 = vtanh.pop %v3063
        %v3320 = vtanh.pop %v3064
        %v3321 = vtanh.pop %v3065
        %v3322 = vtanh.pop %v3066
        %v3323 = vtanh.pop %v3067
        %v3324 = vtanh.pop %v3068
        %v3325 = vtanh.pop %v3069
        %v3326 = vtanh.pop %v3070
        %v3327 = vtanh.pop %v3071
        %v3328 = vtanh.pop %v3072
        %v3329 = vtanh.pop %v3073
        %v3330 = vtanh.pop %v3074
        %v3331 = vtanh.pop %v3075
        %v3332 = vtanh.pop %v3076
        %v3333 = vtanh.pop %v3077
        %v3334 = vtanh.pop %v3078
        %v3335 = vtanh.pop %v3079
        %v3336 = vtanh.pop %v3080
        %v3337 = vtanh.pop %v3081
        %v3338 = vtanh.pop %v3082
        %v3339 = vtanh.pop %v3083
        %v3340 = vtanh.pop %v3084
        %v3341 = vtanh.pop %v3085
        %v3342 = vtanh.pop %v3086
        %v3343 = vtanh.pop %v3087
        %v3344 = vtanh.pop %v3088
        %v3345 = vtanh.pop %v3089
        %v3346 = vtanh.pop %v3090
        %v3347 = vtanh.pop %v3091
        %v3348 = vtanh.pop %v3092
        %v3349 = vtanh.pop %v3093
        %v3350 = vtanh.pop %v3094
        %v3351 = vtanh.pop %v3095
        %v3352 = vtanh.pop %v3096
        %v3353 = vtanh.pop %v3097
        %v3354 = vtanh.pop %v3098
        %v3355 = vtanh.pop %v3099
        %v3356 = vtanh.pop %v3100
        %v3357 = vtanh.pop %v3101
        %v3358 = vtanh.pop %v3102
        %v3359 = vtanh.pop %v3103
        %v3360 = vtanh.pop %v3104
        %v3361 = vtanh.pop %v3105
        %v3362 = vtanh.pop %v3106
        %v3363 = vtanh.pop %v3107
        %v3364 = vtanh.pop %v3108
        %v3365 = vtanh.pop %v3109
        %v3366 = vtanh.pop %v3110
        %v3367 = vtanh.pop %v3111
        %v3368 = vtanh.pop %v3112
        %v3369 = vtanh.pop %v3113
        %v3370 = vtanh.pop %v3114
        %v3371 = vtanh.pop %v3115
        %v3372 = vtanh.pop %v3116
        %v3373 = vtanh.pop %v3117
        %v3374 = vtanh.pop %v3118
        %v3375 = vtanh.pop %v3119
        %v3376 = vtanh.pop %v3120
        %v3377 = vtanh.pop %v3121
        %v3378 = vtanh.pop %v3122
        %v3379 = vtanh.pop %v3123
        %v3380 = vtanh.pop %v3124
        %v3381 = vtanh.pop %v3125
        %v3382 = vtanh.pop %v3126
        %v3383 = vtanh.pop %v3127
        %v3384 = vtanh.pop %v3128
        %v3385 = vtanh.pop %v3129
        %v3386 = vtanh.pop %v3130
        %v3387 = vtanh.pop %v3131
        %v3388 = vtanh.pop %v3132
        %v3389 = vtanh.pop %v3133
        %v3390 = vtanh.pop %v3134
        %v3391 = vtanh.pop %v3135
        %v3392 = vtanh.pop %v3136
        %v3393 = vtanh.pop %v3137
        %v3394 = vtanh.pop %v3138
        %v3395 = vtanh.pop %v3139
        %v3396 = vtanh.pop %v3140
        %v3397 = vtanh.pop %v3141
        %v3398 = vtanh.pop %v3142
        %v3399 = vtanh.pop %v3143
        %v3400 = vtanh.pop %v3144
        %v3401 = vtanh.pop %v3145
        %v3402 = vtanh.pop %v3146
        %v3403 = vtanh.pop %v3147
        %v3404 = vtanh.pop %v3148
        %v3405 = vtanh.pop %v3149
        %v3406 = vtanh.pop %v3150
        %v3407 = vtanh.pop %v3151
        %v3408 = vtanh.pop %v3152
        %v3409 = vtanh.pop %v3153
        %v3410 = vtanh.pop %v3154
        %v3411 = vtanh.pop %v3155
        %v3412 = vtanh.pop %v3156
        %v3413 = vtanh.pop %v3157
        %v3414 = vtanh.pop %v3158
        %v3415 = vtanh.pop %v3159
        %v3416 = vtanh.pop %v3160
        %v3417 = vtanh.pop %v3161
        %v3418 = vtanh.pop %v3162
        %v3419 = vtanh.pop %v3163
        %v3420 = vtanh.pop %v3164
        %v3421 = vtanh.pop %v3165
        %v3422 = vtanh.pop %v3166
        %v3423 = vtanh.pop %v3167
        %v3424 = vtanh.pop %v3168
        %v3425 = vtanh.pop %v3169
        %v3426 = vtanh.pop %v3170
        %v3427 = vtanh.pop %v3171
        %v3428 = vtanh.pop %v3172
        %v3429 = vtanh.pop %v3173
        %v3430 = vtanh.pop %v3174
        %v3431 = vtanh.pop %v3175
        %v3432 = vtanh.pop %v3176
        %v3433 = vtanh.pop %v3177
        %v3434 = vtanh.pop %v3178
        %v3435 = vtanh.pop %v3179
        %v3436 = vtanh.pop %v3180
        %v3437 = vtanh.pop %v3181
        %v3438 = vtanh.pop %v3182
        %v3439 = vtanh.pop %v3183
        %v3440 = vtanh.pop %v3184
        %v3441 = vtanh.pop %v3185
        %v3442 = vtanh.pop %v3186
        %v3443 = vtanh.pop %v3187
        %v3444 = vtanh.pop %v3188
        %v3445 = vtanh.pop %v3189
        %v3446 = vtanh.pop %v3190
        %v3447 = vtanh.pop %v3191
        %v3448 = vtanh.pop %v3192
        %v3449 = vtanh.pop %v3193
        %v3450 = vtanh.pop %v3194
        %v3451 = vtanh.pop %v3195
        %v3452 = vtanh.pop %v3196
        %v3453 = vtanh.pop %v3197
        %v3454 = vtanh.pop %v3198
        %v3455 = vtanh.pop %v3199
        %v3456 = vtanh.pop %v3200
        %v3457 = vtanh.pop %v3201
        %v3458 = vtanh.pop %v3202
        %v3459 = vtanh.pop %v3203
        %v3460 = vtanh.pop %v3204
        %v3461 = vtanh.pop %v3205
        %v3462 = vtanh.pop %v3206
        %v3463 = vtanh.pop %v3207
        %v3464 = vtanh.pop %v3208
        %v3465 = vtanh.pop %v3209
        %v3466 = vtanh.pop %v3210
        %v3467 = vtanh.pop %v3211
        %v3468 = vtanh.pop %v3212
        %v3469 = vtanh.pop %v3213
        %v3470 = vtanh.pop %v3214
        %v3471 = vtanh.pop %v3215
        %v3472 = vtanh.pop %v3216
        %v3473 = vtanh.pop %v3217
        %v3474 = vtanh.pop %v3218
        %v3475 = vtanh.pop %v3219
        %v3476 = vtanh.pop %v3220
        %v3477 = vtanh.pop %v3221
        %v3478 = vtanh.pop %v3222
        %v3479 = vtanh.pop %v3223
        %v3480 = vtanh.pop %v3224
        %v3481 = vtanh.pop %v3225
        %v3482 = vtanh.pop %v3226
        %v3483 = vtanh.pop %v3227
        %v3484 = vtanh.pop %v3228
        %v3485 = vtanh.pop %v3229
        %v3486 = vtanh.pop %v3230
        %v3487 = vtanh.pop %v3231
        %v3488 = vtanh.pop %v3232
        %v3489 = vtanh.pop %v3233
        %v3490 = vtanh.pop %v3234
        %v3491 = vtanh.pop %v3235
        %v3492 = vtanh.pop %v3236
        %v3493 = vtanh.pop %v3237
        %v3494 = vtanh.pop %v3238
        %v3495 = vtanh.pop %v3239
        %v3496 = vtanh.pop %v3240
        %v3497 = vtanh.pop %v3241
        %v3498 = vtanh.pop %v3242
        %v3499 = vtanh.pop %v3243
        %v3500 = vtanh.pop %v3244
        %v3501 = vtanh.pop %v3245
        %v3502 = vtanh.pop %v3246
        %v3503 = vtanh.pop %v3247
        %v3504 = vtanh.pop %v3248
        %v3505 = vtanh.pop %v3249
        %v3506 = vtanh.pop %v3250
        %v3507 = vtanh.pop %v3251
        %v3508 = vtanh.pop %v3252
        %v3509 = vtanh.pop %v3253
        %v3510 = vtanh.pop %v3254
        %v3511 = vtanh.pop %v3255
        %v3512 = vtanh.pop %v3256
        %v3513 = vtanh.pop %v3257
        %v3514 = vtanh.pop %v3258
        %v3515 = vtanh.pop %v3259
        %v3516 = vtanh.pop %v3260
        %v3517 = vtanh.pop %v3261
        %v3518 = vtanh.pop %v3262
        %v3519 = vtanh.pop %v3263
        %v3520 = vtanh.pop %v3264
        %v3521 = vtanh.pop %v3265
        %v3522 = vtanh.pop %v3266
        %v3523 = vtanh.pop %v3267
        %v3524 = vtanh.pop %v3268
        %v3525 = vtanh.pop %v3269
        %v3526 = vtanh.pop %v3270
        %v3527 = vtanh.pop %v3271
        %v3528 = vtanh.pop %v3272
        %v3529 = vtanh.pop %v3273
        %v3530 = vtanh.pop %v3274
        %v3531 = vtanh.pop %v3275
        %v3532 = vtanh.pop %v3276
        %v3533 = vtanh.pop %v3277
        %v3534 = vtanh.pop %v3278
        %v3535 = vtanh.pop %v3279
        %v3536 = vtanh.pop %v3280
        %v3537 = vtanh.pop %v3281
        %v3538 = vtanh.pop %v3282
        %v3539 = vtanh.pop %v3283
        %v3540 = vadd.f32 %v3284, 1.0
        %v3541 = vadd.f32 %v3285, 1.0
        %v3542 = vadd.f32 %v3286, 1.0
        %v3543 = vadd.f32 %v3287, 1.0
        %v3544 = vadd.f32 %v3288, 1.0
        %v3545 = vadd.f32 %v3289, 1.0
        %v3546 = vadd.f32 %v3290, 1.0
        %v3547 = vadd.f32 %v3291, 1.0
        %v3548 = vadd.f32 %v3292, 1.0
        %v3549 = vadd.f32 %v3293, 1.0
        %v3550 = vadd.f32 %v3294, 1.0
        %v3551 = vadd.f32 %v3295, 1.0
        %v3552 = vadd.f32 %v3296, 1.0
        %v3553 = vadd.f32 %v3297, 1.0
        %v3554 = vadd.f32 %v3298, 1.0
        %v3555 = vadd.f32 %v3299, 1.0
        %v3556 = vadd.f32 %v3300, 1.0
        %v3557 = vadd.f32 %v3301, 1.0
        %v3558 = vadd.f32 %v3302, 1.0
        %v3559 = vadd.f32 %v3303, 1.0
        %v3560 = vadd.f32 %v3304, 1.0
        %v3561 = vadd.f32 %v3305, 1.0
        %v3562 = vadd.f32 %v3306, 1.0
        %v3563 = vadd.f32 %v3307, 1.0
        %v3564 = vadd.f32 %v3308, 1.0
        %v3565 = vadd.f32 %v3309, 1.0
        %v3566 = vadd.f32 %v3310, 1.0
        %v3567 = vadd.f32 %v3311, 1.0
        %v3568 = vadd.f32 %v3312, 1.0
        %v3569 = vadd.f32 %v3313, 1.0
        %v3570 = vadd.f32 %v3314, 1.0
        %v3571 = vadd.f32 %v3315, 1.0
        %v3572 = vadd.f32 %v3316, 1.0
        %v3573 = vadd.f32 %v3317, 1.0
        %v3574 = vadd.f32 %v3318, 1.0
        %v3575 = vadd.f32 %v3319, 1.0
        %v3576 = vadd.f32 %v3320, 1.0
        %v3577 = vadd.f32 %v3321, 1.0
        %v3578 = vadd.f32 %v3322, 1.0
        %v3579 = vadd.f32 %v3323, 1.0
        %v3580 = vadd.f32 %v3324, 1.0
        %v3581 = vadd.f32 %v3325, 1.0
        %v3582 = vadd.f32 %v3326, 1.0
        %v3583 = vadd.f32 %v3327, 1.0
        %v3584 = vadd.f32 %v3328, 1.0
        %v3585 = vadd.f32 %v3329, 1.0
        %v3586 = vadd.f32 %v3330, 1.0
        %v3587 = vadd.f32 %v3331, 1.0
        %v3588 = vadd.f32 %v3332, 1.0
        %v3589 = vadd.f32 %v3333, 1.0
        %v3590 = vadd.f32 %v3334, 1.0
        %v3591 = vadd.f32 %v3335, 1.0
        %v3592 = vadd.f32 %v3336, 1.0
        %v3593 = vadd.f32 %v3337, 1.0
        %v3594 = vadd.f32 %v3338, 1.0
        %v3595 = vadd.f32 %v3339, 1.0
        %v3596 = vadd.f32 %v3340, 1.0
        %v3597 = vadd.f32 %v3341, 1.0
        %v3598 = vadd.f32 %v3342, 1.0
        %v3599 = vadd.f32 %v3343, 1.0
        %v3600 = vadd.f32 %v3344, 1.0
        %v3601 = vadd.f32 %v3345, 1.0
        %v3602 = vadd.f32 %v3346, 1.0
        %v3603 = vadd.f32 %v3347, 1.0
        %v3604 = vadd.f32 %v3348, 1.0
        %v3605 = vadd.f32 %v3349, 1.0
        %v3606 = vadd.f32 %v3350, 1.0
        %v3607 = vadd.f32 %v3351, 1.0
        %v3608 = vadd.f32 %v3352, 1.0
        %v3609 = vadd.f32 %v3353, 1.0
        %v3610 = vadd.f32 %v3354, 1.0
        %v3611 = vadd.f32 %v3355, 1.0
        %v3612 = vadd.f32 %v3356, 1.0
        %v3613 = vadd.f32 %v3357, 1.0
        %v3614 = vadd.f32 %v3358, 1.0
        %v3615 = vadd.f32 %v3359, 1.0
        %v3616 = vadd.f32 %v3360, 1.0
        %v3617 = vadd.f32 %v3361, 1.0
        %v3618 = vadd.f32 %v3362, 1.0
        %v3619 = vadd.f32 %v3363, 1.0
        %v3620 = vadd.f32 %v3364, 1.0
        %v3621 = vadd.f32 %v3365, 1.0
        %v3622 = vadd.f32 %v3366, 1.0
        %v3623 = vadd.f32 %v3367, 1.0
        %v3624 = vadd.f32 %v3368, 1.0
        %v3625 = vadd.f32 %v3369, 1.0
        %v3626 = vadd.f32 %v3370, 1.0
        %v3627 = vadd.f32 %v3371, 1.0
        %v3628 = vadd.f32 %v3372, 1.0
        %v3629 = vadd.f32 %v3373, 1.0
        %v3630 = vadd.f32 %v3374, 1.0
        %v3631 = vadd.f32 %v3375, 1.0
        %v3632 = vadd.f32 %v3376, 1.0
        %v3633 = vadd.f32 %v3377, 1.0
        %v3634 = vadd.f32 %v3378, 1.0
        %v3635 = vadd.f32 %v3379, 1.0
        %v3636 = vadd.f32 %v3380, 1.0
        %v3637 = vadd.f32 %v3381, 1.0
        %v3638 = vadd.f32 %v3382, 1.0
        %v3639 = vadd.f32 %v3383, 1.0
        %v3640 = vadd.f32 %v3384, 1.0
        %v3641 = vadd.f32 %v3385, 1.0
        %v3642 = vadd.f32 %v3386, 1.0
        %v3643 = vadd.f32 %v3387, 1.0
        %v3644 = vadd.f32 %v3388, 1.0
        %v3645 = vadd.f32 %v3389, 1.0
        %v3646 = vadd.f32 %v3390, 1.0
        %v3647 = vadd.f32 %v3391, 1.0
        %v3648 = vadd.f32 %v3392, 1.0
        %v3649 = vadd.f32 %v3393, 1.0
        %v3650 = vadd.f32 %v3394, 1.0
        %v3651 = vadd.f32 %v3395, 1.0
        %v3652 = vadd.f32 %v3396, 1.0
        %v3653 = vadd.f32 %v3397, 1.0
        %v3654 = vadd.f32 %v3398, 1.0
        %v3655 = vadd.f32 %v3399, 1.0
        %v3656 = vadd.f32 %v3400, 1.0
        %v3657 = vadd.f32 %v3401, 1.0
        %v3658 = vadd.f32 %v3402, 1.0
        %v3659 = vadd.f32 %v3403, 1.0
        %v3660 = vadd.f32 %v3404, 1.0
        %v3661 = vadd.f32 %v3405, 1.0
        %v3662 = vadd.f32 %v3406, 1.0
        %v3663 = vadd.f32 %v3407, 1.0
        %v3664 = vadd.f32 %v3408, 1.0
        %v3665 = vadd.f32 %v3409, 1.0
        %v3666 = vadd.f32 %v3410, 1.0
        %v3667 = vadd.f32 %v3411, 1.0
        %v3668 = vadd.f32 %v3412, 1.0
        %v3669 = vadd.f32 %v3413, 1.0
        %v3670 = vadd.f32 %v3414, 1.0
        %v3671 = vadd.f32 %v3415, 1.0
        %v3672 = vadd.f32 %v3416, 1.0
        %v3673 = vadd.f32 %v3417, 1.0
        %v3674 = vadd.f32 %v3418, 1.0
        %v3675 = vadd.f32 %v3419, 1.0
        %v3676 = vadd.f32 %v3420, 1.0
        %v3677 = vadd.f32 %v3421, 1.0
        %v3678 = vadd.f32 %v3422, 1.0
        %v3679 = vadd.f32 %v3423, 1.0
        %v3680 = vadd.f32 %v3424, 1.0
        %v3681 = vadd.f32 %v3425, 1.0
        %v3682 = vadd.f32 %v3426, 1.0
        %v3683 = vadd.f32 %v3427, 1.0
        %v3684 = vadd.f32 %v3428, 1.0
        %v3685 = vadd.f32 %v3429, 1.0
        %v3686 = vadd.f32 %v3430, 1.0
        %v3687 = vadd.f32 %v3431, 1.0
        %v3688 = vadd.f32 %v3432, 1.0
        %v3689 = vadd.f32 %v3433, 1.0
        %v3690 = vadd.f32 %v3434, 1.0
        %v3691 = vadd.f32 %v3435, 1.0
        %v3692 = vadd.f32 %v3436, 1.0
        %v3693 = vadd.f32 %v3437, 1.0
        %v3694 = vadd.f32 %v3438, 1.0
        %v3695 = vadd.f32 %v3439, 1.0
        %v3696 = vadd.f32 %v3440, 1.0
        %v3697 = vadd.f32 %v3441, 1.0
        %v3698 = vadd.f32 %v3442, 1.0
        %v3699 = vadd.f32 %v3443, 1.0
        %v3700 = vadd.f32 %v3444, 1.0
        %v3701 = vadd.f32 %v3445, 1.0
        %v3702 = vadd.f32 %v3446, 1.0
        %v3703 = vadd.f32 %v3447, 1.0
        %v3704 = vadd.f32 %v3448, 1.0
        %v3705 = vadd.f32 %v3449, 1.0
        %v3706 = vadd.f32 %v3450, 1.0
        %v3707 = vadd.f32 %v3451, 1.0
        %v3708 = vadd.f32 %v3452, 1.0
        %v3709 = vadd.f32 %v3453, 1.0
        %v3710 = vadd.f32 %v3454, 1.0
        %v3711 = vadd.f32 %v3455, 1.0
        %v3712 = vadd.f32 %v3456, 1.0
        %v3713 = vadd.f32 %v3457, 1.0
        %v3714 = vadd.f32 %v3458, 1.0
        %v3715 = vadd.f32 %v3459, 1.0
        %v3716 = vadd.f32 %v3460, 1.0
        %v3717 = vadd.f32 %v3461, 1.0
        %v3718 = vadd.f32 %v3462, 1.0
        %v3719 = vadd.f32 %v3463, 1.0
        %v3720 = vadd.f32 %v3464, 1.0
        %v3721 = vadd.f32 %v3465, 1.0
        %v3722 = vadd.f32 %v3466, 1.0
        %v3723 = vadd.f32 %v3467, 1.0
        %v3724 = vadd.f32 %v3468, 1.0
        %v3725 = vadd.f32 %v3469, 1.0
        %v3726 = vadd.f32 %v3470, 1.0
        %v3727 = vadd.f32 %v3471, 1.0
        %v3728 = vadd.f32 %v3472, 1.0
        %v3729 = vadd.f32 %v3473, 1.0
        %v3730 = vadd.f32 %v3474, 1.0
        %v3731 = vadd.f32 %v3475, 1.0
        %v3732 = vadd.f32 %v3476, 1.0
        %v3733 = vadd.f32 %v3477, 1.0
        %v3734 = vadd.f32 %v3478, 1.0
        %v3735 = vadd.f32 %v3479, 1.0
        %v3736 = vadd.f32 %v3480, 1.0
        %v3737 = vadd.f32 %v3481, 1.0
        %v3738 = vadd.f32 %v3482, 1.0
        %v3739 = vadd.f32 %v3483, 1.0
        %v3740 = vadd.f32 %v3484, 1.0
        %v3741 = vadd.f32 %v3485, 1.0
        %v3742 = vadd.f32 %v3486, 1.0
        %v3743 = vadd.f32 %v3487, 1.0
        %v3744 = vadd.f32 %v3488, 1.0
        %v3745 = vadd.f32 %v3489, 1.0
        %v3746 = vadd.f32 %v3490, 1.0
        %v3747 = vadd.f32 %v3491, 1.0
        %v3748 = vadd.f32 %v3492, 1.0
        %v3749 = vadd.f32 %v3493, 1.0
        %v3750 = vadd.f32 %v3494, 1.0
        %v3751 = vadd.f32 %v3495, 1.0
        %v3752 = vadd.f32 %v3496, 1.0
        %v3753 = vadd.f32 %v3497, 1.0
        %v3754 = vadd.f32 %v3498, 1.0
        %v3755 = vadd.f32 %v3499, 1.0
        %v3756 = vadd.f32 %v3500, 1.0
        %v3757 = vadd.f32 %v3501, 1.0
        %v3758 = vadd.f32 %v3502, 1.0
        %v3759 = vadd.f32 %v3503, 1.0
        %v3760 = vadd.f32 %v3504, 1.0
        %v3761 = vadd.f32 %v3505, 1.0
        %v3762 = vadd.f32 %v3506, 1.0
        %v3763 = vadd.f32 %v3507, 1.0
        %v3764 = vadd.f32 %v3508, 1.0
        %v3765 = vadd.f32 %v3509, 1.0
        %v3766 = vadd.f32 %v3510, 1.0
        %v3767 = vadd.f32 %v3511, 1.0
        %v3768 = vadd.f32 %v3512, 1.0
        %v3769 = vadd.f32 %v3513, 1.0
        %v3770 = vadd.f32 %v3514, 1.0
        %v3771 = vadd.f32 %v3515, 1.0
        %v3772 = vadd.f32 %v3516, 1.0
        %v3773 = vadd.f32 %v3517, 1.0
        %v3774 = vadd.f32 %v3518, 1.0
        %v3775 = vadd.f32 %v3519, 1.0
        %v3776 = vadd.f32 %v3520, 1.0
        %v3777 = vadd.f32 %v3521, 1.0
        %v3778 = vadd.f32 %v3522, 1.0
        %v3779 = vadd.f32 %v3523, 1.0
        %v3780 = vadd.f32 %v3524, 1.0
        %v3781 = vadd.f32 %v3525, 1.0
        %v3782 = vadd.f32 %v3526, 1.0
        %v3783 = vadd.f32 %v3527, 1.0
        %v3784 = vadd.f32 %v3528, 1.0
        %v3785 = vadd.f32 %v3529, 1.0
        %v3786 = vadd.f32 %v3530, 1.0
        %v3787 = vadd.f32 %v3531, 1.0
        %v3788 = vadd.f32 %v3532, 1.0
        %v3789 = vadd.f32 %v3533, 1.0
        %v3790 = vadd.f32 %v3534, 1.0
        %v3791 = vadd.f32 %v3535, 1.0
        %v3792 = vadd.f32 %v3536, 1.0
        %v3793 = vadd.f32 %v3537, 1.0
        %v3794 = vadd.f32 %v3538, 1.0
        %v3795 = vadd.f32 %v3539, 1.0
        %v3796 = vmul.f32 %v3028, %v3540
        %v3797 = vmul.f32 %v3029, %v3541
        %v3798 = vmul.f32 %v3030, %v3542
        %v3799 = vmul.f32 %v3031, %v3543
        %v3800 = vmul.f32 %v3032, %v3544
        %v3801 = vmul.f32 %v3033, %v3545
        %v3802 = vmul.f32 %v3034, %v3546
        %v3803 = vmul.f32 %v3035, %v3547
        %v3804 = vmul.f32 %v3036, %v3548
        %v3805 = vmul.f32 %v3037, %v3549
        %v3806 = vmul.f32 %v3038, %v3550
        %v3807 = vmul.f32 %v3039, %v3551
        %v3808 = vmul.f32 %v3040, %v3552
        %v3809 = vmul.f32 %v3041, %v3553
        %v3810 = vmul.f32 %v3042, %v3554
        %v3811 = vmul.f32 %v3043, %v3555
        %v3812 = vmul.f32 %v3044, %v3556
        %v3813 = vmul.f32 %v3045, %v3557
        %v3814 = vmul.f32 %v3046, %v3558
        %v3815 = vmul.f32 %v3047, %v3559
        %v3816 = vmul.f32 %v3048, %v3560
        %v3817 = vmul.f32 %v3049, %v3561
        %v3818 = vmul.f32 %v3050, %v3562
        %v3819 = vmul.f32 %v3051, %v3563
        %v3820 = vmul.f32 %v3052, %v3564
        %v3821 = vmul.f32 %v3053, %v3565
        %v3822 = vmul.f32 %v3054, %v3566
        %v3823 = vmul.f32 %v3055, %v3567
        %v3824 = vmul.f32 %v3056, %v3568
        %v3825 = vmul.f32 %v3057, %v3569
        %v3826 = vmul.f32 %v3058, %v3570
        %v3827 = vmul.f32 %v3059, %v3571
        %v3828 = vmul.f32 %v3060, %v3572
        %v3829 = vmul.f32 %v3061, %v3573
        %v3830 = vmul.f32 %v3062, %v3574
        %v3831 = vmul.f32 %v3063, %v3575
        %v3832 = vmul.f32 %v3064, %v3576
        %v3833 = vmul.f32 %v3065, %v3577
        %v3834 = vmul.f32 %v3066, %v3578
        %v3835 = vmul.f32 %v3067, %v3579
        %v3836 = vmul.f32 %v3068, %v3580
        %v3837 = vmul.f32 %v3069, %v3581
        %v3838 = vmul.f32 %v3070, %v3582
        %v3839 = vmul.f32 %v3071, %v3583
        %v3840 = vmul.f32 %v3072, %v3584
        %v3841 = vmul.f32 %v3073, %v3585
        %v3842 = vmul.f32 %v3074, %v3586
        %v3843 = vmul.f32 %v3075, %v3587
        %v3844 = vmul.f32 %v3076, %v3588
        %v3845 = vmul.f32 %v3077, %v3589
        %v3846 = vmul.f32 %v3078, %v3590
        %v3847 = vmul.f32 %v3079, %v3591
        %v3848 = vmul.f32 %v3080, %v3592
        %v3849 = vmul.f32 %v3081, %v3593
        %v3850 = vmul.f32 %v3082, %v3594
        %v3851 = vmul.f32 %v3083, %v3595
        %v3852 = vmul.f32 %v3084, %v3596
        %v3853 = vmul.f32 %v3085, %v3597
        %v3854 = vmul.f32 %v3086, %v3598
        %v3855 = vmul.f32 %v3087, %v3599
        %v3856 = vmul.f32 %v3088, %v3600
        %v3857 = vmul.f32 %v3089, %v3601
        %v3858 = vmul.f32 %v3090, %v3602
        %v3859 = vmul.f32 %v3091, %v3603
        %v3860 = vmul.f32 %v3092, %v3604
        %v3861 = vmul.f32 %v3093, %v3605
        %v3862 = vmul.f32 %v3094, %v3606
        %v3863 = vmul.f32 %v3095, %v3607
        %v3864 = vmul.f32 %v3096, %v3608
        %v3865 = vmul.f32 %v3097, %v3609
        %v3866 = vmul.f32 %v3098, %v3610
        %v3867 = vmul.f32 %v3099, %v3611
        %v3868 = vmul.f32 %v3100, %v3612
        %v3869 = vmul.f32 %v3101, %v3613
        %v3870 = vmul.f32 %v3102, %v3614
        %v3871 = vmul.f32 %v3103, %v3615
        %v3872 = vmul.f32 %v3104, %v3616
        %v3873 = vmul.f32 %v3105, %v3617
        %v3874 = vmul.f32 %v3106, %v3618
        %v3875 = vmul.f32 %v3107, %v3619
        %v3876 = vmul.f32 %v3108, %v3620
        %v3877 = vmul.f32 %v3109, %v3621
        %v3878 = vmul.f32 %v3110, %v3622
        %v3879 = vmul.f32 %v3111, %v3623
        %v3880 = vmul.f32 %v3112, %v3624
        %v3881 = vmul.f32 %v3113, %v3625
        %v3882 = vmul.f32 %v3114, %v3626
        %v3883 = vmul.f32 %v3115, %v3627
        %v3884 = vmul.f32 %v3116, %v3628
        %v3885 = vmul.f32 %v3117, %v3629
        %v3886 = vmul.f32 %v3118, %v3630
        %v3887 = vmul.f32 %v3119, %v3631
        %v3888 = vmul.f32 %v3120, %v3632
        %v3889 = vmul.f32 %v3121, %v3633
        %v3890 = vmul.f32 %v3122, %v3634
        %v3891 = vmul.f32 %v3123, %v3635
        %v3892 = vmul.f32 %v3124, %v3636
        %v3893 = vmul.f32 %v3125, %v3637
        %v3894 = vmul.f32 %v3126, %v3638
        %v3895 = vmul.f32 %v3127, %v3639
        %v3896 = vmul.f32 %v3128, %v3640
        %v3897 = vmul.f32 %v3129, %v3641
        %v3898 = vmul.f32 %v3130, %v3642
        %v3899 = vmul.f32 %v3131, %v3643
        %v3900 = vmul.f32 %v3132, %v3644
        %v3901 = vmul.f32 %v3133, %v3645
        %v3902 = vmul.f32 %v3134, %v3646
        %v3903 = vmul.f32 %v3135, %v3647
        %v3904 = vmul.f32 %v3136, %v3648
        %v3905 = vmul.f32 %v3137, %v3649
        %v3906 = vmul.f32 %v3138, %v3650
        %v3907 = vmul.f32 %v3139, %v3651
        %v3908 = vmul.f32 %v3140, %v3652
        %v3909 = vmul.f32 %v3141, %v3653
        %v3910 = vmul.f32 %v3142, %v3654
        %v3911 = vmul.f32 %v3143, %v3655
        %v3912 = vmul.f32 %v3144, %v3656
        %v3913 = vmul.f32 %v3145, %v3657
        %v3914 = vmul.f32 %v3146, %v3658
        %v3915 = vmul.f32 %v3147, %v3659
        %v3916 = vmul.f32 %v3148, %v3660
        %v3917 = vmul.f32 %v3149, %v3661
        %v3918 = vmul.f32 %v3150, %v3662
        %v3919 = vmul.f32 %v3151, %v3663
        %v3920 = vmul.f32 %v3152, %v3664
        %v3921 = vmul.f32 %v3153, %v3665
        %v3922 = vmul.f32 %v3154, %v3666
        %v3923 = vmul.f32 %v3155, %v3667
        %v3924 = vmul.f32 %v3156, %v3668
        %v3925 = vmul.f32 %v3157, %v3669
        %v3926 = vmul.f32 %v3158, %v3670
        %v3927 = vmul.f32 %v3159, %v3671
        %v3928 = vmul.f32 %v3160, %v3672
        %v3929 = vmul.f32 %v3161, %v3673
        %v3930 = vmul.f32 %v3162, %v3674
        %v3931 = vmul.f32 %v3163, %v3675
        %v3932 = vmul.f32 %v3164, %v3676
        %v3933 = vmul.f32 %v3165, %v3677
        %v3934 = vmul.f32 %v3166, %v3678
        %v3935 = vmul.f32 %v3167, %v3679
        %v3936 = vmul.f32 %v3168, %v3680
        %v3937 = vmul.f32 %v3169, %v3681
        %v3938 = vmul.f32 %v3170, %v3682
        %v3939 = vmul.f32 %v3171, %v3683
        %v3940 = vmul.f32 %v3172, %v3684
        %v3941 = vmul.f32 %v3173, %v3685
        %v3942 = vmul.f32 %v3174, %v3686
        %v3943 = vmul.f32 %v3175, %v3687
        %v3944 = vmul.f32 %v3176, %v3688
        %v3945 = vmul.f32 %v3177, %v3689
        %v3946 = vmul.f32 %v3178, %v3690
        %v3947 = vmul.f32 %v3179, %v3691
        %v3948 = vmul.f32 %v3180, %v3692
        %v3949 = vmul.f32 %v3181, %v3693
        %v3950 = vmul.f32 %v3182, %v3694
        %v3951 = vmul.f32 %v3183, %v3695
        %v3952 = vmul.f32 %v3184, %v3696
        %v3953 = vmul.f32 %v3185, %v3697
        %v3954 = vmul.f32 %v3186, %v3698
        %v3955 = vmul.f32 %v3187, %v3699
        %v3956 = vmul.f32 %v3188, %v3700
        %v3957 = vmul.f32 %v3189, %v3701
        %v3958 = vmul.f32 %v3190, %v3702
        %v3959 = vmul.f32 %v3191, %v3703
        %v3960 = vmul.f32 %v3192, %v3704
        %v3961 = vmul.f32 %v3193, %v3705
        %v3962 = vmul.f32 %v3194, %v3706
        %v3963 = vmul.f32 %v3195, %v3707
        %v3964 = vmul.f32 %v3196, %v3708
        %v3965 = vmul.f32 %v3197, %v3709
        %v3966 = vmul.f32 %v3198, %v3710
        %v3967 = vmul.f32 %v3199, %v3711
        %v3968 = vmul.f32 %v3200, %v3712
        %v3969 = vmul.f32 %v3201, %v3713
        %v3970 = vmul.f32 %v3202, %v3714
        %v3971 = vmul.f32 %v3203, %v3715
        %v3972 = vmul.f32 %v3204, %v3716
        %v3973 = vmul.f32 %v3205, %v3717
        %v3974 = vmul.f32 %v3206, %v3718
        %v3975 = vmul.f32 %v3207, %v3719
        %v3976 = vmul.f32 %v3208, %v3720
        %v3977 = vmul.f32 %v3209, %v3721
        %v3978 = vmul.f32 %v3210, %v3722
        %v3979 = vmul.f32 %v3211, %v3723
        %v3980 = vmul.f32 %v3212, %v3724
        %v3981 = vmul.f32 %v3213, %v3725
        %v3982 = vmul.f32 %v3214, %v3726
        %v3983 = vmul.f32 %v3215, %v3727
        %v3984 = vmul.f32 %v3216, %v3728
        %v3985 = vmul.f32 %v3217, %v3729
        %v3986 = vmul.f32 %v3218, %v3730
        %v3987 = vmul.f32 %v3219, %v3731
        %v3988 = vmul.f32 %v3220, %v3732
        %v3989 = vmul.f32 %v3221, %v3733
        %v3990 = vmul.f32 %v3222, %v3734
        %v3991 = vmul.f32 %v3223, %v3735
        %v3992 = vmul.f32 %v3224, %v3736
        %v3993 = vmul.f32 %v3225, %v3737
        %v3994 = vmul.f32 %v3226, %v3738
        %v3995 = vmul.f32 %v3227, %v3739
        %v3996 = vmul.f32 %v3228, %v3740
        %v3997 = vmul.f32 %v3229, %v3741
        %v3998 = vmul.f32 %v3230, %v3742
        %v3999 = vmul.f32 %v3231, %v3743
        %v4000 = vmul.f32 %v3232, %v3744
        %v4001 = vmul.f32 %v3233, %v3745
        %v4002 = vmul.f32 %v3234, %v3746
        %v4003 = vmul.f32 %v3235, %v3747
        %v4004 = vmul.f32 %v3236, %v3748
        %v4005 = vmul.f32 %v3237, %v3749
        %v4006 = vmul.f32 %v3238, %v3750
        %v4007 = vmul.f32 %v3239, %v3751
        %v4008 = vmul.f32 %v3240, %v3752
        %v4009 = vmul.f32 %v3241, %v3753
        %v4010 = vmul.f32 %v3242, %v3754
        %v4011 = vmul.f32 %v3243, %v3755
        %v4012 = vmul.f32 %v3244, %v3756
        %v4013 = vmul.f32 %v3245, %v3757
        %v4014 = vmul.f32 %v3246, %v3758
        %v4015 = vmul.f32 %v3247, %v3759
        %v4016 = vmul.f32 %v3248, %v3760
        %v4017 = vmul.f32 %v3249, %v3761
        %v4018 = vmul.f32 %v3250, %v3762
        %v4019 = vmul.f32 %v3251, %v3763
        %v4020 = vmul.f32 %v3252, %v3764
        %v4021 = vmul.f32 %v3253, %v3765
        %v4022 = vmul.f32 %v3254, %v3766
        %v4023 = vmul.f32 %v3255, %v3767
        %v4024 = vmul.f32 %v3256, %v3768
        %v4025 = vmul.f32 %v3257, %v3769
        %v4026 = vmul.f32 %v3258, %v3770
        %v4027 = vmul.f32 %v3259, %v3771
        %v4028 = vmul.f32 %v3260, %v3772
        %v4029 = vmul.f32 %v3261, %v3773
        %v4030 = vmul.f32 %v3262, %v3774
        %v4031 = vmul.f32 %v3263, %v3775
        %v4032 = vmul.f32 %v3264, %v3776
        %v4033 = vmul.f32 %v3265, %v3777
        %v4034 = vmul.f32 %v3266, %v3778
        %v4035 = vmul.f32 %v3267, %v3779
        %v4036 = vmul.f32 %v3268, %v3780
        %v4037 = vmul.f32 %v3269, %v3781
        %v4038 = vmul.f32 %v3270, %v3782
        %v4039 = vmul.f32 %v3271, %v3783
        %v4040 = vmul.f32 %v3272, %v3784
        %v4041 = vmul.f32 %v3273, %v3785
        %v4042 = vmul.f32 %v3274, %v3786
        %v4043 = vmul.f32 %v3275, %v3787
        %v4044 = vmul.f32 %v3276, %v3788
        %v4045 = vmul.f32 %v3277, %v3789
        %v4046 = vmul.f32 %v3278, %v3790
        %v4047 = vmul.f32 %v3279, %v3791
        %v4048 = vmul.f32 %v3280, %v3792
        %v4049 = vmul.f32 %v3281, %v3793
        %v4050 = vmul.f32 %v3282, %v3794
        %v4051 = vmul.f32 %v3283, %v3795
        %v4052 = vpack.c.bf16 %v3800, %v3796
        %v4053 = vpack.c.bf16 %v3801, %v3797
        %v4054 = vpack.c.bf16 %v3802, %v3798
        %v4055 = vpack.c.bf16 %v3803, %v3799
        %v4056 = vpack.c.bf16 %v3808, %v3804
        %v4057 = vpack.c.bf16 %v3809, %v3805
        %v4058 = vpack.c.bf16 %v3810, %v3806
        %v4059 = vpack.c.bf16 %v3811, %v3807
        %v4060 = vpack.c.bf16 %v3816, %v3812
        %v4061 = vpack.c.bf16 %v3817, %v3813
        %v4062 = vpack.c.bf16 %v3818, %v3814
        %v4063 = vpack.c.bf16 %v3819, %v3815
        %v4064 = vpack.c.bf16 %v3824, %v3820
        %v4065 = vpack.c.bf16 %v3825, %v3821
        %v4066 = vpack.c.bf16 %v3826, %v3822
        %v4067 = vpack.c.bf16 %v3827, %v3823
        %v4068 = vpack.c.bf16 %v3832, %v3828
        %v4069 = vpack.c.bf16 %v3833, %v3829
        %v4070 = vpack.c.bf16 %v3834, %v3830
        %v4071 = vpack.c.bf16 %v3835, %v3831
        %v4072 = vpack.c.bf16 %v3840, %v3836
        %v4073 = vpack.c.bf16 %v3841, %v3837
        %v4074 = vpack.c.bf16 %v3842, %v3838
        %v4075 = vpack.c.bf16 %v3843, %v3839
        %v4076 = vpack.c.bf16 %v3848, %v3844
        %v4077 = vpack.c.bf16 %v3849, %v3845
        %v4078 = vpack.c.bf16 %v3850, %v3846
        %v4079 = vpack.c.bf16 %v3851, %v3847
        %v4080 = vpack.c.bf16 %v3856, %v3852
        %v4081 = vpack.c.bf16 %v3857, %v3853
        %v4082 = vpack.c.bf16 %v3858, %v3854
        %v4083 = vpack.c.bf16 %v3859, %v3855
        %v4084 = vpack.c.bf16 %v3864, %v3860
        %v4085 = vpack.c.bf16 %v3865, %v3861
        %v4086 = vpack.c.bf16 %v3866, %v3862
        %v4087 = vpack.c.bf16 %v3867, %v3863
        %v4088 = vpack.c.bf16 %v3872, %v3868
        %v4089 = vpack.c.bf16 %v3873, %v3869
        %v4090 = vpack.c.bf16 %v3874, %v3870
        %v4091 = vpack.c.bf16 %v3875, %v3871
        %v4092 = vpack.c.bf16 %v3880, %v3876
        %v4093 = vpack.c.bf16 %v3881, %v3877
        %v4094 = vpack.c.bf16 %v3882, %v3878
        %v4095 = vpack.c.bf16 %v3883, %v3879
        %v4096 = vpack.c.bf16 %v3888, %v3884
        %v4097 = vpack.c.bf16 %v3889, %v3885
        %v4098 = vpack.c.bf16 %v3890, %v3886
        %v4099 = vpack.c.bf16 %v3891, %v3887
        %v4100 = vpack.c.bf16 %v3896, %v3892
        %v4101 = vpack.c.bf16 %v3897, %v3893
        %v4102 = vpack.c.bf16 %v3898, %v3894
        %v4103 = vpack.c.bf16 %v3899, %v3895
        %v4104 = vpack.c.bf16 %v3904, %v3900
        %v4105 = vpack.c.bf16 %v3905, %v3901
        %v4106 = vpack.c.bf16 %v3906, %v3902
        %v4107 = vpack.c.bf16 %v3907, %v3903
        %v4108 = vpack.c.bf16 %v3912, %v3908
        %v4109 = vpack.c.bf16 %v3913, %v3909
        %v4110 = vpack.c.bf16 %v3914, %v3910
        %v4111 = vpack.c.bf16 %v3915, %v3911
        %v4112 = vpack.c.bf16 %v3920, %v3916
        %v4113 = vpack.c.bf16 %v3921, %v3917
        %v4114 = vpack.c.bf16 %v3922, %v3918
        %v4115 = vpack.c.bf16 %v3923, %v3919
        %v4116 = vpack.c.bf16 %v3928, %v3924
        %v4117 = vpack.c.bf16 %v3929, %v3925
        %v4118 = vpack.c.bf16 %v3930, %v3926
        %v4119 = vpack.c.bf16 %v3931, %v3927
        %v4120 = vpack.c.bf16 %v3936, %v3932
        %v4121 = vpack.c.bf16 %v3937, %v3933
        %v4122 = vpack.c.bf16 %v3938, %v3934
        %v4123 = vpack.c.bf16 %v3939, %v3935
        %v4124 = vpack.c.bf16 %v3944, %v3940
        %v4125 = vpack.c.bf16 %v3945, %v3941
        %v4126 = vpack.c.bf16 %v3946, %v3942
        %v4127 = vpack.c.bf16 %v3947, %v3943
        %v4128 = vpack.c.bf16 %v3952, %v3948
        %v4129 = vpack.c.bf16 %v3953, %v3949
        %v4130 = vpack.c.bf16 %v3954, %v3950
        %v4131 = vpack.c.bf16 %v3955, %v3951
        %v4132 = vpack.c.bf16 %v3960, %v3956
        %v4133 = vpack.c.bf16 %v3961, %v3957
        %v4134 = vpack.c.bf16 %v3962, %v3958
        %v4135 = vpack.c.bf16 %v3963, %v3959
        %v4136 = vpack.c.bf16 %v3968, %v3964
        %v4137 = vpack.c.bf16 %v3969, %v3965
        %v4138 = vpack.c.bf16 %v3970, %v3966
        %v4139 = vpack.c.bf16 %v3971, %v3967
        %v4140 = vpack.c.bf16 %v3976, %v3972
        %v4141 = vpack.c.bf16 %v3977, %v3973
        %v4142 = vpack.c.bf16 %v3978, %v3974
        %v4143 = vpack.c.bf16 %v3979, %v3975
        %v4144 = vpack.c.bf16 %v3984, %v3980
        %v4145 = vpack.c.bf16 %v3985, %v3981
        %v4146 = vpack.c.bf16 %v3986, %v3982
        %v4147 = vpack.c.bf16 %v3987, %v3983
        %v4148 = vpack.c.bf16 %v3992, %v3988
        %v4149 = vpack.c.bf16 %v3993, %v3989
        %v4150 = vpack.c.bf16 %v3994, %v3990
        %v4151 = vpack.c.bf16 %v3995, %v3991
        %v4152 = vpack.c.bf16 %v4000, %v3996
        %v4153 = vpack.c.bf16 %v4001, %v3997
        %v4154 = vpack.c.bf16 %v4002, %v3998
        %v4155 = vpack.c.bf16 %v4003, %v3999
        %v4156 = vpack.c.bf16 %v4008, %v4004
        %v4157 = vpack.c.bf16 %v4009, %v4005
        %v4158 = vpack.c.bf16 %v4010, %v4006
        %v4159 = vpack.c.bf16 %v4011, %v4007
        %v4160 = vpack.c.bf16 %v4016, %v4012
        %v4161 = vpack.c.bf16 %v4017, %v4013
        %v4162 = vpack.c.bf16 %v4018, %v4014
        %v4163 = vpack.c.bf16 %v4019, %v4015
        %v4164 = vpack.c.bf16 %v4024, %v4020
        %v4165 = vpack.c.bf16 %v4025, %v4021
        %v4166 = vpack.c.bf16 %v4026, %v4022
        %v4167 = vpack.c.bf16 %v4027, %v4023
        %v4168 = vpack.c.bf16 %v4032, %v4028
        %v4169 = vpack.c.bf16 %v4033, %v4029
        %v4170 = vpack.c.bf16 %v4034, %v4030
        %v4171 = vpack.c.bf16 %v4035, %v4031
        %v4172 = vpack.c.bf16 %v4040, %v4036
        %v4173 = vpack.c.bf16 %v4041, %v4037
        %v4174 = vpack.c.bf16 %v4042, %v4038
        %v4175 = vpack.c.bf16 %v4043, %v4039
        %v4176 = vpack.c.bf16 %v4048, %v4044
        %v4177 = vpack.c.bf16 %v4049, %v4045
        %v4178 = vpack.c.bf16 %v4050, %v4046
        %v4179 = vpack.c.bf16 %v4051, %v4047
        %v4308 = vunpack.c.l.b16 %v4052
        %v4309 = vunpack.c.l.b16 %v4053
        %v4310 = vunpack.c.l.b16 %v4054
        %v4311 = vunpack.c.l.b16 %v4055
        %v4312 = vunpack.c.h.b16 %v4052
        %v4313 = vunpack.c.h.b16 %v4053
        %v4314 = vunpack.c.h.b16 %v4054
        %v4315 = vunpack.c.h.b16 %v4055
        %v4316 = vunpack.c.l.b16 %v4056
        %v4317 = vunpack.c.l.b16 %v4057
        %v4318 = vunpack.c.l.b16 %v4058
        %v4319 = vunpack.c.l.b16 %v4059
        %v4320 = vunpack.c.h.b16 %v4056
        %v4321 = vunpack.c.h.b16 %v4057
        %v4322 = vunpack.c.h.b16 %v4058
        %v4323 = vunpack.c.h.b16 %v4059
        %v4324 = vunpack.c.l.b16 %v4060
        %v4325 = vunpack.c.l.b16 %v4061
        %v4326 = vunpack.c.l.b16 %v4062
        %v4327 = vunpack.c.l.b16 %v4063
        %v4328 = vunpack.c.h.b16 %v4060
        %v4329 = vunpack.c.h.b16 %v4061
        %v4330 = vunpack.c.h.b16 %v4062
        %v4331 = vunpack.c.h.b16 %v4063
        %v4332 = vunpack.c.l.b16 %v4064
        %v4333 = vunpack.c.l.b16 %v4065
        %v4334 = vunpack.c.l.b16 %v4066
        %v4335 = vunpack.c.l.b16 %v4067
        %v4336 = vunpack.c.h.b16 %v4064
        %v4337 = vunpack.c.h.b16 %v4065
        %v4338 = vunpack.c.h.b16 %v4066
        %v4339 = vunpack.c.h.b16 %v4067
        %v4340 = vunpack.c.l.b16 %v4068
        %v4341 = vunpack.c.l.b16 %v4069
        %v4342 = vunpack.c.l.b16 %v4070
        %v4343 = vunpack.c.l.b16 %v4071
        %v4344 = vunpack.c.h.b16 %v4068
        %v4345 = vunpack.c.h.b16 %v4069
        %v4346 = vunpack.c.h.b16 %v4070
        %v4347 = vunpack.c.h.b16 %v4071
        %v4348 = vunpack.c.l.b16 %v4072
        %v4349 = vunpack.c.l.b16 %v4073
        %v4350 = vunpack.c.l.b16 %v4074
        %v4351 = vunpack.c.l.b16 %v4075
        %v4352 = vunpack.c.h.b16 %v4072
        %v4353 = vunpack.c.h.b16 %v4073
        %v4354 = vunpack.c.h.b16 %v4074
        %v4355 = vunpack.c.h.b16 %v4075
        %v4356 = vunpack.c.l.b16 %v4076
        %v4357 = vunpack.c.l.b16 %v4077
        %v4358 = vunpack.c.l.b16 %v4078
        %v4359 = vunpack.c.l.b16 %v4079
        %v4360 = vunpack.c.h.b16 %v4076
        %v4361 = vunpack.c.h.b16 %v4077
        %v4362 = vunpack.c.h.b16 %v4078
        %v4363 = vunpack.c.h.b16 %v4079
        %v4364 = vunpack.c.l.b16 %v4080
        %v4365 = vunpack.c.l.b16 %v4081
        %v4366 = vunpack.c.l.b16 %v4082
        %v4367 = vunpack.c.l.b16 %v4083
        %v4368 = vunpack.c.h.b16 %v4080
        %v4369 = vunpack.c.h.b16 %v4081
        %v4370 = vunpack.c.h.b16 %v4082
        %v4371 = vunpack.c.h.b16 %v4083
        %v4372 = vunpack.c.l.b16 %v4084
        %v4373 = vunpack.c.l.b16 %v4085
        %v4374 = vunpack.c.l.b16 %v4086
        %v4375 = vunpack.c.l.b16 %v4087
        %v4376 = vunpack.c.h.b16 %v4084
        %v4377 = vunpack.c.h.b16 %v4085
        %v4378 = vunpack.c.h.b16 %v4086
        %v4379 = vunpack.c.h.b16 %v4087
        %v4380 = vunpack.c.l.b16 %v4088
        %v4381 = vunpack.c.l.b16 %v4089
        %v4382 = vunpack.c.l.b16 %v4090
        %v4383 = vunpack.c.l.b16 %v4091
        %v4384 = vunpack.c.h.b16 %v4088
        %v4385 = vunpack.c.h.b16 %v4089
        %v4386 = vunpack.c.h.b16 %v4090
        %v4387 = vunpack.c.h.b16 %v4091
        %v4388 = vunpack.c.l.b16 %v4092
        %v4389 = vunpack.c.l.b16 %v4093
        %v4390 = vunpack.c.l.b16 %v4094
        %v4391 = vunpack.c.l.b16 %v4095
        %v4392 = vunpack.c.h.b16 %v4092
        %v4393 = vunpack.c.h.b16 %v4093
        %v4394 = vunpack.c.h.b16 %v4094
        %v4395 = vunpack.c.h.b16 %v4095
        %v4396 = vunpack.c.l.b16 %v4096
        %v4397 = vunpack.c.l.b16 %v4097
        %v4398 = vunpack.c.l.b16 %v4098
        %v4399 = vunpack.c.l.b16 %v4099
        %v4400 = vunpack.c.h.b16 %v4096
        %v4401 = vunpack.c.h.b16 %v4097
        %v4402 = vunpack.c.h.b16 %v4098
        %v4403 = vunpack.c.h.b16 %v4099
        %v4404 = vunpack.c.l.b16 %v4100
        %v4405 = vunpack.c.l.b16 %v4101
        %v4406 = vunpack.c.l.b16 %v4102
        %v4407 = vunpack.c.l.b16 %v4103
        %v4408 = vunpack.c.h.b16 %v4100
        %v4409 = vunpack.c.h.b16 %v4101
        %v4410 = vunpack.c.h.b16 %v4102
        %v4411 = vunpack.c.h.b16 %v4103
        %v4412 = vunpack.c.l.b16 %v4104
        %v4413 = vunpack.c.l.b16 %v4105
        %v4414 = vunpack.c.l.b16 %v4106
        %v4415 = vunpack.c.l.b16 %v4107
        %v4416 = vunpack.c.h.b16 %v4104
        %v4417 = vunpack.c.h.b16 %v4105
        %v4418 = vunpack.c.h.b16 %v4106
        %v4419 = vunpack.c.h.b16 %v4107
        %v4420 = vunpack.c.l.b16 %v4108
        %v4421 = vunpack.c.l.b16 %v4109
        %v4422 = vunpack.c.l.b16 %v4110
        %v4423 = vunpack.c.l.b16 %v4111
        %v4424 = vunpack.c.h.b16 %v4108
        %v4425 = vunpack.c.h.b16 %v4109
        %v4426 = vunpack.c.h.b16 %v4110
        %v4427 = vunpack.c.h.b16 %v4111
        %v4428 = vunpack.c.l.b16 %v4112
        %v4429 = vunpack.c.l.b16 %v4113
        %v4430 = vunpack.c.l.b16 %v4114
        %v4431 = vunpack.c.l.b16 %v4115
        %v4432 = vunpack.c.h.b16 %v4112
        %v4433 = vunpack.c.h.b16 %v4113
        %v4434 = vunpack.c.h.b16 %v4114
        %v4435 = vunpack.c.h.b16 %v4115
        %v4436 = vunpack.c.l.b16 %v4116
        %v4437 = vunpack.c.l.b16 %v4117
        %v4438 = vunpack.c.l.b16 %v4118
        %v4439 = vunpack.c.l.b16 %v4119
        %v4440 = vunpack.c.h.b16 %v4116
        %v4441 = vunpack.c.h.b16 %v4117
        %v4442 = vunpack.c.h.b16 %v4118
        %v4443 = vunpack.c.h.b16 %v4119
        %v4444 = vunpack.c.l.b16 %v4120
        %v4445 = vunpack.c.l.b16 %v4121
        %v4446 = vunpack.c.l.b16 %v4122
        %v4447 = vunpack.c.l.b16 %v4123
        %v4448 = vunpack.c.h.b16 %v4120
        %v4449 = vunpack.c.h.b16 %v4121
        %v4450 = vunpack.c.h.b16 %v4122
        %v4451 = vunpack.c.h.b16 %v4123
        %v4452 = vunpack.c.l.b16 %v4124
        %v4453 = vunpack.c.l.b16 %v4125
        %v4454 = vunpack.c.l.b16 %v4126
        %v4455 = vunpack.c.l.b16 %v4127
        %v4456 = vunpack.c.h.b16 %v4124
        %v4457 = vunpack.c.h.b16 %v4125
        %v4458 = vunpack.c.h.b16 %v4126
        %v4459 = vunpack.c.h.b16 %v4127
        %v4460 = vunpack.c.l.b16 %v4128
        %v4461 = vunpack.c.l.b16 %v4129
        %v4462 = vunpack.c.l.b16 %v4130
        %v4463 = vunpack.c.l.b16 %v4131
        %v4464 = vunpack.c.h.b16 %v4128
        %v4465 = vunpack.c.h.b16 %v4129
        %v4466 = vunpack.c.h.b16 %v4130
        %v4467 = vunpack.c.h.b16 %v4131
        %v4468 = vunpack.c.l.b16 %v4132
        %v4469 = vunpack.c.l.b16 %v4133
        %v4470 = vunpack.c.l.b16 %v4134
        %v4471 = vunpack.c.l.b16 %v4135
        %v4472 = vunpack.c.h.b16 %v4132
        %v4473 = vunpack.c.h.b16 %v4133
        %v4474 = vunpack.c.h.b16 %v4134
        %v4475 = vunpack.c.h.b16 %v4135
        %v4476 = vunpack.c.l.b16 %v4136
        %v4477 = vunpack.c.l.b16 %v4137
        %v4478 = vunpack.c.l.b16 %v4138
        %v4479 = vunpack.c.l.b16 %v4139
        %v4480 = vunpack.c.h.b16 %v4136
        %v4481 = vunpack.c.h.b16 %v4137
        %v4482 = vunpack.c.h.b16 %v4138
        %v4483 = vunpack.c.h.b16 %v4139
        %v4484 = vunpack.c.l.b16 %v4140
        %v4485 = vunpack.c.l.b16 %v4141
        %v4486 = vunpack.c.l.b16 %v4142
        %v4487 = vunpack.c.l.b16 %v4143
        %v4488 = vunpack.c.h.b16 %v4140
        %v4489 = vunpack.c.h.b16 %v4141
        %v4490 = vunpack.c.h.b16 %v4142
        %v4491 = vunpack.c.h.b16 %v4143
        %v4492 = vunpack.c.l.b16 %v4144
        %v4493 = vunpack.c.l.b16 %v4145
        %v4494 = vunpack.c.l.b16 %v4146
        %v4495 = vunpack.c.l.b16 %v4147
        %v4496 = vunpack.c.h.b16 %v4144
        %v4497 = vunpack.c.h.b16 %v4145
        %v4498 = vunpack.c.h.b16 %v4146
        %v4499 = vunpack.c.h.b16 %v4147
        %v4500 = vunpack.c.l.b16 %v4148
        %v4501 = vunpack.c.l.b16 %v4149
        %v4502 = vunpack.c.l.b16 %v4150
        %v4503 = vunpack.c.l.b16 %v4151
        %v4504 = vunpack.c.h.b16 %v4148
        %v4505 = vunpack.c.h.b16 %v4149
        %v4506 = vunpack.c.h.b16 %v4150
        %v4507 = vunpack.c.h.b16 %v4151
        %v4508 = vunpack.c.l.b16 %v4152
        %v4509 = vunpack.c.l.b16 %v4153
        %v4510 = vunpack.c.l.b16 %v4154
        %v4511 = vunpack.c.l.b16 %v4155
        %v4512 = vunpack.c.h.b16 %v4152
        %v4513 = vunpack.c.h.b16 %v4153
        %v4514 = vunpack.c.h.b16 %v4154
        %v4515 = vunpack.c.h.b16 %v4155
        %v4516 = vunpack.c.l.b16 %v4156
        %v4517 = vunpack.c.l.b16 %v4157
        %v4518 = vunpack.c.l.b16 %v4158
        %v4519 = vunpack.c.l.b16 %v4159
        %v4520 = vunpack.c.h.b16 %v4156
        %v4521 = vunpack.c.h.b16 %v4157
        %v4522 = vunpack.c.h.b16 %v4158
        %v4523 = vunpack.c.h.b16 %v4159
        %v4524 = vunpack.c.l.b16 %v4160
        %v4525 = vunpack.c.l.b16 %v4161
        %v4526 = vunpack.c.l.b16 %v4162
        %v4527 = vunpack.c.l.b16 %v4163
        %v4528 = vunpack.c.h.b16 %v4160
        %v4529 = vunpack.c.h.b16 %v4161
        %v4530 = vunpack.c.h.b16 %v4162
        %v4531 = vunpack.c.h.b16 %v4163
        %v4532 = vunpack.c.l.b16 %v4164
        %v4533 = vunpack.c.l.b16 %v4165
        %v4534 = vunpack.c.l.b16 %v4166
        %v4535 = vunpack.c.l.b16 %v4167
        %v4536 = vunpack.c.h.b16 %v4164
        %v4537 = vunpack.c.h.b16 %v4165
        %v4538 = vunpack.c.h.b16 %v4166
        %v4539 = vunpack.c.h.b16 %v4167
        %v4540 = vunpack.c.l.b16 %v4168
        %v4541 = vunpack.c.l.b16 %v4169
        %v4542 = vunpack.c.l.b16 %v4170
        %v4543 = vunpack.c.l.b16 %v4171
        %v4544 = vunpack.c.h.b16 %v4168
        %v4545 = vunpack.c.h.b16 %v4169
        %v4546 = vunpack.c.h.b16 %v4170
        %v4547 = vunpack.c.h.b16 %v4171
        %v4548 = vunpack.c.l.b16 %v4172
        %v4549 = vunpack.c.l.b16 %v4173
        %v4550 = vunpack.c.l.b16 %v4174
        %v4551 = vunpack.c.l.b16 %v4175
        %v4552 = vunpack.c.h.b16 %v4172
        %v4553 = vunpack.c.h.b16 %v4173
        %v4554 = vunpack.c.h.b16 %v4174
        %v4555 = vunpack.c.h.b16 %v4175
        %v4556 = vunpack.c.l.b16 %v4176
        %v4557 = vunpack.c.l.b16 %v4177
        %v4558 = vunpack.c.l.b16 %v4178
        %v4559 = vunpack.c.l.b16 %v4179
        %v4560 = vunpack.c.h.b16 %v4176
        %v4561 = vunpack.c.h.b16 %v4177
        %v4562 = vunpack.c.h.b16 %v4178
        %v4563 = vunpack.c.h.b16 %v4179
        %v4564 = vpack.c.b16 %v4309, %v4308
        %v4565 = vpack.c.b16 %v4311, %v4310
        %v4566 = vpack.c.b16 %v4313, %v4312
        %v4567 = vpack.c.b16 %v4315, %v4314
        %v4568 = vpack.c.b16 %v4317, %v4316
        %v4569 = vpack.c.b16 %v4319, %v4318
        %v4570 = vpack.c.b16 %v4321, %v4320
        %v4571 = vpack.c.b16 %v4323, %v4322
        %v4572 = vpack.c.b16 %v4325, %v4324
        %v4573 = vpack.c.b16 %v4327, %v4326
        %v4574 = vpack.c.b16 %v4329, %v4328
        %v4575 = vpack.c.b16 %v4331, %v4330
        %v4576 = vpack.c.b16 %v4333, %v4332
        %v4577 = vpack.c.b16 %v4335, %v4334
        %v4578 = vpack.c.b16 %v4337, %v4336
        %v4579 = vpack.c.b16 %v4339, %v4338
        %v4580 = vpack.c.b16 %v4341, %v4340
        %v4581 = vpack.c.b16 %v4343, %v4342
        %v4582 = vpack.c.b16 %v4345, %v4344
        %v4583 = vpack.c.b16 %v4347, %v4346
        %v4584 = vpack.c.b16 %v4349, %v4348
        %v4585 = vpack.c.b16 %v4351, %v4350
        %v4586 = vpack.c.b16 %v4353, %v4352
        %v4587 = vpack.c.b16 %v4355, %v4354
        %v4588 = vpack.c.b16 %v4357, %v4356
        %v4589 = vpack.c.b16 %v4359, %v4358
        %v4590 = vpack.c.b16 %v4361, %v4360
        %v4591 = vpack.c.b16 %v4363, %v4362
        %v4592 = vpack.c.b16 %v4365, %v4364
        %v4593 = vpack.c.b16 %v4367, %v4366
        %v4594 = vpack.c.b16 %v4369, %v4368
        %v4595 = vpack.c.b16 %v4371, %v4370
        %v4596 = vpack.c.b16 %v4373, %v4372
        %v4597 = vpack.c.b16 %v4375, %v4374
        %v4598 = vpack.c.b16 %v4377, %v4376
        %v4599 = vpack.c.b16 %v4379, %v4378
        %v4600 = vpack.c.b16 %v4381, %v4380
        %v4601 = vpack.c.b16 %v4383, %v4382
        %v4602 = vpack.c.b16 %v4385, %v4384
        %v4603 = vpack.c.b16 %v4387, %v4386
        %v4604 = vpack.c.b16 %v4389, %v4388
        %v4605 = vpack.c.b16 %v4391, %v4390
        %v4606 = vpack.c.b16 %v4393, %v4392
        %v4607 = vpack.c.b16 %v4395, %v4394
        %v4608 = vpack.c.b16 %v4397, %v4396
        %v4609 = vpack.c.b16 %v4399, %v4398
        %v4610 = vpack.c.b16 %v4401, %v4400
        %v4611 = vpack.c.b16 %v4403, %v4402
        %v4612 = vpack.c.b16 %v4405, %v4404
        %v4613 = vpack.c.b16 %v4407, %v4406
        %v4614 = vpack.c.b16 %v4409, %v4408
        %v4615 = vpack.c.b16 %v4411, %v4410
        %v4616 = vpack.c.b16 %v4413, %v4412
        %v4617 = vpack.c.b16 %v4415, %v4414
        %v4618 = vpack.c.b16 %v4417, %v4416
        %v4619 = vpack.c.b16 %v4419, %v4418
        %v4620 = vpack.c.b16 %v4421, %v4420
        %v4621 = vpack.c.b16 %v4423, %v4422
        %v4622 = vpack.c.b16 %v4425, %v4424
        %v4623 = vpack.c.b16 %v4427, %v4426
        %v4624 = vpack.c.b16 %v4429, %v4428
        %v4625 = vpack.c.b16 %v4431, %v4430
        %v4626 = vpack.c.b16 %v4433, %v4432
        %v4627 = vpack.c.b16 %v4435, %v4434
        %v4628 = vpack.c.b16 %v4437, %v4436
        %v4629 = vpack.c.b16 %v4439, %v4438
        %v4630 = vpack.c.b16 %v4441, %v4440
        %v4631 = vpack.c.b16 %v4443, %v4442
        %v4632 = vpack.c.b16 %v4445, %v4444
        %v4633 = vpack.c.b16 %v4447, %v4446
        %v4634 = vpack.c.b16 %v4449, %v4448
        %v4635 = vpack.c.b16 %v4451, %v4450
        %v4636 = vpack.c.b16 %v4453, %v4452
        %v4637 = vpack.c.b16 %v4455, %v4454
        %v4638 = vpack.c.b16 %v4457, %v4456
        %v4639 = vpack.c.b16 %v4459, %v4458
        %v4640 = vpack.c.b16 %v4461, %v4460
        %v4641 = vpack.c.b16 %v4463, %v4462
        %v4642 = vpack.c.b16 %v4465, %v4464
        %v4643 = vpack.c.b16 %v4467, %v4466
        %v4644 = vpack.c.b16 %v4469, %v4468
        %v4645 = vpack.c.b16 %v4471, %v4470
        %v4646 = vpack.c.b16 %v4473, %v4472
        %v4647 = vpack.c.b16 %v4475, %v4474
        %v4648 = vpack.c.b16 %v4477, %v4476
        %v4649 = vpack.c.b16 %v4479, %v4478
        %v4650 = vpack.c.b16 %v4481, %v4480
        %v4651 = vpack.c.b16 %v4483, %v4482
        %v4652 = vpack.c.b16 %v4485, %v4484
        %v4653 = vpack.c.b16 %v4487, %v4486
        %v4654 = vpack.c.b16 %v4489, %v4488
        %v4655 = vpack.c.b16 %v4491, %v4490
        %v4656 = vpack.c.b16 %v4493, %v4492
        %v4657 = vpack.c.b16 %v4495, %v4494
        %v4658 = vpack.c.b16 %v4497, %v4496
        %v4659 = vpack.c.b16 %v4499, %v4498
        %v4660 = vpack.c.b16 %v4501, %v4500
        %v4661 = vpack.c.b16 %v4503, %v4502
        %v4662 = vpack.c.b16 %v4505, %v4504
        %v4663 = vpack.c.b16 %v4507, %v4506
        %v4664 = vpack.c.b16 %v4509, %v4508
        %v4665 = vpack.c.b16 %v4511, %v4510
        %v4666 = vpack.c.b16 %v4513, %v4512
        %v4667 = vpack.c.b16 %v4515, %v4514
        %v4668 = vpack.c.b16 %v4517, %v4516
        %v4669 = vpack.c.b16 %v4519, %v4518
        %v4670 = vpack.c.b16 %v4521, %v4520
        %v4671 = vpack.c.b16 %v4523, %v4522
        %v4672 = vpack.c.b16 %v4525, %v4524
        %v4673 = vpack.c.b16 %v4527, %v4526
        %v4674 = vpack.c.b16 %v4529, %v4528
        %v4675 = vpack.c.b16 %v4531, %v4530
        %v4676 = vpack.c.b16 %v4533, %v4532
        %v4677 = vpack.c.b16 %v4535, %v4534
        %v4678 = vpack.c.b16 %v4537, %v4536
        %v4679 = vpack.c.b16 %v4539, %v4538
        %v4680 = vpack.c.b16 %v4541, %v4540
        %v4681 = vpack.c.b16 %v4543, %v4542
        %v4682 = vpack.c.b16 %v4545, %v4544
        %v4683 = vpack.c.b16 %v4547, %v4546
        %v4684 = vpack.c.b16 %v4549, %v4548
        %v4685 = vpack.c.b16 %v4551, %v4550
        %v4686 = vpack.c.b16 %v4553, %v4552
        %v4687 = vpack.c.b16 %v4555, %v4554
        %v4688 = vpack.c.b16 %v4557, %v4556
        %v4689 = vpack.c.b16 %v4559, %v4558
        %v4690 = vpack.c.b16 %v4561, %v4560
        %v4691 = vpack.c.b16 %v4563, %v4562
        %4820 = vst [vmem:[%s420] sm:$0xff] %v4564
        %4821 = vst [vmem:[%s420 + $0x8] sm:$0xff] %v4565
        %4822 = vst [vmem:[%s420 + $0x10] sm:$0xff] %v4566
        %4823 = vst [vmem:[%s420 + $0x18] sm:$0xff] %v4567
        %4824 = vst [vmem:[%s420 + $0x20] sm:$0xff] %v4568
        %4825 = vst [vmem:[%s420 + $0x28] sm:$0xff] %v4569
        %4826 = vst [vmem:[%s420 + $0x30] sm:$0xff] %v4570
        %4827 = vst [vmem:[%s420 + $0x38] sm:$0xff] %v4571
        %4828 = vst [vmem:[%s420 + $0x40] sm:$0xff] %v4572
        %4829 = vst [vmem:[%s420 + $0x48] sm:$0xff] %v4573
        %4830 = vst [vmem:[%s420 + $0x50] sm:$0xff] %v4574
        %4831 = vst [vmem:[%s420 + $0x58] sm:$0xff] %v4575
        %4832 = vst [vmem:[%s420 + $0x60] sm:$0xff] %v4576
        %4833 = vst [vmem:[%s420 + $0x68] sm:$0xff] %v4577
        %4834 = vst [vmem:[%s420 + $0x70] sm:$0xff] %v4578
        %4835 = vst [vmem:[%s420 + $0x78] sm:$0xff] %v4579
        %4836 = vst [vmem:[%s420 + $0x80] sm:$0xff] %v4580
        %4837 = vst [vmem:[%s420 + $0x88] sm:$0xff] %v4581
        %4838 = vst [vmem:[%s420 + $0x90] sm:$0xff] %v4582
        %4839 = vst [vmem:[%s420 + $0x98] sm:$0xff] %v4583
        %4840 = vst [vmem:[%s420 + $0xa0] sm:$0xff] %v4584
        %4841 = vst [vmem:[%s420 + $0xa8] sm:$0xff] %v4585
        %4842 = vst [vmem:[%s420 + $0xb0] sm:$0xff] %v4586
        %4843 = vst [vmem:[%s420 + $0xb8] sm:$0xff] %v4587
        %4844 = vst [vmem:[%s420 + $0xc0] sm:$0xff] %v4588
        %4845 = vst [vmem:[%s420 + $0xc8] sm:$0xff] %v4589
        %4846 = vst [vmem:[%s420 + $0xd0] sm:$0xff] %v4590
        %4847 = vst [vmem:[%s420 + $0xd8] sm:$0xff] %v4591
        %4848 = vst [vmem:[%s420 + $0xe0] sm:$0xff] %v4592
        %4849 = vst [vmem:[%s420 + $0xe8] sm:$0xff] %v4593
        %4850 = vst [vmem:[%s420 + $0xf0] sm:$0xff] %v4594
        %4851 = vst [vmem:[%s420 + $0xf8] sm:$0xff] %v4595
        %4852 = vst [vmem:[%s420 + $0x100] sm:$0xff] %v4596
        %4853 = vst [vmem:[%s420 + $0x108] sm:$0xff] %v4597
        %4854 = vst [vmem:[%s420 + $0x110] sm:$0xff] %v4598
        %4855 = vst [vmem:[%s420 + $0x118] sm:$0xff] %v4599
        %4856 = vst [vmem:[%s420 + $0x120] sm:$0xff] %v4600
        %4857 = vst [vmem:[%s420 + $0x128] sm:$0xff] %v4601
        %4858 = vst [vmem:[%s420 + $0x130] sm:$0xff] %v4602
        %4859 = vst [vmem:[%s420 + $0x138] sm:$0xff] %v4603
        %4860 = vst [vmem:[%s420 + $0x140] sm:$0xff] %v4604
        %4861 = vst [vmem:[%s420 + $0x148] sm:$0xff] %v4605
        %4862 = vst [vmem:[%s420 + $0x150] sm:$0xff] %v4606
        %4863 = vst [vmem:[%s420 + $0x158] sm:$0xff] %v4607
        %4864 = vst [vmem:[%s420 + $0x160] sm:$0xff] %v4608
        %4865 = vst [vmem:[%s420 + $0x168] sm:$0xff] %v4609
        %4866 = vst [vmem:[%s420 + $0x170] sm:$0xff] %v4610
        %4867 = vst [vmem:[%s420 + $0x178] sm:$0xff] %v4611
        %4868 = vst [vmem:[%s420 + $0x180] sm:$0xff] %v4612
        %4869 = vst [vmem:[%s420 + $0x188] sm:$0xff] %v4613
        %4870 = vst [vmem:[%s420 + $0x190] sm:$0xff] %v4614
        %4871 = vst [vmem:[%s420 + $0x198] sm:$0xff] %v4615
        %4872 = vst [vmem:[%s420 + $0x1a0] sm:$0xff] %v4616
        %4873 = vst [vmem:[%s420 + $0x1a8] sm:$0xff] %v4617
        %4874 = vst [vmem:[%s420 + $0x1b0] sm:$0xff] %v4618
        %4875 = vst [vmem:[%s420 + $0x1b8] sm:$0xff] %v4619
        %4876 = vst [vmem:[%s420 + $0x1c0] sm:$0xff] %v4620
        %4877 = vst [vmem:[%s420 + $0x1c8] sm:$0xff] %v4621
        %4878 = vst [vmem:[%s420 + $0x1d0] sm:$0xff] %v4622
        %4879 = vst [vmem:[%s420 + $0x1d8] sm:$0xff] %v4623
        %4880 = vst [vmem:[%s420 + $0x1e0] sm:$0xff] %v4624
        %4881 = vst [vmem:[%s420 + $0x1e8] sm:$0xff] %v4625
        %4882 = vst [vmem:[%s420 + $0x1f0] sm:$0xff] %v4626
        %4883 = vst [vmem:[%s420 + $0x1f8] sm:$0xff] %v4627
        %4884 = vst [vmem:[%s420 + $0x200] sm:$0xff] %v4628
        %4885 = vst [vmem:[%s420 + $0x208] sm:$0xff] %v4629
        %4886 = vst [vmem:[%s420 + $0x210] sm:$0xff] %v4630
        %4887 = vst [vmem:[%s420 + $0x218] sm:$0xff] %v4631
        %4888 = vst [vmem:[%s420 + $0x220] sm:$0xff] %v4632
        %4889 = vst [vmem:[%s420 + $0x228] sm:$0xff] %v4633
        %4890 = vst [vmem:[%s420 + $0x230] sm:$0xff] %v4634
        %4891 = vst [vmem:[%s420 + $0x238] sm:$0xff] %v4635
        %4892 = vst [vmem:[%s420 + $0x240] sm:$0xff] %v4636
        %4893 = vst [vmem:[%s420 + $0x248] sm:$0xff] %v4637
        %4894 = vst [vmem:[%s420 + $0x250] sm:$0xff] %v4638
        %4895 = vst [vmem:[%s420 + $0x258] sm:$0xff] %v4639
        %4896 = vst [vmem:[%s420 + $0x260] sm:$0xff] %v4640
        %4897 = vst [vmem:[%s420 + $0x268] sm:$0xff] %v4641
        %4898 = vst [vmem:[%s420 + $0x270] sm:$0xff] %v4642
        %4899 = vst [vmem:[%s420 + $0x278] sm:$0xff] %v4643
        %4900 = vst [vmem:[%s420 + $0x280] sm:$0xff] %v4644
        %4901 = vst [vmem:[%s420 + $0x288] sm:$0xff] %v4645
        %4902 = vst [vmem:[%s420 + $0x290] sm:$0xff] %v4646
        %4903 = vst [vmem:[%s420 + $0x298] sm:$0xff] %v4647
        %4904 = vst [vmem:[%s420 + $0x2a0] sm:$0xff] %v4648
        %4905 = vst [vmem:[%s420 + $0x2a8] sm:$0xff] %v4649
        %4906 = vst [vmem:[%s420 + $0x2b0] sm:$0xff] %v4650
        %4907 = vst [vmem:[%s420 + $0x2b8] sm:$0xff] %v4651
        %4908 = vst [vmem:[%s420 + $0x2c0] sm:$0xff] %v4652
        %4909 = vst [vmem:[%s420 + $0x2c8] sm:$0xff] %v4653
        %4910 = vst [vmem:[%s420 + $0x2d0] sm:$0xff] %v4654
        %4911 = vst [vmem:[%s420 + $0x2d8] sm:$0xff] %v4655
        %4912 = vst [vmem:[%s420 + $0x2e0] sm:$0xff] %v4656
        %4913 = vst [vmem:[%s420 + $0x2e8] sm:$0xff] %v4657
        %4914 = vst [vmem:[%s420 + $0x2f0] sm:$0xff] %v4658
        %4915 = vst [vmem:[%s420 + $0x2f8] sm:$0xff] %v4659
        %4916 = vst [vmem:[%s420 + $0x300] sm:$0xff] %v4660
        %4917 = vst [vmem:[%s420 + $0x308] sm:$0xff] %v4661
        %4918 = vst [vmem:[%s420 + $0x310] sm:$0xff] %v4662
        %4919 = vst [vmem:[%s420 + $0x318] sm:$0xff] %v4663
        %4920 = vst [vmem:[%s420 + $0x320] sm:$0xff] %v4664
        %4921 = vst [vmem:[%s420 + $0x328] sm:$0xff] %v4665
        %4922 = vst [vmem:[%s420 + $0x330] sm:$0xff] %v4666
        %4923 = vst [vmem:[%s420 + $0x338] sm:$0xff] %v4667
        %4924 = vst [vmem:[%s420 + $0x340] sm:$0xff] %v4668
        %4925 = vst [vmem:[%s420 + $0x348] sm:$0xff] %v4669
        %4926 = vst [vmem:[%s420 + $0x350] sm:$0xff] %v4670
        %4927 = vst [vmem:[%s420 + $0x358] sm:$0xff] %v4671
        %4928 = vst [vmem:[%s420 + $0x360] sm:$0xff] %v4672
        %4929 = vst [vmem:[%s420 + $0x368] sm:$0xff] %v4673
        %4930 = vst [vmem:[%s420 + $0x370] sm:$0xff] %v4674
        %4931 = vst [vmem:[%s420 + $0x378] sm:$0xff] %v4675
        %4932 = vst [vmem:[%s420 + $0x380] sm:$0xff] %v4676
        %4933 = vst [vmem:[%s420 + $0x388] sm:$0xff] %v4677
        %4934 = vst [vmem:[%s420 + $0x390] sm:$0xff] %v4678
        %4935 = vst [vmem:[%s420 + $0x398] sm:$0xff] %v4679
        %4936 = vst [vmem:[%s420 + $0x3a0] sm:$0xff] %v4680
        %4937 = vst [vmem:[%s420 + $0x3a8] sm:$0xff] %v4681
        %4938 = vst [vmem:[%s420 + $0x3b0] sm:$0xff] %v4682
        %4939 = vst [vmem:[%s420 + $0x3b8] sm:$0xff] %v4683
        %4940 = vst [vmem:[%s420 + $0x3c0] sm:$0xff] %v4684
        %4941 = vst [vmem:[%s420 + $0x3c8] sm:$0xff] %v4685
        %4942 = vst [vmem:[%s420 + $0x3d0] sm:$0xff] %v4686
        %4943 = vst [vmem:[%s420 + $0x3d8] sm:$0xff] %v4687
        %4944 = vst [vmem:[%s420 + $0x3e0] sm:$0xff] %v4688
        %4945 = vst [vmem:[%s420 + $0x3e8] sm:$0xff] %v4689
        %4946 = vst [vmem:[%s420 + $0x3f0] sm:$0xff] %v4690
        %4947 = vst [vmem:[%s420 + $0x3f8] sm:$0xff] %v4691
        %s4948 = sand.u32 %s180, 1
        %s4949 = scalar_lea.sflag [#allocation4], %s4948
        %s4950 = sand.u32 %s180, 1
        %s4951 = smul.addr %s4950, 1024
        %s4952 = scalar_lea.vmem [#allocation11], %s4951
        // Predicated region
        $region61: #{tpu_custom_call.1} parent=39 // pred_check
          %p4953 = pneg %p190
        $region62: #{tpu_custom_call.1} parent=39 // pred_check_branch
          %4955 = sbr.rel (%p4953) target = $region64
        $region63: #{tpu_custom_call.1} parent=39 // pred_region
          %s4956 = smul.u32 64, %s32
          %s4957 = smul.u32 4, %s33
          %s4958 = ssub.s32 80, %s4956
          %p4959 = scmp.lt.s32.totalorder %s4958, 64
          %s4960 = scalar_select %p4959, %s4958, 64
          %s4961 = smul.u32 64, %s4960
          %s4962 = smul.u32 %s4961, 4
          %s4964 = ssub.s32 16384, %s4962
          %4965 = vsyncadd %s4949, %s4964
          %p4966 = scmp.ne.s32.totalorder 0, %s4962
          %s4967 = smul.addr %s4956, 8
          %s4968 = sadd.s32 %s4957, %s4967
          %s4969 = smul.addr %s4968, 64
          %s4970 = scalar_lea.hbm %s5, %s4969
          %s4971 = smul.u32 16, %s4960
          %s4972 = sshll.u32 %s4952, 4
          %s4973 = int_to_ptr.vmem [resolvable:$true] %s4972
          %s4974 = sshll.u32 %s4971, 4
          %4978 = dma.vmem_to_hbm [thread:$0]  (%p4966), %s4973, %s4974, %s4970, %s4949, 256, 512, 16
        $region64: #{tpu_custom_call.1} parent=39 // pred_fallthru
          _
      $region40: #{tpu_custom_call.1} parent=5 // pred_fallthru
        _
      %p4979 = scmp.le.s32.totalorder 2, %s23
      // Predicated region
      $region65: #{tpu_custom_call.1} parent=5 // pred_check
        %p4980 = pneg %p4979
      $region66: #{tpu_custom_call.1} parent=5 // pred_check_branch
        %4982 = sbr.rel (%p4980) target = $region68
      $region67: #{tpu_custom_call.1} parent=5 // pred_region
        %s4983 = ssub.s32 %s23, 2
        // Predicated region
        $region69: #{tpu_custom_call.1} parent=67 // pred_check
          %p4984 = pneg %p196
        $region70: #{tpu_custom_call.1} parent=67 // pred_check_branch
          %4986 = sbr.rel (%p4984) target = $region72
        $region71: #{tpu_custom_call.1} parent=67 // pred_region
          %s4987 = sand.u32 %s181, 1
          %s4988 = scalar_lea.sflag [#allocation4], %s4987
          %s4989 = sand.u32 %s181, 1
          %s4990 = smul.addr %s4989, 1024
          %s4991 = scalar_lea.vmem [#allocation11], %s4990
          %4992 = dma.done %s4988, 16384
        $region72: #{tpu_custom_call.1} parent=67 // pred_fallthru
          _
      $region68: #{tpu_custom_call.1} parent=5 // pred_fallthru
        _
    $region6: #{tpu_custom_call.1} parent=1 // loop_footer
      %s27 = sadd.s32 1, %s23
    $region7: #{tpu_custom_call.1} parent=1 // loop_footer_branch
      %22 = sbr.rel target = $region3
    $region8: #{tpu_custom_call.1} parent=1 // loop_exit
      _
    %4993 = vsyncpa [#allocation3], 1
    %s4994 = scalar_lea.sflag [#allocation3], 1
    %4995 = vsyncpa %s4994, 1
    %4996 = vsyncpa [#allocation6], 1
    %s4997 = scalar_lea.sflag [#allocation6], 1
    %4998 = vsyncpa %s4997, 1
    %4999 = vsyncpa [#allocation9], 1
    %s5000 = scalar_lea.sflag [#allocation9], 1
    %5001 = vsyncpa %s5000, 1
    %5002 = vsyncpa [#allocation4], 1
    %s5003 = scalar_lea.sflag [#allocation4], 1
    %5004 = vsyncpa %s5003, 1

</llo_original>
